<compile_context>
chip_gen: v6e
topology: v6e:2x2x1
jax: 0.10.0
libtpu: 0.0.40
codegen_flags: <defaults>
</compile_context>

<pallas_src>
import math
from functools import lru_cache, partial

import jax
import jax.numpy as jnp
from jax.experimental import pallas as pl
from jax.experimental.pallas import tpu as pltpu


# ----------------------------------------------------------------------------
# Helpers
# ----------------------------------------------------------------------------
def _pick_tile(dim, pref, align):
    """Largest tile <= pref that is a multiple of `align` and divides `dim`,
    falling back to the full dimension (block == full array dim is legal)."""
    if dim <= pref:
        return dim
    t = (pref // align) * align
    while t >= align:
        if dim % t == 0:
            return t
        t -= align
    return dim


@lru_cache(maxsize=None)
def _vmem_limit_bytes():
    """Generation-aware scoped-VMEM limit (~3/4 of physical, capped at 100 MiB):
    ~96 MiB on v5e/v6e (128 MiB physical), ~48 MiB on v7x (64 MiB physical)."""
    cap = 64 * 1024 * 1024  # conservative fallback, safe on every generation
    try:
        cap = int(pltpu.get_tpu_info().vmem_capacity_bytes)
    except Exception:
        pass
    return min(cap * 3 // 4, 100 * 1024 * 1024)


def _weight_spec(tk, tn, buffer_count):
    """BlockSpec for the streamed weight operand; deeper buffering hides DMA
    tail latency on low-HBM-bandwidth parts (v5e) when K is actually streamed."""
    idx = lambda i, j, k: (k, j)
    if buffer_count > 2:
        try:
            return pl.BlockSpec((tk, tn), idx, pipeline_mode=pl.Buffered(buffer_count))
        except Exception:
            pass
    return pl.BlockSpec((tk, tn), idx)


# ----------------------------------------------------------------------------
# Tiled quantized-weight matmul kernel (LinearQ)
# ----------------------------------------------------------------------------
def _make_linear_kernel(single_k):
    def kernel(*args):
        if single_k:
            x_ref, w_ref, a_ref, b_ref, o_ref = args
        else:
            x_ref, w_ref, a_ref, b_ref, o_ref, acc_ref = args

        xv = x_ref[...].astype(jnp.bfloat16)
        # int8 LSQ codes -> bf16 (exact for the 4-bit code range) for the MXU.
        wv = w_ref[...].astype(jnp.float32).astype(jnp.bfloat16)
        part = jnp.dot(xv, wv, preferred_element_type=jnp.float32)

        if single_k:
            # K fits one tile: no accumulator zero-fill / read-modify-write.
            o_ref[...] = (part * a_ref[...] + b_ref[...]).astype(o_ref.dtype)
        else:
            k = pl.program_id(2)

            @pl.when(k == 0)
            def _():
                acc_ref[...] = jnp.zeros_like(acc_ref)

            acc_ref[...] += part

            @pl.when(k == pl.num_programs(2) - 1)
            def _():
                # per-output-channel LSQ scale + bias applied once in the epilogue
                r = acc_ref[...] * a_ref[...] + b_ref[...]
                o_ref[...] = r.astype(o_ref.dtype)

    return kernel


def fused_linear(x, w_codes_t, alpha, bias, *, out_dtype=jnp.float32,
                 tm=512, tn=512, tk=512):
    """y = x @ (codes * alpha) + bias, with int8 LSQ codes streamed from HBM.

    x:         [M, K]  activations (f32 or bf16)
    w_codes_t: [K, N]  int8 LSQ weight codes (kernel-wise quant, pre-transposed)
    alpha:     [N]     per-output-channel LSQ scale
    bias:      [N]
    """
    M, K = x.shape
    Kw, N = w_codes_t.shape
    assert K == Kw
    tm = _pick_tile(M, tm, 8)
    tn = _pick_tile(N, tn, 128)
    tk = _pick_tile(K, tk, 128)
    gm, gn, gk = M // tm, N // tn, K // tk
    assert gm * tm == M and gn * tn == N and gk * tk == K, "tiles must divide dims"
    single_k = gk == 1

    in_specs = [
        pl.BlockSpec((tm, tk), lambda i, j, k: (i, k)),
        _weight_spec(tk, tn, 3 if gk >= 3 else 2),
        pl.BlockSpec((1, tn), lambda i, j, k: (0, j)),
        pl.BlockSpec((1, tn), lambda i, j, k: (0, j)),
    ]
    scratch = [] if single_k else [pltpu.VMEM((tm, tn), jnp.float32)]

    return pl.pallas_call(
        _make_linear_kernel(single_k),
        out_shape=jax.ShapeDtypeStruct((M, N), out_dtype),
        grid=(gm, gn, gk),
        in_specs=in_specs,
        out_specs=pl.BlockSpec((tm, tn), lambda i, j, k: (i, j)),
        scratch_shapes=scratch,
        compiler_params=pltpu.CompilerParams(
            dimension_semantics=("parallel", "parallel", "arbitrary"),
            vmem_limit_bytes=_vmem_limit_bytes(),
        ),
    )(x, w_codes_t, alpha.reshape(1, N).astype(jnp.float32),
      bias.reshape(1, N).astype(jnp.float32))


# ----------------------------------------------------------------------------
# Fused attention kernel: per-head norm_q/norm_k (+scale), softmax, attn@v
# ----------------------------------------------------------------------------
def _attention_kernel(*args, heads_per_prog, head_dim, scale, eps, split):
    it = iter(args)
    if split:
        q_ref, k_ref, v_ref = next(it), next(it), next(it)
    else:
        qkv_ref = next(it)
    ln_ref, avg_ref, expand_ref, o_ref = next(it), next(it), next(it), next(it)

    G = heads_per_prog * head_dim
    if split:
        qg = q_ref[0].astype(jnp.float32)
        kg = k_ref[0].astype(jnp.float32)
        vg = v_ref[0].astype(jnp.bfloat16)
    else:
        qkv = qkv_ref[0]
        qg = qkv[:, 0:G].astype(jnp.float32)
        kg = qkv[:, G:2 * G].astype(jnp.float32)
        vg = qkv[:, 2 * G:3 * G].astype(jnp.bfloat16)

    # norm_q / norm_k affine params, pre-tiled over the heads of this program.
    # The attention score scale (head_dim**-0.5) is folded into BOTH gamma and
    # beta of norm_q (exact because the scores are bilinear in q).
    gq = ln_ref[0:1, :] * scale
    bq = ln_ref[1:2, :] * scale
    gk = ln_ref[2:3, :]
    bk = ln_ref[3:4, :]

    avg = avg_ref[...]        # [G, heads]   block-diagonal 1/head_dim
    expand = expand_ref[...]  # [heads, G]   block-diagonal ones

    def headwise_ln(xf, g, b):
        # Lane-dense per-head LayerNorm: per-head mean/var via block-diagonal
        # averaging matmuls; the normalize stays full-width over all G lanes.
        mu = jnp.dot(jnp.dot(xf, avg, preferred_element_type=jnp.float32),
                     expand, preferred_element_type=jnp.float32)
        xc = xf - mu
        var = jnp.dot(jnp.dot(xc * xc, avg, preferred_element_type=jnp.float32),
                      expand, preferred_element_type=jnp.float32)
        return xc * jax.lax.rsqrt(var + eps) * g + b

    qn = headwise_ln(qg, gq, bq).astype(jnp.bfloat16)
    kn = headwise_ln(kg, gk, bk).astype(jnp.bfloat16)

    # TODO(synk): ActQ (q_act/k_act/v_act/attn_act) fake-quant formula is not in
    # the provided reference source; treated as identity.
    outs = []
    for h in range(heads_per_prog):
        sl = slice(h * head_dim, (h + 1) * head_dim)
        s = jax.lax.dot_general(qn[:, sl], kn[:, sl], (((1,), (1,)), ((), ())),
                                preferred_element_type=jnp.float32)
        s = s - jnp.max(s, axis=-1, keepdims=True)
        e = jnp.exp(s)
        p = e * pl.reciprocal(jnp.sum(e, axis=-1, keepdims=True), approx=True)
        # attn_drop (rate 0) and attn_act are identity.
        outs.append(jnp.dot(p.astype(jnp.bfloat16), vg[:, sl],
                            preferred_element_type=jnp.float32))
    out = outs[0] if len(outs) == 1 else jnp.concatenate(outs, axis=-1)
    # One full-lane-width store for this program's head group; already in the
    # (attn@v).transpose(1,2).reshape(B,N,C) column layout.
    o_ref[0] = out.astype(o_ref.dtype)


def attention_pallas(qkv, ln_qk, num_heads, scale, eps=1e-5):
    """qkv: [B, N, 3D] (bf16) -> [B, N, D] (bf16)."""
    B, N, C3 = qkv.shape
    D = C3 // 3
    hd = D // num_heads

    # Choose heads-per-program so each program's q/k/v column slab is a multiple
    # of 128 lanes; otherwise fall back to one whole-slab program per batch.
    split, hpg = False, num_heads
    if hd % 128 == 0:
        split, hpg = True, 1
    else:
        cand = 128 // math.gcd(hd, 128)
        if num_heads % cand == 0:
            split, hpg = True, cand
    G = hpg * hd
    ng = num_heads // hpg

    ln_tiled = jnp.tile(ln_qk.astype(jnp.float32), (1, hpg))          # [4, G]
    eye = jnp.eye(hpg, dtype=jnp.float32)
    avg = jnp.kron(eye, jnp.full((hd, 1), 1.0 / hd, jnp.float32))     # [G, hpg]
    expand = jnp.kron(eye, jnp.ones((1, hd), jnp.float32))            # [hpg, G]

    kernel = partial(_attention_kernel, heads_per_prog=hpg, head_dim=hd,
                     scale=scale, eps=eps, split=split)

    # TODO(synk): for very long sequences add a flash-style q-tile grid axis to
    # bound per-program VMEM instead of holding the full [N, G] slabs.
    if split:
        grid = (B, ng)
        in_specs = [
            pl.BlockSpec((1, N, G), lambda b, g: (b, 0, g)),            # q group
            pl.BlockSpec((1, N, G), lambda b, g: (b, 0, ng + g)),       # k group
            pl.BlockSpec((1, N, G), lambda b, g: (b, 0, 2 * ng + g)),   # v group
            pl.BlockSpec((4, G), lambda b, g: (0, 0)),
            pl.BlockSpec((G, hpg), lambda b, g: (0, 0)),
            pl.BlockSpec((hpg, G), lambda b, g: (0, 0)),
        ]
        operands = (qkv, qkv, qkv, ln_tiled, avg, expand)
        out_specs = pl.BlockSpec((1, N, G), lambda b, g: (b, 0, g))
        dims = ("parallel", "parallel")
    else:
        grid = (B,)
        in_specs = [
            pl.BlockSpec((1, N, C3), lambda b: (b, 0, 0)),
            pl.BlockSpec((4, G), lambda b: (0, 0)),
            pl.BlockSpec((G, hpg), lambda b: (0, 0)),
            pl.BlockSpec((hpg, G), lambda b: (0, 0)),
        ]
        operands = (qkv, ln_tiled, avg, expand)
        out_specs = pl.BlockSpec((1, N, D), lambda b: (b, 0, 0))
        dims = ("parallel",)

    return pl.pallas_call(
        kernel,
        out_shape=jax.ShapeDtypeStruct((B, N, D), jnp.bfloat16),
        grid=grid,
        in_specs=in_specs,
        out_specs=out_specs,
        compiler_params=pltpu.CompilerParams(
            dimension_semantics=dims,
            vmem_limit_bytes=_vmem_limit_bytes(),
        ),
    )(*operands)


# ----------------------------------------------------------------------------
# LSQ weight quantization + parameters
# ----------------------------------------------------------------------------
def lsq_quantize_weight(w, nbits):
    """LSQ kernel-wise (per output channel) weight fake-quantization.
    Returns (int8 codes with w's shape, f32 per-output-channel scale alpha)."""
    qn = -(2 ** (nbits - 1))
    qp = 2 ** (nbits - 1) - 1
    flat = w.reshape(w.shape[0], -1)
    alpha = 2.0 * jnp.mean(jnp.abs(flat), axis=1) / math.sqrt(qp)
    alpha = jnp.maximum(alpha, 1e-8)
    codes = jnp.clip(jnp.round(flat / alpha[:, None]), qn, qp).astype(jnp.int8)
    return codes.reshape(w.shape), alpha.astype(jnp.float32)


def _trunc_normal(key, shape, std=0.02):
    return std * jax.random.truncated_normal(key, -2.0, 2.0, shape, jnp.float32)


def init_q_attention_params(key, dim, num_heads, nbits):
    """Deterministic synthetic Q_Attention parameters (qkv_bias=False)."""
    hd = dim // num_heads
    keys = jax.random.split(key, 8)
    qkv_codes, qkv_alpha = lsq_quantize_weight(_trunc_normal(keys[0], (3 * dim, dim)), nbits)
    proj_codes, proj_alpha = lsq_quantize_weight(_trunc_normal(keys[1], (dim, dim)), nbits)
    # Non-trivial norm_q/norm_k affine params so the scale fold is exercised.
    ln_qk = jnp.stack([
        1.0 + 0.1 * jax.random.normal(keys[2], (hd,), jnp.float32),  # norm_q gamma
        0.1 * jax.random.normal(keys[3], (hd,), jnp.float32),        # norm_q beta
        1.0 + 0.1 * jax.random.normal(keys[4], (hd,), jnp.float32),  # norm_k gamma
        0.1 * jax.random.normal(keys[5], (hd,), jnp.float32),        # norm_k beta
    ]).astype(jnp.float32)
    return dict(
        qkv_w_t=qkv_codes.T,                        # [dim, 3*dim] int8 LSQ codes
        qkv_alpha=qkv_alpha,                        # [3*dim]
        qkv_b=jnp.zeros((3 * dim,), jnp.float32),   # qkv_bias=False
        proj_w_t=proj_codes.T,                      # [dim, dim] int8 LSQ codes
        proj_alpha=proj_alpha,                      # [dim]
        proj_b=0.02 * jax.random.normal(keys[6], (dim,), jnp.float32),
        ln_qk=ln_qk,                                # [4, head_dim]
    )


# ----------------------------------------------------------------------------
# Q_Attention forward (Pallas) and pure-JAX reference
# ----------------------------------------------------------------------------
def q_attention_forward(params, x0, *, num_heads):
    """Pallas forward of Q_Attention (eval mode: dropouts are identity)."""
    B, N, C = x0.shape
    hd = C // num_heads
    scale = hd ** -0.5
    x2d = x0.reshape(B * N, C)
    # LinearQ qkv; activation slab emitted in bf16 (halves HBM write + re-read).
    qkv = fused_linear(x2d, params["qkv_w_t"], params["qkv_alpha"], params["qkv_b"],
                       out_dtype=jnp.bfloat16)
    attn = attention_pallas(qkv.reshape(B, N, 3 * C), params["ln_qk"], num_heads, scale)
    # LinearQ proj (proj_drop is identity).
    out = fused_linear(attn.reshape(B * N, C), params["proj_w_t"],
                       params["proj_alpha"], params["proj_b"], out_dtype=jnp.float32)
    return out.reshape(B, N, C)


def q_attention_reference(params, x0, *, num_heads, eps=1e-5):
    """Pure-JAX reference mirroring the PyTorch module (ActQ == identity)."""
    B, N, C = x0.shape
    hd = C // num_heads
    scale = hd ** -0.5
    w_qkv = params["qkv_w_t"].astype(jnp.float32) * params["qkv_alpha"][None, :]
    w_proj = params["proj_w_t"].astype(jnp.float32) * params["proj_alpha"][None, :]
    qkv = x0 @ w_qkv + params["qkv_b"]
    qkv = qkv.reshape(B, N, 3, num_heads, hd).transpose(2, 0, 3, 1, 4)
    q, k, v = qkv[0], qkv[1], qkv[2]

    def ln(t, g, b):
        mu = t.mean(-1, keepdims=True)
        var = jnp.mean((t - mu) ** 2, -1, keepdims=True)
        return (t - mu) / jnp.sqrt(var + eps) * g + b

    gq, bq, gk, bk = params["ln_qk"]
    attn = jax.nn.softmax(
        (ln(q, gq, bq) @ jnp.swapaxes(ln(k, gk, bk), -2, -1)) * scale, axis=-1)
    x1 = jnp.swapaxes(attn @ v, 1, 2).reshape(B, N, C)
    return x1 @ w_proj + params["proj_b"]


if __name__ == "__main__":
    nbits = 4

    # Case 1: small Q-ViT-ish shapes (head_dim=8 -> whole-slab attention path).
    dim, num_heads, B, N = 32, 4, 2, 66
    pk, xk = jax.random.split(jax.random.PRNGKey(0))
    params = init_q_attention_params(pk, dim, num_heads, nbits)
    x = jax.random.normal(xk, (B, N, dim), jnp.float32)
    fwd = jax.jit(partial(q_attention_forward, num_heads=num_heads))
    y = jax.block_until_ready(fwd(params, x))
    y_ref = q_attention_reference(params, x, num_heads=num_heads)
    assert y.shape == (B, N, dim)
    assert not bool(jnp.any(jnp.isnan(y)))
    assert float(jnp.max(jnp.abs(y - y_ref))) < 5e-2

    # Case 2: head_dim=128 -> 128-lane head-group path (grid=(B, n_groups)).
    dim2, nh2, B2, N2 = 256, 2, 2, 128
    pk2, xk2 = jax.random.split(jax.random.PRNGKey(1))
    params2 = init_q_attention_params(pk2, dim2, nh2, nbits)
    x2 = jax.random.normal(xk2, (B2, N2, dim2), jnp.float32)
    fwd2 = jax.jit(partial(q_attention_forward, num_heads=nh2))
    y2 = jax.block_until_ready(fwd2(params2, x2))
    y2_ref = q_attention_reference(params2, x2, num_heads=nh2)
    assert y2.shape == (B2, N2, dim2)
    assert not bool(jnp.any(jnp.isnan(y2)))
    assert float(jnp.max(jnp.abs(y2 - y2_ref))) < 5e-2

    # Case 3: multi-K-tile accumulator path of the quantized matmul kernel.
    kx, kw, kb = jax.random.split(jax.random.PRNGKey(2), 3)
    xm = jax.random.normal(kx, (64, 512), jnp.float32)
    codes, alpha = lsq_quantize_weight(_trunc_normal(kw, (384, 512)), nbits)
    bias = 0.02 * jax.random.normal(kb, (384,), jnp.float32)
    ym = jax.block_until_ready(fused_linear(xm, codes.T, alpha, bias, tk=128))
    ym_ref = xm @ (codes.T.astype(jnp.float32) * alpha[None, :]) + bias
    assert float(jnp.max(jnp.abs(ym - ym_ref))) < 5e-2

    print("KERNEL_OK")
</pallas_src>

<mosaic_0001>
module attributes {stable_mosaic.version = 11 : i64} {
  func.func @kernel(%arg0: i32, %arg1: i32, %arg2: i32, %arg3: memref<132x32xf32, #tpu.memory_space<vmem>>, %arg4: memref<32x96xi8, #tpu.memory_space<vmem>>, %arg5: memref<1x96xf32, #tpu.memory_space<vmem>>, %arg6: memref<1x96xf32, #tpu.memory_space<vmem>>, %arg7: memref<132x96xbf16, #tpu.memory_space<vmem>>) attributes {dimension_semantics = [#tpu.dimension_semantics<parallel>, #tpu.dimension_semantics<parallel>, #tpu.dimension_semantics<arbitrary>], iteration_bounds = array<i64: 1, 1, 1>, scalar_prefetch = 0 : i64, scratch_operands = 0 : i64, tpu.core_type = #tpu.core_type<tc>, window_params = [{transform_indices = @transform_0, window_bounds = array<i64: 132, 32>}, {transform_indices = @transform_1, window_bounds = array<i64: 32, 96>}, {transform_indices = @transform_2, window_bounds = array<i64: 1, 96>}, {transform_indices = @transform_3, window_bounds = array<i64: 1, 96>}, {transform_indices = @transform_4, window_bounds = array<i64: 132, 96>}]} {
    %c0 = arith.constant 0 : index
    %c0_0 = arith.constant 0 : index
    %0 = vector.load %arg3[%c0, %c0_0] : memref<132x32xf32, #tpu.memory_space<vmem>>, vector<132x32xf32>
    %1 = arith.truncf %0 : vector<132x32xf32> to vector<132x32xbf16>
    %c0_1 = arith.constant 0 : index
    %c0_2 = arith.constant 0 : index
    %2 = vector.load %arg4[%c0_1, %c0_2] : memref<32x96xi8, #tpu.memory_space<vmem>>, vector<32x96xi8>
    %3 = arith.sitofp %2 : vector<32x96xi8> to vector<32x96xf32>
    %4 = arith.truncf %3 : vector<32x96xf32> to vector<32x96xbf16>
    %cst = arith.constant dense<0.000000e+00> : vector<132x96xf32>
    %5 = tpu.matmul %1, %4, %cst {dimension_numbers = #tpu.dot_dimension_numbers<[1], [0], [0], [1], [0, 0, 1, 1], [], []>} : vector<132x32xbf16>, vector<32x96xbf16>, vector<132x96xf32> -> vector<132x96xf32>
    %c0_3 = arith.constant 0 : index
    %c0_4 = arith.constant 0 : index
    %6 = vector.load %arg5[%c0_3, %c0_4] : memref<1x96xf32, #tpu.memory_space<vmem>>, vector<1x96xf32>
    %7 = vector.broadcast %6 : vector<1x96xf32> to vector<132x96xf32>
    %8 = arith.mulf %5, %7 : vector<132x96xf32>
    %c0_5 = arith.constant 0 : index
    %c0_6 = arith.constant 0 : index
    %9 = vector.load %arg6[%c0_5, %c0_6] : memref<1x96xf32, #tpu.memory_space<vmem>>, vector<1x96xf32>
    %10 = vector.broadcast %9 : vector<1x96xf32> to vector<132x96xf32>
    %11 = arith.addf %8, %10 : vector<132x96xf32>
    %12 = arith.truncf %11 : vector<132x96xf32> to vector<132x96xbf16>
    %c0_7 = arith.constant 0 : index
    %c0_8 = arith.constant 0 : index
    %13 = vector.load %arg7[%c0_7, %c0_8] : memref<132x96xbf16, #tpu.memory_space<vmem>>, vector<132x96xbf16>
    tpu.vector_store %arg7[%c0_7, %c0_8], %12 {strides = array<i32>} : memref<132x96xbf16, #tpu.memory_space<vmem>>, vector<132x96xbf16>,
    return
  }
  func.func @transform_0(%arg0: i32, %arg1: i32, %arg2: i32) -> (i32, i32) {
    %c0_i32 = arith.constant 0 : i32
    return %arg0, %arg2 : i32, i32
  }
  func.func @transform_1(%arg0: i32, %arg1: i32, %arg2: i32) -> (i32, i32) {
    %c0_i32 = arith.constant 0 : i32
    return %arg2, %arg1 : i32, i32
  }
  func.func @transform_2(%arg0: i32, %arg1: i32, %arg2: i32) -> (i32, i32) {
    %c0_i32 = arith.constant 0 : i32
    %c0_i32_0 = arith.constant 0 : i32
    return %c0_i32, %arg1 : i32, i32
  }
  func.func @transform_3(%arg0: i32, %arg1: i32, %arg2: i32) -> (i32, i32) {
    %c0_i32 = arith.constant 0 : i32
    %c0_i32_0 = arith.constant 0 : i32
    return %c0_i32, %arg1 : i32, i32
  }
  func.func @transform_4(%arg0: i32, %arg1: i32, %arg2: i32) -> (i32, i32) {
    %c0_i32 = arith.constant 0 : i32
    return %arg0, %arg1 : i32, i32
  }
}

module attributes {stable_mosaic.version = 11 : i64} {
  func.func @kernel(%arg0: i32, %arg1: i32, %arg2: i32, %arg3: memref<132x32xbf16, #tpu.memory_space<vmem>>, %arg4: memref<32x32xi8, #tpu.memory_space<vmem>>, %arg5: memref<1x32xf32, #tpu.memory_space<vmem>>, %arg6: memref<1x32xf32, #tpu.memory_space<vmem>>, %arg7: memref<132x32xf32, #tpu.memory_space<vmem>>) attributes {dimension_semantics = [#tpu.dimension_semantics<parallel>, #tpu.dimension_semantics<parallel>, #tpu.dimension_semantics<arbitrary>], iteration_bounds = array<i64: 1, 1, 1>, scalar_prefetch = 0 : i64, scratch_operands = 0 : i64, tpu.core_type = #tpu.core_type<tc>, window_params = [{transform_indices = @transform_0, window_bounds = array<i64: 132, 32>}, {transform_indices = @transform_1, window_bounds = array<i64: 32, 32>}, {transform_indices = @transform_2, window_bounds = array<i64: 1, 32>}, {transform_indices = @transform_3, window_bounds = array<i64: 1, 32>}, {transform_indices = @transform_4, window_bounds = array<i64: 132, 32>}]} {
    %c0 = arith.constant 0 : index
    %c0_0 = arith.constant 0 : index
    %0 = vector.load %arg3[%c0, %c0_0] : memref<132x32xbf16, #tpu.memory_space<vmem>>, vector<132x32xbf16>
    %c0_1 = arith.constant 0 : index
    %c0_2 = arith.constant 0 : index
    %1 = vector.load %arg4[%c0_1, %c0_2] : memref<32x32xi8, #tpu.memory_space<vmem>>, vector<32x32xi8>
    %2 = arith.sitofp %1 : vector<32x32xi8> to vector<32x32xf32>
    %3 = arith.truncf %2 : vector<32x32xf32> to vector<32x32xbf16>
    %cst = arith.constant dense<0.000000e+00> : vector<132x32xf32>
    %4 = tpu.matmul %0, %3, %cst {dimension_numbers = #tpu.dot_dimension_numbers<[1], [0], [0], [1], [0, 0, 1, 1], [], []>} : vector<132x32xbf16>, vector<32x32xbf16>, vector<132x32xf32> -> vector<132x32xf32>
    %c0_3 = arith.constant 0 : index
    %c0_4 = arith.constant 0 : index
    %5 = vector.load %arg5[%c0_3, %c0_4] : memref<1x32xf32, #tpu.memory_space<vmem>>, vector<1x32xf32>
    %6 = vector.broadcast %5 : vector<1x32xf32> to vector<132x32xf32>
    %7 = arith.mulf %4, %6 : vector<132x32xf32>
    %c0_5 = arith.constant 0 : index
    %c0_6 = arith.constant 0 : index
    %8 = vector.load %arg6[%c0_5, %c0_6] : memref<1x32xf32, #tpu.memory_space<vmem>>, vector<1x32xf32>
    %9 = vector.broadcast %8 : vector<1x32xf32> to vector<132x32xf32>
    %10 = arith.addf %7, %9 : vector<132x32xf32>
    %c0_7 = arith.constant 0 : index
    %c0_8 = arith.constant 0 : index
    %11 = vector.load %arg7[%c0_7, %c0_8] : memref<132x32xf32, #tpu.memory_space<vmem>>, vector<132x32xf32>
    tpu.vector_store %arg7[%c0_7, %c0_8], %10 {strides = array<i32>} : memref<132x32xf32, #tpu.memory_space<vmem>>, vector<132x32xf32>,
    return
  }
  func.func @transform_0(%arg0: i32, %arg1: i32, %arg2: i32) -> (i32, i32) {
    %c0_i32 = arith.constant 0 : i32
    return %arg0, %arg2 : i32, i32
  }
  func.func @transform_1(%arg0: i32, %arg1: i32, %arg2: i32) -> (i32, i32) {
    %c0_i32 = arith.constant 0 : i32
    return %arg2, %arg1 : i32, i32
  }
  func.func @transform_2(%arg0: i32, %arg1: i32, %arg2: i32) -> (i32, i32) {
    %c0_i32 = arith.constant 0 : i32
    %c0_i32_0 = arith.constant 0 : i32
    return %c0_i32, %arg1 : i32, i32
  }
  func.func @transform_3(%arg0: i32, %arg1: i32, %arg2: i32) -> (i32, i32) {
    %c0_i32 = arith.constant 0 : i32
    %c0_i32_0 = arith.constant 0 : i32
    return %c0_i32, %arg1 : i32, i32
  }
  func.func @transform_4(%arg0: i32, %arg1: i32, %arg2: i32) -> (i32, i32) {
    %c0_i32 = arith.constant 0 : i32
    return %arg0, %arg1 : i32, i32
  }
}

module attributes {stable_mosaic.version = 11 : i64} {
  func.func @_attention_kernel(%arg0: i32, %arg1: memref<1x66x96xbf16, #tpu.memory_space<vmem>>, %arg2: memref<4x32xf32, #tpu.memory_space<vmem>>, %arg3: memref<32x4xf32, #tpu.memory_space<vmem>>, %arg4: memref<4x32xf32, #tpu.memory_space<vmem>>, %arg5: memref<1x66x32xbf16, #tpu.memory_space<vmem>>) attributes {dimension_semantics = [#tpu.dimension_semantics<parallel>], iteration_bounds = array<i64: 2>, scalar_prefetch = 0 : i64, scratch_operands = 0 : i64, tpu.core_type = #tpu.core_type<tc>, window_params = [{transform_indices = @transform_0, window_bounds = array<i64: 1, 66, 96>}, {pipeline_mode = #tpu.pipeline_mode<synchronous>, transform_indices = @transform_1, window_bounds = array<i64: 4, 32>}, {pipeline_mode = #tpu.pipeline_mode<synchronous>, transform_indices = @transform_2, window_bounds = array<i64: 32, 4>}, {pipeline_mode = #tpu.pipeline_mode<synchronous>, transform_indices = @transform_3, window_bounds = array<i64: 4, 32>}, {transform_indices = @transform_4, window_bounds = array<i64: 1, 66, 32>}]} {
    %c0 = arith.constant 0 : index
    %c0_0 = arith.constant 0 : index
    %c0_1 = arith.constant 0 : index
    %0 = vector.load %arg1[%c0, %c0_0, %c0_1] : memref<1x66x96xbf16, #tpu.memory_space<vmem>>, vector<1x66x96xbf16>
    %1 = vector.shape_cast %0 : vector<1x66x96xbf16> to vector<66x96xbf16>
    %2 = vector.extract_strided_slice %1 {offsets = [0, 0], sizes = [66, 32], strides = [1, 1]} : vector<66x96xbf16> to vector<66x32xbf16>
    %3 = arith.extf %2 : vector<66x32xbf16> to vector<66x32xf32>
    %4 = vector.extract_strided_slice %1 {offsets = [0, 32], sizes = [66, 32], strides = [1, 1]} : vector<66x96xbf16> to vector<66x32xbf16>
    %5 = arith.extf %4 : vector<66x32xbf16> to vector<66x32xf32>
    %6 = vector.extract_strided_slice %1 {offsets = [0, 64], sizes = [66, 32], strides = [1, 1]} : vector<66x96xbf16> to vector<66x32xbf16>
    %c0_2 = arith.constant 0 : index
    %c0_3 = arith.constant 0 : index
    %7 = vector.load %arg2[%c0_2, %c0_3] : memref<4x32xf32, #tpu.memory_space<vmem>>, vector<1x32xf32>
    %cst = arith.constant 0.353553385 : f32
    %8 = vector.broadcast %cst : f32 to vector<1x32xf32>
    %9 = arith.mulf %7, %8 : vector<1x32xf32>
    %c1 = arith.constant 1 : index
    %c0_4 = arith.constant 0 : index
    %10 = vector.load %arg2[%c1, %c0_4] : memref<4x32xf32, #tpu.memory_space<vmem>>, vector<1x32xf32>
    %cst_5 = arith.constant 0.353553385 : f32
    %11 = vector.broadcast %cst_5 : f32 to vector<1x32xf32>
    %12 = arith.mulf %10, %11 : vector<1x32xf32>
    %c2 = arith.constant 2 : index
    %c0_6 = arith.constant 0 : index
    %13 = vector.load %arg2[%c2, %c0_6] : memref<4x32xf32, #tpu.memory_space<vmem>>, vector<1x32xf32>
    %c3 = arith.constant 3 : index
    %c0_7 = arith.constant 0 : index
    %14 = vector.load %arg2[%c3, %c0_7] : memref<4x32xf32, #tpu.memory_space<vmem>>, vector<1x32xf32>
    %c0_8 = arith.constant 0 : index
    %c0_9 = arith.constant 0 : index
    %15 = vector.load %arg3[%c0_8, %c0_9] : memref<32x4xf32, #tpu.memory_space<vmem>>, vector<32x4xf32>
    %c0_10 = arith.constant 0 : index
    %c0_11 = arith.constant 0 : index
    %16 = vector.load %arg4[%c0_10, %c0_11] : memref<4x32xf32, #tpu.memory_space<vmem>>, vector<4x32xf32>
    %cst_12 = arith.constant dense<0.000000e+00> : vector<66x4xf32>
    %17 = tpu.matmul %3, %15, %cst_12 {dimension_numbers = #tpu.dot_dimension_numbers<[1], [0], [0], [1], [0, 0, 1, 1], [], []>} : vector<66x32xf32>, vector<32x4xf32>, vector<66x4xf32> -> vector<66x4xf32>
    %cst_13 = arith.constant dense<0.000000e+00> : vector<66x32xf32>
    %18 = tpu.matmul %17, %16, %cst_13 {dimension_numbers = #tpu.dot_dimension_numbers<[1], [0], [0], [1], [0, 0, 1, 1], [], []>} : vector<66x4xf32>, vector<4x32xf32>, vector<66x32xf32> -> vector<66x32xf32>
    %19 = arith.subf %3, %18 : vector<66x32xf32>
    %20 = arith.mulf %19, %19 : vector<66x32xf32>
    %cst_14 = arith.constant dense<0.000000e+00> : vector<66x4xf32>
    %21 = tpu.matmul %20, %15, %cst_14 {dimension_numbers = #tpu.dot_dimension_numbers<[1], [0], [0], [1], [0, 0, 1, 1], [], []>} : vector<66x32xf32>, vector<32x4xf32>, vector<66x4xf32> -> vector<66x4xf32>
    %cst_15 = arith.constant dense<0.000000e+00> : vector<66x32xf32>
    %22 = tpu.matmul %21, %16, %cst_15 {dimension_numbers = #tpu.dot_dimension_numbers<[1], [0], [0], [1], [0, 0, 1, 1], [], []>} : vector<66x4xf32>, vector<4x32xf32>, vector<66x32xf32> -> vector<66x32xf32>
    %cst_16 = arith.constant 9.99999974E-6 : f32
    %23 = vector.broadcast %cst_16 : f32 to vector<66x32xf32>
    %24 = arith.addf %22, %23 : vector<66x32xf32>
    %25 = math.rsqrt %24 : vector<66x32xf32>
    %26 = arith.mulf %19, %25 : vector<66x32xf32>
    %27 = vector.broadcast %9 : vector<1x32xf32> to vector<66x32xf32>
    %28 = arith.mulf %26, %27 : vector<66x32xf32>
    %29 = vector.broadcast %12 : vector<1x32xf32> to vector<66x32xf32>
    %30 = arith.addf %28, %29 : vector<66x32xf32>
    %31 = arith.truncf %30 : vector<66x32xf32> to vector<66x32xbf16>
    %cst_17 = arith.constant dense<0.000000e+00> : vector<66x4xf32>
    %32 = tpu.matmul %5, %15, %cst_17 {dimension_numbers = #tpu.dot_dimension_numbers<[1], [0], [0], [1], [0, 0, 1, 1], [], []>} : vector<66x32xf32>, vector<32x4xf32>, vector<66x4xf32> -> vector<66x4xf32>
    %cst_18 = arith.constant dense<0.000000e+00> : vector<66x32xf32>
    %33 = tpu.matmul %32, %16, %cst_18 {dimension_numbers = #tpu.dot_dimension_numbers<[1], [0], [0], [1], [0, 0, 1, 1], [], []>} : vector<66x4xf32>, vector<4x32xf32>, vector<66x32xf32> -> vector<66x32xf32>
    %34 = arith.subf %5, %33 : vector<66x32xf32>
    %35 = arith.mulf %34, %34 : vector<66x32xf32>
    %cst_19 = arith.constant dense<0.000000e+00> : vector<66x4xf32>
    %36 = tpu.matmul %35, %15, %cst_19 {dimension_numbers = #tpu.dot_dimension_numbers<[1], [0], [0], [1], [0, 0, 1, 1], [], []>} : vector<66x32xf32>, vector<32x4xf32>, vector<66x4xf32> -> vector<66x4xf32>
    %cst_20 = arith.constant dense<0.000000e+00> : vector<66x32xf32>
    %37 = tpu.matmul %36, %16, %cst_20 {dimension_numbers = #tpu.dot_dimension_numbers<[1], [0], [0], [1], [0, 0, 1, 1], [], []>} : vector<66x4xf32>, vector<4x32xf32>, vector<66x32xf32> -> vector<66x32xf32>
    %cst_21 = arith.constant 9.99999974E-6 : f32
    %38 = vector.broadcast %cst_21 : f32 to vector<66x32xf32>
    %39 = arith.addf %37, %38 : vector<66x32xf32>
    %40 = math.rsqrt %39 : vector<66x32xf32>
    %41 = arith.mulf %34, %40 : vector<66x32xf32>
    %42 = vector.broadcast %13 : vector<1x32xf32> to vector<66x32xf32>
    %43 = arith.mulf %41, %42 : vector<66x32xf32>
    %44 = vector.broadcast %14 : vector<1x32xf32> to vector<66x32xf32>
    %45 = arith.addf %43, %44 : vector<66x32xf32>
    %46 = arith.truncf %45 : vector<66x32xf32> to vector<66x32xbf16>
    %47 = vector.extract_strided_slice %31 {offsets = [0, 0], sizes = [66, 8], strides = [1, 1]} : vector<66x32xbf16> to vector<66x8xbf16>
    %48 = vector.extract_strided_slice %46 {offsets = [0, 0], sizes = [66, 8], strides = [1, 1]} : vector<66x32xbf16> to vector<66x8xbf16>
    %cst_22 = arith.constant dense<0.000000e+00> : vector<66x66xf32>
    %49 = tpu.matmul %47, %48, %cst_22 {dimension_numbers = #tpu.dot_dimension_numbers<[1], [1], [0], [0], [0, 0, 1, 0], [], []>} : vector<66x8xbf16>, vector<66x8xbf16>, vector<66x66xf32> -> vector<66x66xf32>
    %cst_23 = arith.constant dense<0xFF800000> : vector<66xf32>
    %50 = vector.multi_reduction <maximumf>, %49, %cst_23 [1] : vector<66x66xf32> to vector<66xf32>
    %51 = vector.shape_cast %50 : vector<66xf32> to vector<66x1xf32>
    %52 = vector.broadcast %51 : vector<66x1xf32> to vector<66x66xf32>
    %53 = arith.subf %49, %52 : vector<66x66xf32>
    %54 = math.exp %53 : vector<66x66xf32>
    %cst_24 = arith.constant dense<0.000000e+00> : vector<66xf32>
    %55 = vector.multi_reduction <add>, %54, %cst_24 [1] : vector<66x66xf32> to vector<66xf32>
    %56 = vector.shape_cast %55 : vector<66xf32> to vector<66x1xf32>
    %57 = tpu.reciprocal %56 {approx = true} : vector<66x1xf32> -> vector<66x1xf32>
    %58 = vector.broadcast %57 : vector<66x1xf32> to vector<66x66xf32>
    %59 = arith.mulf %54, %58 : vector<66x66xf32>
    %60 = arith.truncf %59 : vector<66x66xf32> to vector<66x66xbf16>
    %61 = vector.extract_strided_slice %6 {offsets = [0, 0], sizes = [66, 8], strides = [1, 1]} : vector<66x32xbf16> to vector<66x8xbf16>
    %cst_25 = arith.constant dense<0.000000e+00> : vector<66x8xf32>
    %62 = tpu.matmul %60, %61, %cst_25 {dimension_numbers = #tpu.dot_dimension_numbers<[1], [0], [0], [1], [0, 0, 1, 1], [], []>} : vector<66x66xbf16>, vector<66x8xbf16>, vector<66x8xf32> -> vector<66x8xf32>
    %63 = vector.extract_strided_slice %31 {offsets = [0, 8], sizes = [66, 8], strides = [1, 1]} : vector<66x32xbf16> to vector<66x8xbf16>
    %64 = vector.extract_strided_slice %46 {offsets = [0, 8], sizes = [66, 8], strides = [1, 1]} : vector<66x32xbf16> to vector<66x8xbf16>
    %cst_26 = arith.constant dense<0.000000e+00> : vector<66x66xf32>
    %65 = tpu.matmul %63, %64, %cst_26 {dimension_numbers = #tpu.dot_dimension_numbers<[1], [1], [0], [0], [0, 0, 1, 0], [], []>} : vector<66x8xbf16>, vector<66x8xbf16>, vector<66x66xf32> -> vector<66x66xf32>
    %cst_27 = arith.constant dense<0xFF800000> : vector<66xf32>
    %66 = vector.multi_reduction <maximumf>, %65, %cst_27 [1] : vector<66x66xf32> to vector<66xf32>
    %67 = vector.shape_cast %66 : vector<66xf32> to vector<66x1xf32>
    %68 = vector.broadcast %67 : vector<66x1xf32> to vector<66x66xf32>
    %69 = arith.subf %65, %68 : vector<66x66xf32>
    %70 = math.exp %69 : vector<66x66xf32>
    %cst_28 = arith.constant dense<0.000000e+00> : vector<66xf32>
    %71 = vector.multi_reduction <add>, %70, %cst_28 [1] : vector<66x66xf32> to vector<66xf32>
    %72 = vector.shape_cast %71 : vector<66xf32> to vector<66x1xf32>
    %73 = tpu.reciprocal %72 {approx = true} : vector<66x1xf32> -> vector<66x1xf32>
    %74 = vector.broadcast %73 : vector<66x1xf32> to vector<66x66xf32>
    %75 = arith.mulf %70, %74 : vector<66x66xf32>
    %76 = arith.truncf %75 : vector<66x66xf32> to vector<66x66xbf16>
    %77 = vector.extract_strided_slice %6 {offsets = [0, 8], sizes = [66, 8], strides = [1, 1]} : vector<66x32xbf16> to vector<66x8xbf16>
    %cst_29 = arith.constant dense<0.000000e+00> : vector<66x8xf32>
    %78 = tpu.matmul %76, %77, %cst_29 {dimension_numbers = #tpu.dot_dimension_numbers<[1], [0], [0], [1], [0, 0, 1, 1], [], []>} : vector<66x66xbf16>, vector<66x8xbf16>, vector<66x8xf32> -> vector<66x8xf32>
    %79 = vector.extract_strided_slice %31 {offsets = [0, 16], sizes = [66, 8], strides = [1, 1]} : vector<66x32xbf16> to vector<66x8xbf16>
    %80 = vector.extract_strided_slice %46 {offsets = [0, 16], sizes = [66, 8], strides = [1, 1]} : vector<66x32xbf16> to vector<66x8xbf16>
    %cst_30 = arith.constant dense<0.000000e+00> : vector<66x66xf32>
    %81 = tpu.matmul %79, %80, %cst_30 {dimension_numbers = #tpu.dot_dimension_numbers<[1], [1], [0], [0], [0, 0, 1, 0], [], []>} : vector<66x8xbf16>, vector<66x8xbf16>, vector<66x66xf32> -> vector<66x66xf32>
    %cst_31 = arith.constant dense<0xFF800000> : vector<66xf32>
    %82 = vector.multi_reduction <maximumf>, %81, %cst_31 [1] : vector<66x66xf32> to vector<66xf32>
    %83 = vector.shape_cast %82 : vector<66xf32> to vector<66x1xf32>
    %84 = vector.broadcast %83 : vector<66x1xf32> to vector<66x66xf32>
    %85 = arith.subf %81, %84 : vector<66x66xf32>
    %86 = math.exp %85 : vector<66x66xf32>
    %cst_32 = arith.constant dense<0.000000e+00> : vector<66xf32>
    %87 = vector.multi_reduction <add>, %86, %cst_32 [1] : vector<66x66xf32> to vector<66xf32>
    %88 = vector.shape_cast %87 : vector<66xf32> to vector<66x1xf32>
    %89 = tpu.reciprocal %88 {approx = true} : vector<66x1xf32> -> vector<66x1xf32>
    %90 = vector.broadcast %89 : vector<66x1xf32> to vector<66x66xf32>
    %91 = arith.mulf %86, %90 : vector<66x66xf32>
    %92 = arith.truncf %91 : vector<66x66xf32> to vector<66x66xbf16>
    %93 = vector.extract_strided_slice %6 {offsets = [0, 16], sizes = [66, 8], strides = [1, 1]} : vector<66x32xbf16> to vector<66x8xbf16>
    %cst_33 = arith.constant dense<0.000000e+00> : vector<66x8xf32>
    %94 = tpu.matmul %92, %93, %cst_33 {dimension_numbers = #tpu.dot_dimension_numbers<[1], [0], [0], [1], [0, 0, 1, 1], [], []>} : vector<66x66xbf16>, vector<66x8xbf16>, vector<66x8xf32> -> vector<66x8xf32>
    %95 = vector.extract_strided_slice %31 {offsets = [0, 24], sizes = [66, 8], strides = [1, 1]} : vector<66x32xbf16> to vector<66x8xbf16>
    %96 = vector.extract_strided_slice %46 {offsets = [0, 24], sizes = [66, 8], strides = [1, 1]} : vector<66x32xbf16> to vector<66x8xbf16>
    %cst_34 = arith.constant dense<0.000000e+00> : vector<66x66xf32>
    %97 = tpu.matmul %95, %96, %cst_34 {dimension_numbers = #tpu.dot_dimension_numbers<[1], [1], [0], [0], [0, 0, 1, 0], [], []>} : vector<66x8xbf16>, vector<66x8xbf16>, vector<66x66xf32> -> vector<66x66xf32>
    %cst_35 = arith.constant dense<0xFF800000> : vector<66xf32>
    %98 = vector.multi_reduction <maximumf>, %97, %cst_35 [1] : vector<66x66xf32> to vector<66xf32>
    %99 = vector.shape_cast %98 : vector<66xf32> to vector<66x1xf32>
    %100 = vector.broadcast %99 : vector<66x1xf32> to vector<66x66xf32>
    %101 = arith.subf %97, %100 : vector<66x66xf32>
    %102 = math.exp %101 : vector<66x66xf32>
    %cst_36 = arith.constant dense<0.000000e+00> : vector<66xf32>
    %103 = vector.multi_reduction <add>, %102, %cst_36 [1] : vector<66x66xf32> to vector<66xf32>
    %104 = vector.shape_cast %103 : vector<66xf32> to vector<66x1xf32>
    %105 = tpu.reciprocal %104 {approx = true} : vector<66x1xf32> -> vector<66x1xf32>
    %106 = vector.broadcast %105 : vector<66x1xf32> to vector<66x66xf32>
    %107 = arith.mulf %102, %106 : vector<66x66xf32>
    %108 = arith.truncf %107 : vector<66x66xf32> to vector<66x66xbf16>
    %109 = vector.extract_strided_slice %6 {offsets = [0, 24], sizes = [66, 8], strides = [1, 1]} : vector<66x32xbf16> to vector<66x8xbf16>
    %cst_37 = arith.constant dense<0.000000e+00> : vector<66x8xf32>
    %110 = tpu.matmul %108, %109, %cst_37 {dimension_numbers = #tpu.dot_dimension_numbers<[1], [0], [0], [1], [0, 0, 1, 1], [], []>} : vector<66x66xbf16>, vector<66x8xbf16>, vector<66x8xf32> -> vector<66x8xf32>
    %111 = tpu.concatenate %62, %78, %94, %110 in 1 : vector<66x8xf32>, vector<66x8xf32>, vector<66x8xf32>, vector<66x8xf32> -> vector<66x32xf32>
    %112 = arith.truncf %111 : vector<66x32xf32> to vector<66x32xbf16>
    %c0_38 = arith.constant 0 : index
    %c0_39 = arith.constant 0 : index
    %c0_40 = arith.constant 0 : index
    %113 = vector.load %arg5[%c0_38, %c0_39, %c0_40] : memref<1x66x32xbf16, #tpu.memory_space<vmem>>, vector<1x66x32xbf16>
    %114 = vector.shape_cast %113 : vector<1x66x32xbf16> to vector<66x32xbf16>
    %115 = vector.shape_cast %112 : vector<66x32xbf16> to vector<1x66x32xbf16>
    tpu.vector_store %arg5[%c0_38, %c0_39, %c0_40], %115 {strides = array<i32>} : memref<1x66x32xbf16, #tpu.memory_space<vmem>>, vector<1x66x32xbf16>,
    return
  }
  func.func @transform_0(%arg0: i32) -> (i32, i32, i32) {
    %c0_i32 = arith.constant 0 : i32
    %c0_i32_0 = arith.constant 0 : i32
    %c0_i32_1 = arith.constant 0 : i32
    return %arg0, %c0_i32, %c0_i32_0 : i32, i32, i32
  }
  func.func @transform_1(%arg0: i32) -> (i32, i32) {
    %c0_i32 = arith.constant 0 : i32
    %c0_i32_0 = arith.constant 0 : i32
    %c0_i32_1 = arith.constant 0 : i32
    return %c0_i32, %c0_i32_0 : i32, i32
  }
  func.func @transform_2(%arg0: i32) -> (i32, i32) {
    %c0_i32 = arith.constant 0 : i32
    %c0_i32_0 = arith.constant 0 : i32
    %c0_i32_1 = arith.constant 0 : i32
    return %c0_i32, %c0_i32_0 : i32, i32
  }
  func.func @transform_3(%arg0: i32) -> (i32, i32) {
    %c0_i32 = arith.constant 0 : i32
    %c0_i32_0 = arith.constant 0 : i32
    %c0_i32_1 = arith.constant 0 : i32
    return %c0_i32, %c0_i32_0 : i32, i32
  }
  func.func @transform_4(%arg0: i32) -> (i32, i32, i32) {
    %c0_i32 = arith.constant 0 : i32
    %c0_i32_0 = arith.constant 0 : i32
    %c0_i32_1 = arith.constant 0 : i32
    return %arg0, %c0_i32, %c0_i32_0 : i32, i32, i32
  }
}

</mosaic_0001>

<llo_original>
// kernel: q_attention_forward.3
$region0: #{q_attention_forward.3}
  #allocation0 [shape = 'u32[]', space=smem, size = 0x4, offset = 0x4, fixed_abs, tag = 'smem constant byte address 0x4 - core index']
  #allocation1 [shape = 'u32[144,128]{1,0:T(1,128)}', space=vmem, size = 0x12000, scoped, tag = 'internal scratch']
  %s0 = inlined_call_operand.vmem [shape: f32[132,32], index: 0, kind: input, shape index: {}]
  %s1 = inlined_call_operand.vmem [shape: s8[32,96], index: 1, kind: input, shape index: {}]
  %s2 = inlined_call_operand.vmem [shape: f32[1,96], index: 2, kind: input, shape index: {}]
  %s3 = inlined_call_operand.vmem [shape: f32[1,96], index: 3, kind: input, shape index: {}]
  %s4 = inlined_call_operand.vmem [shape: bf16[132,96], index: 4, kind: output, shape index: {}]
  %s5 = sld [smem:[#allocation0]]
  $region26: #{q_attention_forward.3} parent=0
    _
  %s7 = ssub.s32 1, %s5
  %s8 = scalar_select 0, %s7, %s5
  // Predicated region
  $region2: #{q_attention_forward.3} parent=0 // pred_check
    _
  $region3: #{q_attention_forward.3} parent=0 // pred_check_branch
    %10 = sbr.rel (0) target = $region5
  $region4: #{q_attention_forward.3} parent=0 // pred_region
    _
  $region5: #{q_attention_forward.3} parent=0 // pred_fallthru
    _
  // Predicated region
  $region6: #{q_attention_forward.3} parent=0 // pred_check
    _
  $region7: #{q_attention_forward.3} parent=0 // pred_check_branch
    %12 = sbr.rel (0) target = $region9
  $region8: #{q_attention_forward.3} parent=0 // pred_region
    _
  $region9: #{q_attention_forward.3} parent=0 // pred_fallthru
    _
  // Predicated region
  $region10: #{q_attention_forward.3} parent=0 // pred_check
    _
  $region11: #{q_attention_forward.3} parent=0 // pred_check_branch
    %14 = sbr.rel (0) target = $region13
  $region12: #{q_attention_forward.3} parent=0 // pred_region
    _
  $region13: #{q_attention_forward.3} parent=0 // pred_fallthru
    _
  // Predicated region
  $region14: #{q_attention_forward.3} parent=0 // pred_check
    _
  $region15: #{q_attention_forward.3} parent=0 // pred_check_branch
    %16 = sbr.rel (0) target = $region17
  $region16: #{q_attention_forward.3} parent=0 // pred_region
    _
  $region17: #{q_attention_forward.3} parent=0 // pred_fallthru
    _
  %v18 = vld [vmem:[%s0] sm:$0xff]
  %v19 = vld [vmem:[%s0 + $0x8] sm:$0xff]
  %v20 = vld [vmem:[%s0 + $0x10] sm:$0xff]
  %v21 = vld [vmem:[%s0 + $0x18] sm:$0xff]
  %v22 = vld [vmem:[%s0 + $0x20] sm:$0xff]
  %v23 = vld [vmem:[%s0 + $0x28] sm:$0xff]
  %v24 = vld [vmem:[%s0 + $0x30] sm:$0xff]
  %v25 = vld [vmem:[%s0 + $0x38] sm:$0xff]
  %v26 = vld [vmem:[%s0 + $0x40] sm:$0xff]
  %v27 = vld [vmem:[%s0 + $0x48] sm:$0xff]
  %v28 = vld [vmem:[%s0 + $0x50] sm:$0xff]
  %v29 = vld [vmem:[%s0 + $0x58] sm:$0xff]
  %v30 = vld [vmem:[%s0 + $0x60] sm:$0xff]
  %v31 = vld [vmem:[%s0 + $0x68] sm:$0xff]
  %v32 = vld [vmem:[%s0 + $0x70] sm:$0xff]
  %v33 = vld [vmem:[%s0 + $0x78] sm:$0xff]
  %v34 = vld [vmem:[%s0 + $0x80] sm:$0xf]
  %v35 = vpack.c.bf16 %v19, %v18
  %v36 = vpack.c.bf16 %v21, %v20
  %v37 = vpack.c.bf16 %v23, %v22
  %v38 = vpack.c.bf16 %v25, %v24
  %v39 = vpack.c.bf16 %v27, %v26
  %v40 = vpack.c.bf16 %v29, %v28
  %v41 = vpack.c.bf16 %v31, %v30
  %v42 = vpack.c.bf16 %v33, %v32
  %v43 = vpack.c.bf16 %v34, %v34
  %v44 = vld [vmem:[%s1] sm:$0xff]
  %v45 = vunpack.c.l.s8.bf16 %v44
  %v46 = vunpack.c.h.s8.bf16 %v44
  %vm47 = vcmask 261120
  %v49 = vsel %vm47, %v35, 0
  %v52 = vsel %vm47, %v36, 0
  %v55 = vsel %vm47, %v37, 0
  %v58 = vsel %vm47, %v38, 0
  %v61 = vsel %vm47, %v39, 0
  %v64 = vsel %vm47, %v40, 0
  %v67 = vsel %vm47, %v41, 0
  %v70 = vsel %vm47, %v42, 0
  %v73 = vsel %vm47, %v43, 0
  %75 = vmatprep.subr.bf16.mxu0 0
  %76 = vmatpush1.bf16.msra.mxu0 0
  %77 = vmatprep.subr.bf16.mxu0 0
  %78 = vmatpush1.bf16.msra.mxu0 0
  %79 = vmatprep.subr.bf16.mxu0 0
  %80 = vmatpush1.bf16.msra.mxu0 0
  %81 = vmatprep.subr.bf16.mxu0 0
  %82 = vmatpush1.bf16.msra.mxu0 0
  %83 = vmatprep.subr.bf16.mxu0 0
  %84 = vmatpush1.bf16.msra.mxu0 0
  %85 = vmatprep.subr.bf16.mxu0 0
  %86 = vmatpush1.bf16.msra.mxu0 0
  %87 = vmatprep.subr.bf16.mxu0 0
  %88 = vmatpush1.bf16.msra.mxu0 %v46
  %89 = vmatprep.subr.bf16.mxu0 0
  %90 = vmatpush1.bf16.msra.mxu0 %v45
  %91 = vmatprep.subr.bf16.mxu0 0
  %92 = vmatpush2.bf16.msra.mxu0 0
  %93 = vmatprep.subr.bf16.mxu0 0
  %94 = vmatpush2.bf16.msra.mxu0 0
  %95 = vmatprep.subr.bf16.mxu0 0
  %96 = vmatpush2.bf16.msra.mxu0 0
  %97 = vmatprep.subr.bf16.mxu0 0
  %98 = vmatpush2.bf16.msra.mxu0 0
  %99 = vmatprep.subr.bf16.mxu0 0
  %100 = vmatpush2.bf16.msra.mxu0 0
  %101 = vmatprep.subr.bf16.mxu0 0
  %102 = vmatpush2.bf16.msra.mxu0 0
  %103 = vmatprep.subr.bf16.mxu0 0
  %104 = vmatpush2.bf16.msra.mxu0 0
  %105 = vmatprep.subr.bf16.mxu0 0
  %106 = vmatpush2.bf16.msra.mxu0 0
  %107 = vmatprep.mubr.bf16.mxu0 0
  %108 = vmatmul.mubr.bf16.gmra.mxu0 %v49
  %v109 = vpop.f32.mrf.mxu0
  %v110 = vadd.f32 0.0, %v109
  %v111 = vpop.f32.mrf.mxu0
  %v112 = vpop.f32.mrf.mxu0
  %v113 = vadd.f32 0.0, %v112
  %v114 = vpop.f32.mrf.mxu0
  %115 = vmatprep.mubr.bf16.mxu0 0
  %116 = vmatmul.mubr.bf16.gmra.mxu0 %v52
  %v117 = vpop.f32.mrf.mxu0
  %v118 = vadd.f32 0.0, %v117
  %v119 = vpop.f32.mrf.mxu0
  %v120 = vpop.f32.mrf.mxu0
  %v121 = vadd.f32 0.0, %v120
  %v122 = vpop.f32.mrf.mxu0
  %123 = vmatprep.mubr.bf16.mxu0 0
  %124 = vmatmul.mubr.bf16.gmra.mxu0 %v55
  %v125 = vpop.f32.mrf.mxu0
  %v126 = vadd.f32 0.0, %v125
  %v127 = vpop.f32.mrf.mxu0
  %v128 = vpop.f32.mrf.mxu0
  %v129 = vadd.f32 0.0, %v128
  %v130 = vpop.f32.mrf.mxu0
  %131 = vmatprep.mubr.bf16.mxu0 0
  %132 = vmatmul.mubr.bf16.gmra.mxu0 %v58
  %v133 = vpop.f32.mrf.mxu0
  %v134 = vadd.f32 0.0, %v133
  %v135 = vpop.f32.mrf.mxu0
  %v136 = vpop.f32.mrf.mxu0
  %v137 = vadd.f32 0.0, %v136
  %v138 = vpop.f32.mrf.mxu0
  %139 = vmatprep.mubr.bf16.mxu0 0
  %140 = vmatmul.mubr.bf16.gmra.mxu0 %v61
  %v141 = vpop.f32.mrf.mxu0
  %v142 = vadd.f32 0.0, %v141
  %v143 = vpop.f32.mrf.mxu0
  %v144 = vpop.f32.mrf.mxu0
  %v145 = vadd.f32 0.0, %v144
  %v146 = vpop.f32.mrf.mxu0
  %147 = vmatprep.mubr.bf16.mxu0 0
  %148 = vmatmul.mubr.bf16.gmra.mxu0 %v64
  %v149 = vpop.f32.mrf.mxu0
  %v150 = vadd.f32 0.0, %v149
  %v151 = vpop.f32.mrf.mxu0
  %v152 = vpop.f32.mrf.mxu0
  %v153 = vadd.f32 0.0, %v152
  %v154 = vpop.f32.mrf.mxu0
  %155 = vmatprep.mubr.bf16.mxu0 0
  %156 = vmatmul.mubr.bf16.gmra.mxu0 %v67
  %v157 = vpop.f32.mrf.mxu0
  %v158 = vadd.f32 0.0, %v157
  %v159 = vpop.f32.mrf.mxu0
  %v160 = vpop.f32.mrf.mxu0
  %v161 = vadd.f32 0.0, %v160
  %v162 = vpop.f32.mrf.mxu0
  %163 = vmatprep.mubr.bf16.mxu0 0
  %164 = vmatmul.mubr.bf16.gmra.mxu0 %v70
  %v165 = vpop.f32.mrf.mxu0
  %v166 = vadd.f32 0.0, %v165
  %v167 = vpop.f32.mrf.mxu0
  %v168 = vpop.f32.mrf.mxu0
  %v169 = vadd.f32 0.0, %v168
  %v170 = vpop.f32.mrf.mxu0
  %171 = vmatprep.mubr.bf16.mxu0 0
  %172 = vmatmul.mubr.bf16.gmra.mxu0 %v73
  %v173 = vpop.f32.mrf.mxu0
  %v174 = vadd.f32 0.0, %v173
  %v175 = vpop.f32.mrf.mxu0
  %v176 = vpop.f32.mrf.mxu0
  %v177 = vpop.f32.mrf.mxu0
  %178 = vdwg.mxu0
  %v179 = vld [vmem:[%s2] sm:$0x1]
  %v181 = vlaneseq
  %v182 = vshrl.u32 %v181, 7
  %v183 = vsub.s32 0, %v182
  %v184 = vrot.slane %v179, %v183
  %v186 = vmul.f32 %v110, %v184
  %v187 = vmul.f32 %v113, %v184
  %v188 = vmul.f32 %v118, %v184
  %v189 = vmul.f32 %v121, %v184
  %v190 = vmul.f32 %v126, %v184
  %v191 = vmul.f32 %v129, %v184
  %v192 = vmul.f32 %v134, %v184
  %v193 = vmul.f32 %v137, %v184
  %v194 = vmul.f32 %v142, %v184
  %v195 = vmul.f32 %v145, %v184
  %v196 = vmul.f32 %v150, %v184
  %v197 = vmul.f32 %v153, %v184
  %v198 = vmul.f32 %v158, %v184
  %v199 = vmul.f32 %v161, %v184
  %v200 = vmul.f32 %v166, %v184
  %v201 = vmul.f32 %v169, %v184
  %v202 = vmul.f32 %v174, %v184
  %v203 = vld [vmem:[%s3] sm:$0x1]
  %v205 = vlaneseq
  %v206 = vshrl.u32 %v205, 7
  %v207 = vsub.s32 0, %v206
  %v208 = vrot.slane %v203, %v207
  %v210 = vadd.f32 %v186, %v208
  %v211 = vadd.f32 %v187, %v208
  %v212 = vadd.f32 %v188, %v208
  %v213 = vadd.f32 %v189, %v208
  %v214 = vadd.f32 %v190, %v208
  %v215 = vadd.f32 %v191, %v208
  %v216 = vadd.f32 %v192, %v208
  %v217 = vadd.f32 %v193, %v208
  %v218 = vadd.f32 %v194, %v208
  %v219 = vadd.f32 %v195, %v208
  %v220 = vadd.f32 %v196, %v208
  %v221 = vadd.f32 %v197, %v208
  %v222 = vadd.f32 %v198, %v208
  %v223 = vadd.f32 %v199, %v208
  %v224 = vadd.f32 %v200, %v208
  %v225 = vadd.f32 %v201, %v208
  %v226 = vadd.f32 %v202, %v208
  %v227 = vpack.c.bf16 %v211, %v210
  %v228 = vpack.c.bf16 %v213, %v212
  %v229 = vpack.c.bf16 %v215, %v214
  %v230 = vpack.c.bf16 %v217, %v216
  %v231 = vpack.c.bf16 %v219, %v218
  %v232 = vpack.c.bf16 %v221, %v220
  %v233 = vpack.c.bf16 %v223, %v222
  %v234 = vpack.c.bf16 %v225, %v224
  %v235 = vpack.c.bf16 %v226, %v226
  %v245 = vunpack.c.l.b16 %v227
  %v246 = vunpack.c.h.b16 %v227
  %v247 = vunpack.c.l.b16 %v228
  %v248 = vunpack.c.h.b16 %v228
  %v249 = vunpack.c.l.b16 %v229
  %v250 = vunpack.c.h.b16 %v229
  %v251 = vunpack.c.l.b16 %v230
  %v252 = vunpack.c.h.b16 %v230
  %v253 = vunpack.c.l.b16 %v231
  %v254 = vunpack.c.h.b16 %v231
  %v255 = vunpack.c.l.b16 %v232
  %v256 = vunpack.c.h.b16 %v232
  %v257 = vunpack.c.l.b16 %v233
  %v258 = vunpack.c.h.b16 %v233
  %v259 = vunpack.c.l.b16 %v234
  %v260 = vunpack.c.h.b16 %v234
  %v261 = vunpack.c.l.b16 %v235
  %v262 = vpack.c.b16 %v245, %v245
  %v263 = vpack.c.b16 %v246, %v246
  %v264 = vpack.c.b16 %v247, %v247
  %v265 = vpack.c.b16 %v248, %v248
  %v266 = vpack.c.b16 %v249, %v249
  %v267 = vpack.c.b16 %v250, %v250
  %v268 = vpack.c.b16 %v251, %v251
  %v269 = vpack.c.b16 %v252, %v252
  %v270 = vpack.c.b16 %v253, %v253
  %v271 = vpack.c.b16 %v254, %v254
  %v272 = vpack.c.b16 %v255, %v255
  %v273 = vpack.c.b16 %v256, %v256
  %v274 = vpack.c.b16 %v257, %v257
  %v275 = vpack.c.b16 %v258, %v258
  %v276 = vpack.c.b16 %v259, %v259
  %v277 = vpack.c.b16 %v260, %v260
  %v278 = vpack.c.b16 %v261, %v261
  %vm296 = vcmask 781312
  %297 = vst.msk [vmem:[%s4] sm:$0xf] %vm296, %v262
  %298 = vst.msk [vmem:[%s4 + $0x4] sm:$0xf] %vm296, %v263
  %299 = vst.msk [vmem:[%s4 + $0x8] sm:$0xf] %vm296, %v264
  %300 = vst.msk [vmem:[%s4 + $0xc] sm:$0xf] %vm296, %v265
  %301 = vst.msk [vmem:[%s4 + $0x10] sm:$0xf] %vm296, %v266
  %302 = vst.msk [vmem:[%s4 + $0x14] sm:$0xf] %vm296, %v267
  %303 = vst.msk [vmem:[%s4 + $0x18] sm:$0xf] %vm296, %v268
  %304 = vst.msk [vmem:[%s4 + $0x1c] sm:$0xf] %vm296, %v269
  %305 = vst.msk [vmem:[%s4 + $0x20] sm:$0xf] %vm296, %v270
  %306 = vst.msk [vmem:[%s4 + $0x24] sm:$0xf] %vm296, %v271
  %307 = vst.msk [vmem:[%s4 + $0x28] sm:$0xf] %vm296, %v272
  %308 = vst.msk [vmem:[%s4 + $0x2c] sm:$0xf] %vm296, %v273
  %309 = vst.msk [vmem:[%s4 + $0x30] sm:$0xf] %vm296, %v274
  %310 = vst.msk [vmem:[%s4 + $0x34] sm:$0xf] %vm296, %v275
  %311 = vst.msk [vmem:[%s4 + $0x38] sm:$0xf] %vm296, %v276
  %312 = vst.msk [vmem:[%s4 + $0x3c] sm:$0xf] %vm296, %v277
  %vm313 = vcmask 779264
  %314 = vst.msk [vmem:[%s4 + $0x40] sm:$0x3] %vm313, %v278
  // Predicated region
  $region18: #{q_attention_forward.3} parent=0 // pred_check
    _
  $region19: #{q_attention_forward.3} parent=0 // pred_check_branch
    %316 = sbr.rel (0) target = $region21
  $region20: #{q_attention_forward.3} parent=0 // pred_region
    _
  $region21: #{q_attention_forward.3} parent=0 // pred_fallthru
    _
  // Predicated region
  $region22: #{q_attention_forward.3} parent=0 // pred_check
    _
  $region23: #{q_attention_forward.3} parent=0 // pred_check_branch
    %318 = sbr.rel (0) target = $region25
  $region24: #{q_attention_forward.3} parent=0 // pred_region
    _
  $region25: #{q_attention_forward.3} parent=0 // pred_fallthru
    _

// kernel: q_attention_forward.5
$region0: #{q_attention_forward.5}
  #allocation0 [shape = 'u32[]', space=smem, size = 0x4, offset = 0x4, fixed_abs, tag = 'smem constant byte address 0x4 - core index']
  #allocation1 [shape = 'u32[144,128]{1,0:T(1,128)}', space=vmem, size = 0x12000, scoped, tag = 'internal scratch']
  %s0 = inlined_call_operand.vmem [shape: bf16[132,32], index: 0, kind: input, shape index: {}]
  %s1 = inlined_call_operand.vmem [shape: s8[32,32], index: 1, kind: input, shape index: {}]
  %s2 = inlined_call_operand.vmem [shape: f32[1,32], index: 2, kind: input, shape index: {}]
  %s3 = inlined_call_operand.vmem [shape: f32[1,32], index: 3, kind: input, shape index: {}]
  %s4 = inlined_call_operand.vmem [shape: f32[132,32], index: 4, kind: output, shape index: {}]
  %s5 = sld [smem:[#allocation0]]
  $region26: #{q_attention_forward.5} parent=0
    _
  %s7 = ssub.s32 1, %s5
  %s8 = scalar_select 0, %s7, %s5
  // Predicated region
  $region2: #{q_attention_forward.5} parent=0 // pred_check
    _
  $region3: #{q_attention_forward.5} parent=0 // pred_check_branch
    %10 = sbr.rel (0) target = $region5
  $region4: #{q_attention_forward.5} parent=0 // pred_region
    _
  $region5: #{q_attention_forward.5} parent=0 // pred_fallthru
    _
  // Predicated region
  $region6: #{q_attention_forward.5} parent=0 // pred_check
    _
  $region7: #{q_attention_forward.5} parent=0 // pred_check_branch
    %12 = sbr.rel (0) target = $region9
  $region8: #{q_attention_forward.5} parent=0 // pred_region
    _
  $region9: #{q_attention_forward.5} parent=0 // pred_fallthru
    _
  // Predicated region
  $region10: #{q_attention_forward.5} parent=0 // pred_check
    _
  $region11: #{q_attention_forward.5} parent=0 // pred_check_branch
    %14 = sbr.rel (0) target = $region13
  $region12: #{q_attention_forward.5} parent=0 // pred_region
    _
  $region13: #{q_attention_forward.5} parent=0 // pred_fallthru
    _
  // Predicated region
  $region14: #{q_attention_forward.5} parent=0 // pred_check
    _
  $region15: #{q_attention_forward.5} parent=0 // pred_check_branch
    %16 = sbr.rel (0) target = $region17
  $region16: #{q_attention_forward.5} parent=0 // pred_region
    _
  $region17: #{q_attention_forward.5} parent=0 // pred_fallthru
    _
  %v18 = vld [vmem:[%s0] sm:$0xf]
  %v19 = vld [vmem:[%s0 + $0x4] sm:$0xf]
  %v20 = vld [vmem:[%s0 + $0x8] sm:$0xf]
  %v21 = vld [vmem:[%s0 + $0xc] sm:$0xf]
  %v22 = vld [vmem:[%s0 + $0x10] sm:$0xf]
  %v23 = vld [vmem:[%s0 + $0x14] sm:$0xf]
  %v24 = vld [vmem:[%s0 + $0x18] sm:$0xf]
  %v25 = vld [vmem:[%s0 + $0x1c] sm:$0xf]
  %v26 = vld [vmem:[%s0 + $0x20] sm:$0xf]
  %v27 = vld [vmem:[%s0 + $0x24] sm:$0xf]
  %v28 = vld [vmem:[%s0 + $0x28] sm:$0xf]
  %v29 = vld [vmem:[%s0 + $0x2c] sm:$0xf]
  %v30 = vld [vmem:[%s0 + $0x30] sm:$0xf]
  %v31 = vld [vmem:[%s0 + $0x34] sm:$0xf]
  %v32 = vld [vmem:[%s0 + $0x38] sm:$0xf]
  %v33 = vld [vmem:[%s0 + $0x3c] sm:$0xf]
  %v34 = vld [vmem:[%s0 + $0x40] sm:$0x3]
  %v35 = vld [vmem:[%s1] sm:$0xff]
  %v36 = vunpack.c.l.s8.bf16 %v35
  %v37 = vunpack.c.h.s8.bf16 %v35
  %v55 = vunpack.c.l.b16 %v18
  %v56 = vunpack.c.l.b16 %v19
  %v57 = vunpack.c.l.b16 %v20
  %v58 = vunpack.c.l.b16 %v21
  %v59 = vunpack.c.l.b16 %v22
  %v60 = vunpack.c.l.b16 %v23
  %v61 = vunpack.c.l.b16 %v24
  %v62 = vunpack.c.l.b16 %v25
  %v63 = vunpack.c.l.b16 %v26
  %v64 = vunpack.c.l.b16 %v27
  %v65 = vunpack.c.l.b16 %v28
  %v66 = vunpack.c.l.b16 %v29
  %v67 = vunpack.c.l.b16 %v30
  %v68 = vunpack.c.l.b16 %v31
  %v69 = vunpack.c.l.b16 %v32
  %v70 = vunpack.c.l.b16 %v33
  %v71 = vunpack.c.l.b16 %v34
  %v72 = vpack.c.b16 %v56, %v55
  %v73 = vpack.c.b16 %v58, %v57
  %v74 = vpack.c.b16 %v60, %v59
  %v75 = vpack.c.b16 %v62, %v61
  %v76 = vpack.c.b16 %v64, %v63
  %v77 = vpack.c.b16 %v66, %v65
  %v78 = vpack.c.b16 %v68, %v67
  %v79 = vpack.c.b16 %v70, %v69
  %v80 = vpack.c.b16 %v71, %v71
  %vm81 = vcmask 261120
  %v83 = vsel %vm81, %v72, 0
  %v86 = vsel %vm81, %v73, 0
  %v89 = vsel %vm81, %v74, 0
  %v92 = vsel %vm81, %v75, 0
  %v95 = vsel %vm81, %v76, 0
  %v98 = vsel %vm81, %v77, 0
  %v101 = vsel %vm81, %v78, 0
  %v104 = vsel %vm81, %v79, 0
  %v107 = vsel %vm81, %v80, 0
  %109 = vmatprep.subr.bf16.mxu0 0
  %110 = vmatpush1.bf16.msra.mxu0 0
  %111 = vmatprep.subr.bf16.mxu0 0
  %112 = vmatpush1.bf16.msra.mxu0 0
  %113 = vmatprep.subr.bf16.mxu0 0
  %114 = vmatpush1.bf16.msra.mxu0 0
  %115 = vmatprep.subr.bf16.mxu0 0
  %116 = vmatpush1.bf16.msra.mxu0 0
  %117 = vmatprep.subr.bf16.mxu0 0
  %118 = vmatpush1.bf16.msra.mxu0 0
  %119 = vmatprep.subr.bf16.mxu0 0
  %120 = vmatpush1.bf16.msra.mxu0 0
  %121 = vmatprep.subr.bf16.mxu0 0
  %122 = vmatpush1.bf16.msra.mxu0 %v37
  %123 = vmatprep.subr.bf16.mxu0 0
  %124 = vmatpush1.bf16.msra.mxu0 %v36
  %125 = vmatprep.subr.bf16.mxu0 0
  %126 = vmatpush2.bf16.msra.mxu0 0
  %127 = vmatprep.subr.bf16.mxu0 0
  %128 = vmatpush2.bf16.msra.mxu0 0
  %129 = vmatprep.subr.bf16.mxu0 0
  %130 = vmatpush2.bf16.msra.mxu0 0
  %131 = vmatprep.subr.bf16.mxu0 0
  %132 = vmatpush2.bf16.msra.mxu0 0
  %133 = vmatprep.subr.bf16.mxu0 0
  %134 = vmatpush2.bf16.msra.mxu0 0
  %135 = vmatprep.subr.bf16.mxu0 0
  %136 = vmatpush2.bf16.msra.mxu0 0
  %137 = vmatprep.subr.bf16.mxu0 0
  %138 = vmatpush2.bf16.msra.mxu0 0
  %139 = vmatprep.subr.bf16.mxu0 0
  %140 = vmatpush2.bf16.msra.mxu0 0
  %141 = vmatprep.mubr.bf16.mxu0 0
  %142 = vmatmul.mubr.bf16.gmra.mxu0 %v83
  %v143 = vpop.f32.mrf.mxu0
  %v144 = vadd.f32 0.0, %v143
  %v145 = vpop.f32.mrf.mxu0
  %v146 = vpop.f32.mrf.mxu0
  %v147 = vadd.f32 0.0, %v146
  %v148 = vpop.f32.mrf.mxu0
  %149 = vmatprep.mubr.bf16.mxu0 0
  %150 = vmatmul.mubr.bf16.gmra.mxu0 %v86
  %v151 = vpop.f32.mrf.mxu0
  %v152 = vadd.f32 0.0, %v151
  %v153 = vpop.f32.mrf.mxu0
  %v154 = vpop.f32.mrf.mxu0
  %v155 = vadd.f32 0.0, %v154
  %v156 = vpop.f32.mrf.mxu0
  %157 = vmatprep.mubr.bf16.mxu0 0
  %158 = vmatmul.mubr.bf16.gmra.mxu0 %v89
  %v159 = vpop.f32.mrf.mxu0
  %v160 = vadd.f32 0.0, %v159
  %v161 = vpop.f32.mrf.mxu0
  %v162 = vpop.f32.mrf.mxu0
  %v163 = vadd.f32 0.0, %v162
  %v164 = vpop.f32.mrf.mxu0
  %165 = vmatprep.mubr.bf16.mxu0 0
  %166 = vmatmul.mubr.bf16.gmra.mxu0 %v92
  %v167 = vpop.f32.mrf.mxu0
  %v168 = vadd.f32 0.0, %v167
  %v169 = vpop.f32.mrf.mxu0
  %v170 = vpop.f32.mrf.mxu0
  %v171 = vadd.f32 0.0, %v170
  %v172 = vpop.f32.mrf.mxu0
  %173 = vmatprep.mubr.bf16.mxu0 0
  %174 = vmatmul.mubr.bf16.gmra.mxu0 %v95
  %v175 = vpop.f32.mrf.mxu0
  %v176 = vadd.f32 0.0, %v175
  %v177 = vpop.f32.mrf.mxu0
  %v178 = vpop.f32.mrf.mxu0
  %v179 = vadd.f32 0.0, %v178
  %v180 = vpop.f32.mrf.mxu0
  %181 = vmatprep.mubr.bf16.mxu0 0
  %182 = vmatmul.mubr.bf16.gmra.mxu0 %v98
  %v183 = vpop.f32.mrf.mxu0
  %v184 = vadd.f32 0.0, %v183
  %v185 = vpop.f32.mrf.mxu0
  %v186 = vpop.f32.mrf.mxu0
  %v187 = vadd.f32 0.0, %v186
  %v188 = vpop.f32.mrf.mxu0
  %189 = vmatprep.mubr.bf16.mxu0 0
  %190 = vmatmul.mubr.bf16.gmra.mxu0 %v101
  %v191 = vpop.f32.mrf.mxu0
  %v192 = vadd.f32 0.0, %v191
  %v193 = vpop.f32.mrf.mxu0
  %v194 = vpop.f32.mrf.mxu0
  %v195 = vadd.f32 0.0, %v194
  %v196 = vpop.f32.mrf.mxu0
  %197 = vmatprep.mubr.bf16.mxu0 0
  %198 = vmatmul.mubr.bf16.gmra.mxu0 %v104
  %v199 = vpop.f32.mrf.mxu0
  %v200 = vadd.f32 0.0, %v199
  %v201 = vpop.f32.mrf.mxu0
  %v202 = vpop.f32.mrf.mxu0
  %v203 = vadd.f32 0.0, %v202
  %v204 = vpop.f32.mrf.mxu0
  %205 = vmatprep.mubr.bf16.mxu0 0
  %206 = vmatmul.mubr.bf16.gmra.mxu0 %v107
  %v207 = vpop.f32.mrf.mxu0
  %v208 = vadd.f32 0.0, %v207
  %v209 = vpop.f32.mrf.mxu0
  %v210 = vpop.f32.mrf.mxu0
  %v211 = vpop.f32.mrf.mxu0
  %212 = vdwg.mxu0
  %v213 = vld [vmem:[%s2] sm:$0x1]
  %v215 = vlaneseq
  %v216 = vshrl.u32 %v215, 7
  %v217 = vsub.s32 0, %v216
  %v218 = vrot.slane %v213, %v217
  %v220 = vmul.f32 %v144, %v218
  %v221 = vmul.f32 %v147, %v218
  %v222 = vmul.f32 %v152, %v218
  %v223 = vmul.f32 %v155, %v218
  %v224 = vmul.f32 %v160, %v218
  %v225 = vmul.f32 %v163, %v218
  %v226 = vmul.f32 %v168, %v218
  %v227 = vmul.f32 %v171, %v218
  %v228 = vmul.f32 %v176, %v218
  %v229 = vmul.f32 %v179, %v218
  %v230 = vmul.f32 %v184, %v218
  %v231 = vmul.f32 %v187, %v218
  %v232 = vmul.f32 %v192, %v218
  %v233 = vmul.f32 %v195, %v218
  %v234 = vmul.f32 %v200, %v218
  %v235 = vmul.f32 %v203, %v218
  %v236 = vmul.f32 %v208, %v218
  %v237 = vld [vmem:[%s3] sm:$0x1]
  %v239 = vlaneseq
  %v240 = vshrl.u32 %v239, 7
  %v241 = vsub.s32 0, %v240
  %v242 = vrot.slane %v237, %v241
  %v244 = vadd.f32 %v220, %v242
  %v245 = vadd.f32 %v221, %v242
  %v246 = vadd.f32 %v222, %v242
  %v247 = vadd.f32 %v223, %v242
  %v248 = vadd.f32 %v224, %v242
  %v249 = vadd.f32 %v225, %v242
  %v250 = vadd.f32 %v226, %v242
  %v251 = vadd.f32 %v227, %v242
  %v252 = vadd.f32 %v228, %v242
  %v253 = vadd.f32 %v229, %v242
  %v254 = vadd.f32 %v230, %v242
  %v255 = vadd.f32 %v231, %v242
  %v256 = vadd.f32 %v232, %v242
  %v257 = vadd.f32 %v233, %v242
  %v258 = vadd.f32 %v234, %v242
  %v259 = vadd.f32 %v235, %v242
  %v260 = vadd.f32 %v236, %v242
  %261 = vst.msk [vmem:[%s4] sm:$0xff] %vm81, %v244
  %262 = vst.msk [vmem:[%s4 + $0x8] sm:$0xff] %vm81, %v245
  %263 = vst.msk [vmem:[%s4 + $0x10] sm:$0xff] %vm81, %v246
  %264 = vst.msk [vmem:[%s4 + $0x18] sm:$0xff] %vm81, %v247
  %265 = vst.msk [vmem:[%s4 + $0x20] sm:$0xff] %vm81, %v248
  %266 = vst.msk [vmem:[%s4 + $0x28] sm:$0xff] %vm81, %v249
  %267 = vst.msk [vmem:[%s4 + $0x30] sm:$0xff] %vm81, %v250
  %268 = vst.msk [vmem:[%s4 + $0x38] sm:$0xff] %vm81, %v251
  %269 = vst.msk [vmem:[%s4 + $0x40] sm:$0xff] %vm81, %v252
  %270 = vst.msk [vmem:[%s4 + $0x48] sm:$0xff] %vm81, %v253
  %271 = vst.msk [vmem:[%s4 + $0x50] sm:$0xff] %vm81, %v254
  %272 = vst.msk [vmem:[%s4 + $0x58] sm:$0xff] %vm81, %v255
  %273 = vst.msk [vmem:[%s4 + $0x60] sm:$0xff] %vm81, %v256
  %274 = vst.msk [vmem:[%s4 + $0x68] sm:$0xff] %vm81, %v257
  %275 = vst.msk [vmem:[%s4 + $0x70] sm:$0xff] %vm81, %v258
  %276 = vst.msk [vmem:[%s4 + $0x78] sm:$0xff] %vm81, %v259
  %vm277 = vcmask 257024
  %278 = vst.msk [vmem:[%s4 + $0x80] sm:$0xf] %vm277, %v260
  // Predicated region
  $region18: #{q_attention_forward.5} parent=0 // pred_check
    _
  $region19: #{q_attention_forward.5} parent=0 // pred_check_branch
    %280 = sbr.rel (0) target = $region21
  $region20: #{q_attention_forward.5} parent=0 // pred_region
    _
  $region21: #{q_attention_forward.5} parent=0 // pred_fallthru
    _
  // Predicated region
  $region22: #{q_attention_forward.5} parent=0 // pred_check
    _
  $region23: #{q_attention_forward.5} parent=0 // pred_check_branch
    %282 = sbr.rel (0) target = $region25
  $region24: #{q_attention_forward.5} parent=0 // pred_region
    _
  $region25: #{q_attention_forward.5} parent=0 // pred_fallthru
    _

// kernel: q_attention_forward.4
$region0: #{q_attention_forward.4}
  #allocation0 [shape = 'u32[]', space=smem, size = 0x4, offset = 0x4, fixed_abs, tag = 'smem constant byte address 0x4 - core index']
  #allocation1 [shape = 'u32[144,128]{1,0:T(1,128)}', space=vmem, size = 0x12000, scoped, tag = 'internal scratch']
  %s0 = inlined_call_operand.vmem [shape: bf16[2,66,96], index: 0, kind: input, shape index: {}]
  %s1 = inlined_call_operand.vmem [shape: f32[4,32], index: 1, kind: input, shape index: {}]
  %s2 = inlined_call_operand.vmem [shape: f32[32,4], index: 2, kind: input, shape index: {}]
  %s3 = inlined_call_operand.vmem [shape: f32[4,32], index: 3, kind: input, shape index: {}]
  %s4 = inlined_call_operand.vmem [shape: bf16[2,66,32], index: 4, kind: output, shape index: {}]
  %s5 = sld [smem:[#allocation0]]
  $region49: #{q_attention_forward.4} parent=0
    _
  %s7 = ssub.s32 1, %s5
  %s8 = scalar_select 0, %s7, %s5
  loop: start=0, step=1, limit=4
  $region2: #{q_attention_forward.4} parent=0 // loop_pre_header
    _
  $region3: #{q_attention_forward.4} parent=0 // loop_header
    %s10 = sphi 0, %s14
    %p11 = scmp.ge.s32.totalorder %s10, 4
    %s20 = sphi 0, %s22
    %s23 = sphi 0, %s20
    %s24 = sphi 0, %s23
    %s40 = sphi 0, %s24
    %s44 = sphi 0, %s44
    %s46 = sphi 0, %s44
    %s47 = sphi 0, %s46
    %s61 = sphi 0, %s47
    %s65 = sphi 0, %s65
    %s67 = sphi 0, %s65
    %s68 = sphi 0, %s67
    %s82 = sphi 0, %s68
    %s86 = sphi 0, %s86
    %s88 = sphi 0, %s86
    %s89 = sphi 0, %s88
    %s103 = sphi 0, %s89
    %s109 = sphi 0, %s111
    %s112 = sphi 0, %s109
    %s113 = sphi 0, %s112
    %s129 = sphi 0, %s113
  $region4: #{q_attention_forward.4} parent=0 // loop_header_branch
    %13 = sbr.rel (%p11) target = $region8
  $region5: #{q_attention_forward.4} parent=0 // loop_body
    %s15 = ssub.s32 %s10, 1
    %s16 = ssub.s32 %s10, 2
    %s17 = sadd.s32 %s10, 1
    %s18 = ssub.s32 %s10, %s17
    %p19 = scmp.eq.s32.totalorder %s18, 0
    %s21 = sadd.s32 %s20, 1
    %s22 = scalar_select %p19, %s20, %s21
    %p25 = pneg %p19
    %p26 = scmp.eq.s32.totalorder %s10, 1
    %p27 = por %p25, %p26
    %p28 = scmp.ne.s32.totalorder %s20, %s23
    %p29 = scmp.eq.s32.totalorder %s10, 0
    %p30 = por %p28, %p29
    %p31 = scmp.ne.s32.totalorder %s20, %s23
    %p32 = scmp.eq.s32.totalorder %s15, 1
    %p33 = por %p31, %p32
    %p34 = scmp.ne.s32.totalorder %s23, %s24
    %p35 = scmp.eq.s32.totalorder %s15, 0
    %p36 = por %p34, %p35
    %p37 = scmp.ne.s32.totalorder %s23, %s24
    %p38 = scmp.eq.s32.totalorder %s16, 1
    %p39 = por %p37, %p38
    %p41 = scmp.ne.s32.totalorder %s24, %s40
    %p42 = scmp.eq.s32.totalorder %s16, 0
    %p43 = por %p41, %p42
    %s45 = sadd.s32 %s44, 1
    %p48 = scmp.eq.s32.totalorder %s10, 1
    %p49 = scmp.ne.s32.totalorder %s44, %s46
    %p50 = scmp.eq.s32.totalorder %s10, 0
    %p51 = por %p49, %p50
    %p52 = scmp.ne.s32.totalorder %s44, %s46
    %p53 = scmp.eq.s32.totalorder %s15, 1
    %p54 = por %p52, %p53
    %p55 = scmp.ne.s32.totalorder %s46, %s47
    %p56 = scmp.eq.s32.totalorder %s15, 0
    %p57 = por %p55, %p56
    %p58 = scmp.ne.s32.totalorder %s46, %s47
    %p59 = scmp.eq.s32.totalorder %s16, 1
    %p60 = por %p58, %p59
    %p62 = scmp.ne.s32.totalorder %s47, %s61
    %p63 = scmp.eq.s32.totalorder %s16, 0
    %p64 = por %p62, %p63
    %s66 = sadd.s32 %s65, 1
    %p69 = scmp.eq.s32.totalorder %s10, 1
    %p70 = scmp.ne.s32.totalorder %s65, %s67
    %p71 = scmp.eq.s32.totalorder %s10, 0
    %p72 = por %p70, %p71
    %p73 = scmp.ne.s32.totalorder %s65, %s67
    %p74 = scmp.eq.s32.totalorder %s15, 1
    %p75 = por %p73, %p74
    %p76 = scmp.ne.s32.totalorder %s67, %s68
    %p77 = scmp.eq.s32.totalorder %s15, 0
    %p78 = por %p76, %p77
    %p79 = scmp.ne.s32.totalorder %s67, %s68
    %p80 = scmp.eq.s32.totalorder %s16, 1
    %p81 = por %p79, %p80
    %p83 = scmp.ne.s32.totalorder %s68, %s82
    %p84 = scmp.eq.s32.totalorder %s16, 0
    %p85 = por %p83, %p84
    %s87 = sadd.s32 %s86, 1
    %p90 = scmp.eq.s32.totalorder %s10, 1
    %p91 = scmp.ne.s32.totalorder %s86, %s88
    %p92 = scmp.eq.s32.totalorder %s10, 0
    %p93 = por %p91, %p92
    %p94 = scmp.ne.s32.totalorder %s86, %s88
    %p95 = scmp.eq.s32.totalorder %s15, 1
    %p96 = por %p94, %p95
    %p97 = scmp.ne.s32.totalorder %s88, %s89
    %p98 = scmp.eq.s32.totalorder %s15, 0
    %p99 = por %p97, %p98
    %p100 = scmp.ne.s32.totalorder %s88, %s89
    %p101 = scmp.eq.s32.totalorder %s16, 1
    %p102 = por %p100, %p101
    %p104 = scmp.ne.s32.totalorder %s89, %s103
    %p105 = scmp.eq.s32.totalorder %s16, 0
    %p106 = por %p104, %p105
    %s107 = ssub.s32 %s10, %s17
    %p108 = scmp.eq.s32.totalorder %s107, 0
    %s110 = sadd.s32 %s109, 1
    %s111 = scalar_select %p108, %s109, %s110
    %p114 = pneg %p108
    %p115 = scmp.eq.s32.totalorder %s10, 1
    %p116 = por %p114, %p115
    %p117 = scmp.ne.s32.totalorder %s109, %s112
    %p118 = scmp.eq.s32.totalorder %s10, 0
    %p119 = por %p117, %p118
    %p120 = scmp.ne.s32.totalorder %s109, %s112
    %p121 = scmp.eq.s32.totalorder %s15, 1
    %p122 = por %p120, %p121
    %p123 = scmp.ne.s32.totalorder %s112, %s113
    %p124 = scmp.eq.s32.totalorder %s15, 0
    %p125 = por %p123, %p124
    %p126 = scmp.ne.s32.totalorder %s112, %s113
    %p127 = scmp.eq.s32.totalorder %s16, 1
    %p128 = por %p126, %p127
    %p130 = scmp.ne.s32.totalorder %s113, %s129
    %p131 = scmp.eq.s32.totalorder %s16, 0
    %p132 = por %p130, %p131
    %p133 = scmp.le.s32.totalorder 1, %s10
    %p134 = scmp.lt.s32.totalorder %s10, 3
    %p135 = pnand %p133, %p134
    %p136 = pneg %p135
    // Predicated region
    $region9: #{q_attention_forward.4} parent=5 // pred_check
      _
    $region10: #{q_attention_forward.4} parent=5 // pred_check_branch
      %138 = sbr.rel (%p135) target = $region12
    $region11: #{q_attention_forward.4} parent=5 // pred_region
      %s139 = ssub.s32 %s10, 1
      // Predicated region
      $region13: #{q_attention_forward.4} parent=11 // pred_check
        %p140 = pneg %p57
      $region14: #{q_attention_forward.4} parent=11 // pred_check_branch
        %142 = sbr.rel (%p140) target = $region16
      $region15: #{q_attention_forward.4} parent=11 // pred_region
        _
      $region16: #{q_attention_forward.4} parent=11 // pred_fallthru
        _
      // Predicated region
      $region17: #{q_attention_forward.4} parent=11 // pred_check
        %p143 = pneg %p78
      $region18: #{q_attention_forward.4} parent=11 // pred_check_branch
        %145 = sbr.rel (%p143) target = $region20
      $region19: #{q_attention_forward.4} parent=11 // pred_region
        _
      $region20: #{q_attention_forward.4} parent=11 // pred_fallthru
        _
      // Predicated region
      $region21: #{q_attention_forward.4} parent=11 // pred_check
        %p146 = pneg %p99
      $region22: #{q_attention_forward.4} parent=11 // pred_check_branch
        %148 = sbr.rel (%p146) target = $region24
      $region23: #{q_attention_forward.4} parent=11 // pred_region
        _
      $region24: #{q_attention_forward.4} parent=11 // pred_fallthru
        _
    $region12: #{q_attention_forward.4} parent=5 // pred_fallthru
      _
    %p149 = scmp.lt.s32.totalorder %s10, 2
    // Predicated region
    $region25: #{q_attention_forward.4} parent=5 // pred_check
      %p150 = pneg %p149
    $region26: #{q_attention_forward.4} parent=5 // pred_check_branch
      %152 = sbr.rel (%p150) target = $region28
    $region27: #{q_attention_forward.4} parent=5 // pred_region
      // Predicated region
      $region29: #{q_attention_forward.4} parent=27 // pred_check
        %p153 = pneg %p30
      $region30: #{q_attention_forward.4} parent=27 // pred_check_branch
        %155 = sbr.rel (%p153) target = $region32
      $region31: #{q_attention_forward.4} parent=27 // pred_region
        %p156 = scmp.lt.s32.totalorder %s10, 1
        %s157 = scalar_select %p156, %s10, 1
        %s158 = smul.addr %s157, 9
        %s159 = smul.addr %s158, 4
        %s160 = scalar_lea.vmem %s0, %s159
      $region32: #{q_attention_forward.4} parent=27 // pred_fallthru
        _
    $region28: #{q_attention_forward.4} parent=5 // pred_fallthru
      _
    %p161 = scmp.le.s32.totalorder 1, %s10
    %p162 = scmp.lt.s32.totalorder %s10, 3
    %p163 = pnand %p161, %p162
    %p164 = pneg %p163
    // Predicated region
    $region33: #{q_attention_forward.4} parent=5 // pred_check
      _
    $region34: #{q_attention_forward.4} parent=5 // pred_check_branch
      %166 = sbr.rel (%p163) target = $region36
    $region35: #{q_attention_forward.4} parent=5 // pred_region
      %s167 = ssub.s32 %s10, 1
      %p168 = scmp.lt.s32.totalorder %s15, 1
      %s169 = scalar_select %p168, %s15, 1
      %s170 = smul.addr %s169, 9
      %s171 = smul.addr %s170, 4
      %s172 = scalar_lea.vmem %s0, %s171
      %p173 = pneg %p36
      %p174 = pneg %p33
      %p175 = pneg %p57
      %p176 = pneg %p54
      %p177 = pneg %p78
      %p178 = pneg %p75
      %p179 = pneg %p99
      %p180 = pneg %p96
      %p181 = pneg %p125
      %p182 = pneg %p122
      %p183 = scmp.lt.s32.totalorder %s15, 1
      %s184 = scalar_select %p183, %s15, 1
      %s185 = smul.addr %s184, 9
      %s186 = smul.addr %s185, 4
      %s187 = scalar_lea.vmem %s4, %s186
      %p188 = scmp.lt.s32.totalorder %s15, 1
      %s189 = scalar_select %p188, %s15, 1
      %s190 = smul.addr %s189, 9
      %s191 = smul.addr %s190, 4
      %s192 = scalar_lea.vmem %s0, %s191
      %p193 = scmp.lt.s32.totalorder %s15, 1
      %s194 = scalar_select %p193, %s15, 1
      %s195 = smul.addr %s194, 9
      %s196 = smul.addr %s195, 4
      %s197 = scalar_lea.vmem %s4, %s196
      %v199 = vld [vmem:[%s192] sm:$0xf]
      %v200 = vld [vmem:[%s192 + $0x4] sm:$0xf]
      %v201 = vld [vmem:[%s192 + $0x8] sm:$0xf]
      %v202 = vld [vmem:[%s192 + $0xc] sm:$0xf]
      %v203 = vld [vmem:[%s192 + $0x10] sm:$0xf]
      %v204 = vld [vmem:[%s192 + $0x14] sm:$0xf]
      %v205 = vld [vmem:[%s192 + $0x18] sm:$0xf]
      %v206 = vld [vmem:[%s192 + $0x1c] sm:$0xf]
      %v207 = vld [vmem:[%s192 + $0x20] sm:$0x1]
      %v208 = vunpack.c.l.bf16 %v199
      %v209 = vunpack.c.l.bf16 %v200
      %v210 = vunpack.c.l.bf16 %v201
      %v211 = vunpack.c.l.bf16 %v202
      %v212 = vunpack.c.l.bf16 %v203
      %v213 = vunpack.c.l.bf16 %v204
      %v214 = vunpack.c.l.bf16 %v205
      %v215 = vunpack.c.l.bf16 %v206
      %v216 = vunpack.c.l.bf16 %v207
      %v217 = vld [vmem:[%s1] sm:$0x1]
      %v218 = vmul.f32 %v217, 0.35355338
      %v219 = vld [vmem:[%s1 + $0x1] sm:$0x1]
      %v220 = vmul.f32 %v219, 0.35355338
      %v221 = vld [vmem:[%s1 + $0x2] sm:$0x1]
      %v222 = vld [vmem:[%s1 + $0x3] sm:$0x1]
      %v223 = vld [vmem:[%s2] sm:$0xff]
      %v224 = vld [vmem:[%s2 + $0x8] sm:$0xff]
      %v225 = vld [vmem:[%s2 + $0x10] sm:$0xff]
      %v226 = vld [vmem:[%s2 + $0x18] sm:$0xff]
      %v227 = vld [vmem:[%s3] sm:$0xf]
      %vm228 = vcmask 261120
      %v230 = vsel %vm228, %v208, 0
      %v233 = vsel %vm228, %v209, 0
      %v236 = vsel %vm228, %v210, 0
      %v239 = vsel %vm228, %v211, 0
      %v242 = vsel %vm228, %v212, 0
      %v245 = vsel %vm228, %v213, 0
      %v248 = vsel %vm228, %v214, 0
      %v251 = vsel %vm228, %v215, 0
      %v254 = vsel %vm228, %v216, 0
      %256 = vmatprep.subr.mxu0 0.0
      %257 = vmatpush1.msra.mxu0 0.0
      %258 = vmatprep.subr.mxu0 0.0
      %259 = vmatpush1.msra.mxu0 0.0
      %260 = vmatprep.subr.mxu0 0.0
      %261 = vmatpush1.msra.mxu0 0.0
      %262 = vmatprep.subr.mxu0 0.0
      %263 = vmatpush1.msra.mxu0 0.0
      %264 = vmatprep.subr.mxu0 0.0
      %265 = vmatpush1.msra.mxu0 0.0
      %266 = vmatprep.subr.mxu0 0.0
      %267 = vmatpush1.msra.mxu0 0.0
      %268 = vmatprep.subr.mxu0 0.0
      %269 = vmatpush1.msra.mxu0 0.0
      %270 = vmatprep.subr.mxu0 0.0
      %271 = vmatpush1.msra.mxu0 0.0
      %272 = vmatprep.subr.mxu0 0.0
      %273 = vmatpush1.msra.mxu0 0.0
      %274 = vmatprep.subr.mxu0 0.0
      %275 = vmatpush1.msra.mxu0 0.0
      %276 = vmatprep.subr.mxu0 0.0
      %277 = vmatpush1.msra.mxu0 0.0
      %278 = vmatprep.subr.mxu0 0.0
      %279 = vmatpush1.msra.mxu0 0.0
      %280 = vmatprep.subr.mxu0 0.0
      %281 = vmatpush1.msra.mxu0 %v226
      %282 = vmatprep.subr.mxu0 0.0
      %283 = vmatpush1.msra.mxu0 %v225
      %284 = vmatprep.subr.mxu0 0.0
      %285 = vmatpush1.msra.mxu0 %v224
      %286 = vmatprep.subr.mxu0 0.0
      %287 = vmatpush1.msra.mxu0 %v223
      %288 = vmatprep.subr.mxu0 0.0
      %289 = vmatpush2.msra.mxu0 0.0
      %290 = vmatprep.subr.mxu0 0.0
      %291 = vmatpush2.msra.mxu0 0.0
      %292 = vmatprep.subr.mxu0 0.0
      %293 = vmatpush2.msra.mxu0 0.0
      %294 = vmatprep.subr.mxu0 0.0
      %295 = vmatpush2.msra.mxu0 0.0
      %296 = vmatprep.subr.mxu0 0.0
      %297 = vmatpush2.msra.mxu0 0.0
      %298 = vmatprep.subr.mxu0 0.0
      %299 = vmatpush2.msra.mxu0 0.0
      %300 = vmatprep.subr.mxu0 0.0
      %301 = vmatpush2.msra.mxu0 0.0
      %302 = vmatprep.subr.mxu0 0.0
      %303 = vmatpush2.msra.mxu0 0.0
      %304 = vmatprep.subr.mxu0 0.0
      %305 = vmatpush2.msra.mxu0 0.0
      %306 = vmatprep.subr.mxu0 0.0
      %307 = vmatpush2.msra.mxu0 0.0
      %308 = vmatprep.subr.mxu0 0.0
      %309 = vmatpush2.msra.mxu0 0.0
      %310 = vmatprep.subr.mxu0 0.0
      %311 = vmatpush2.msra.mxu0 0.0
      %312 = vmatprep.subr.mxu0 0.0
      %313 = vmatpush2.msra.mxu0 0.0
      %314 = vmatprep.subr.mxu0 0.0
      %315 = vmatpush2.msra.mxu0 0.0
      %316 = vmatprep.subr.mxu0 0.0
      %317 = vmatpush2.msra.mxu0 0.0
      %318 = vmatprep.subr.mxu0 0.0
      %319 = vmatpush2.msra.mxu0 0.0
      %320 = vmatprep.mubr.f32.mxu0 0.0
      %321 = vmatmul.mubr.f32.gmra.mxu0 %v230
      %v322 = vpop.f32.mrf.mxu0
      %v323 = vadd.f32 0.0, %v322
      %v324 = vpop.f32.mrf.mxu0
      %325 = vmatprep.mubr.f32.mxu0 0.0
      %326 = vmatmul.mubr.f32.gmra.mxu0 %v233
      %v327 = vpop.f32.mrf.mxu0
      %v328 = vadd.f32 0.0, %v327
      %v329 = vpop.f32.mrf.mxu0
      %330 = vmatprep.mubr.f32.mxu0 0.0
      %331 = vmatmul.mubr.f32.gmra.mxu0 %v236
      %v332 = vpop.f32.mrf.mxu0
      %v333 = vadd.f32 0.0, %v332
      %v334 = vpop.f32.mrf.mxu0
      %335 = vmatprep.mubr.f32.mxu0 0.0
      %336 = vmatmul.mubr.f32.gmra.mxu0 %v239
      %v337 = vpop.f32.mrf.mxu0
      %v338 = vadd.f32 0.0, %v337
      %v339 = vpop.f32.mrf.mxu0
      %340 = vmatprep.mubr.f32.mxu0 0.0
      %341 = vmatmul.mubr.f32.gmra.mxu0 %v242
      %v342 = vpop.f32.mrf.mxu0
      %v343 = vadd.f32 0.0, %v342
      %v344 = vpop.f32.mrf.mxu0
      %345 = vmatprep.mubr.f32.mxu0 0.0
      %346 = vmatmul.mubr.f32.gmra.mxu0 %v245
      %v347 = vpop.f32.mrf.mxu0
      %v348 = vadd.f32 0.0, %v347
      %v349 = vpop.f32.mrf.mxu0
      %350 = vmatprep.mubr.f32.mxu0 0.0
      %351 = vmatmul.mubr.f32.gmra.mxu0 %v248
      %v352 = vpop.f32.mrf.mxu0
      %v353 = vadd.f32 0.0, %v352
      %v354 = vpop.f32.mrf.mxu0
      %355 = vmatprep.mubr.f32.mxu0 0.0
      %356 = vmatmul.mubr.f32.gmra.mxu0 %v251
      %v357 = vpop.f32.mrf.mxu0
      %v358 = vadd.f32 0.0, %v357
      %v359 = vpop.f32.mrf.mxu0
      %360 = vmatprep.mubr.f32.mxu0 0.0
      %361 = vmatmul.mubr.f32.gmra.mxu0 %v254
      %v362 = vpop.f32.mrf.mxu0
      %v363 = vadd.f32 0.0, %v362
      %v364 = vpop.f32.mrf.mxu0
      %365 = vdwg.mxu0
      %vm366 = vcmask 31744
      %v368 = vsel %vm366, %v323, 0
      %v371 = vsel %vm366, %v328, 0
      %v374 = vsel %vm366, %v333, 0
      %v377 = vsel %vm366, %v338, 0
      %v380 = vsel %vm366, %v343, 0
      %v383 = vsel %vm366, %v348, 0
      %v386 = vsel %vm366, %v353, 0
      %v389 = vsel %vm366, %v358, 0
      %v392 = vsel %vm366, %v363, 0
      %vm394 = vcmask 1043456
      %v396 = vsel %vm394, %v227, 0
      %398 = vmatprep.subr.mxu0 0.0
      %399 = vmatpush1.msra.mxu0 0.0
      %400 = vmatprep.subr.mxu0 0.0
      %401 = vmatpush1.msra.mxu0 0.0
      %402 = vmatprep.subr.mxu0 0.0
      %403 = vmatpush1.msra.mxu0 0.0
      %404 = vmatprep.subr.mxu0 0.0
      %405 = vmatpush1.msra.mxu0 0.0
      %406 = vmatprep.subr.mxu0 0.0
      %407 = vmatpush1.msra.mxu0 0.0
      %408 = vmatprep.subr.mxu0 0.0
      %409 = vmatpush1.msra.mxu0 0.0
      %410 = vmatprep.subr.mxu0 0.0
      %411 = vmatpush1.msra.mxu0 0.0
      %412 = vmatprep.subr.mxu0 0.0
      %413 = vmatpush1.msra.mxu0 0.0
      %414 = vmatprep.subr.mxu0 0.0
      %415 = vmatpush1.msra.mxu0 0.0
      %416 = vmatprep.subr.mxu0 0.0
      %417 = vmatpush1.msra.mxu0 0.0
      %418 = vmatprep.subr.mxu0 0.0
      %419 = vmatpush1.msra.mxu0 0.0
      %420 = vmatprep.subr.mxu0 0.0
      %421 = vmatpush1.msra.mxu0 0.0
      %422 = vmatprep.subr.mxu0 0.0
      %423 = vmatpush1.msra.mxu0 0.0
      %424 = vmatprep.subr.mxu0 0.0
      %425 = vmatpush1.msra.mxu0 0.0
      %426 = vmatprep.subr.mxu0 0.0
      %427 = vmatpush1.msra.mxu0 0.0
      %428 = vmatprep.subr.mxu0 0.0
      %429 = vmatpush1.msra.mxu0 %v396
      %430 = vmatprep.subr.mxu0 0.0
      %431 = vmatpush2.msra.mxu0 0.0
      %432 = vmatprep.subr.mxu0 0.0
      %433 = vmatpush2.msra.mxu0 0.0
      %434 = vmatprep.subr.mxu0 0.0
      %435 = vmatpush2.msra.mxu0 0.0
      %436 = vmatprep.subr.mxu0 0.0
      %437 = vmatpush2.msra.mxu0 0.0
      %438 = vmatprep.subr.mxu0 0.0
      %439 = vmatpush2.msra.mxu0 0.0
      %440 = vmatprep.subr.mxu0 0.0
      %441 = vmatpush2.msra.mxu0 0.0
      %442 = vmatprep.subr.mxu0 0.0
      %443 = vmatpush2.msra.mxu0 0.0
      %444 = vmatprep.subr.mxu0 0.0
      %445 = vmatpush2.msra.mxu0 0.0
      %446 = vmatprep.subr.mxu0 0.0
      %447 = vmatpush2.msra.mxu0 0.0
      %448 = vmatprep.subr.mxu0 0.0
      %449 = vmatpush2.msra.mxu0 0.0
      %450 = vmatprep.subr.mxu0 0.0
      %451 = vmatpush2.msra.mxu0 0.0
      %452 = vmatprep.subr.mxu0 0.0
      %453 = vmatpush2.msra.mxu0 0.0
      %454 = vmatprep.subr.mxu0 0.0
      %455 = vmatpush2.msra.mxu0 0.0
      %456 = vmatprep.subr.mxu0 0.0
      %457 = vmatpush2.msra.mxu0 0.0
      %458 = vmatprep.subr.mxu0 0.0
      %459 = vmatpush2.msra.mxu0 0.0
      %460 = vmatprep.subr.mxu0 0.0
      %461 = vmatpush2.msra.mxu0 0.0
      %462 = vmatprep.mubr.f32.mxu0 0.0
      %463 = vmatmul.mubr.f32.gmra.mxu0 %v368
      %v464 = vpop.f32.mrf.mxu0
      %v465 = vadd.f32 0.0, %v464
      %v466 = vpop.f32.mrf.mxu0
      %467 = vmatprep.mubr.f32.mxu0 0.0
      %468 = vmatmul.mubr.f32.gmra.mxu0 %v371
      %v469 = vpop.f32.mrf.mxu0
      %v470 = vadd.f32 0.0, %v469
      %v471 = vpop.f32.mrf.mxu0
      %472 = vmatprep.mubr.f32.mxu0 0.0
      %473 = vmatmul.mubr.f32.gmra.mxu0 %v374
      %v474 = vpop.f32.mrf.mxu0
      %v475 = vadd.f32 0.0, %v474
      %v476 = vpop.f32.mrf.mxu0
      %477 = vmatprep.mubr.f32.mxu0 0.0
      %478 = vmatmul.mubr.f32.gmra.mxu0 %v377
      %v479 = vpop.f32.mrf.mxu0
      %v480 = vadd.f32 0.0, %v479
      %v481 = vpop.f32.mrf.mxu0
      %482 = vmatprep.mubr.f32.mxu0 0.0
      %483 = vmatmul.mubr.f32.gmra.mxu0 %v380
      %v484 = vpop.f32.mrf.mxu0
      %v485 = vadd.f32 0.0, %v484
      %v486 = vpop.f32.mrf.mxu0
      %487 = vmatprep.mubr.f32.mxu0 0.0
      %488 = vmatmul.mubr.f32.gmra.mxu0 %v383
      %v489 = vpop.f32.mrf.mxu0
      %v490 = vadd.f32 0.0, %v489
      %v491 = vpop.f32.mrf.mxu0
      %492 = vmatprep.mubr.f32.mxu0 0.0
      %493 = vmatmul.mubr.f32.gmra.mxu0 %v386
      %v494 = vpop.f32.mrf.mxu0
      %v495 = vadd.f32 0.0, %v494
      %v496 = vpop.f32.mrf.mxu0
      %497 = vmatprep.mubr.f32.mxu0 0.0
      %498 = vmatmul.mubr.f32.gmra.mxu0 %v389
      %v499 = vpop.f32.mrf.mxu0
      %v500 = vadd.f32 0.0, %v499
      %v501 = vpop.f32.mrf.mxu0
      %502 = vmatprep.mubr.f32.mxu0 0.0
      %503 = vmatmul.mubr.f32.gmra.mxu0 %v392
      %v504 = vpop.f32.mrf.mxu0
      %v505 = vadd.f32 0.0, %v504
      %v506 = vpop.f32.mrf.mxu0
      %507 = vdwg.mxu0
      %v508 = vsub.f32 %v208, %v465
      %v509 = vsub.f32 %v209, %v470
      %v510 = vsub.f32 %v210, %v475
      %v511 = vsub.f32 %v211, %v480
      %v512 = vsub.f32 %v212, %v485
      %v513 = vsub.f32 %v213, %v490
      %v514 = vsub.f32 %v214, %v495
      %v515 = vsub.f32 %v215, %v500
      %v516 = vsub.f32 %v216, %v505
      %v517 = vmul.f32 %v508, %v508
      %v518 = vmul.f32 %v509, %v509
      %v519 = vmul.f32 %v510, %v510
      %v520 = vmul.f32 %v511, %v511
      %v521 = vmul.f32 %v512, %v512
      %v522 = vmul.f32 %v513, %v513
      %v523 = vmul.f32 %v514, %v514
      %v524 = vmul.f32 %v515, %v515
      %v525 = vmul.f32 %v516, %v516
      %v527 = vsel %vm228, %v517, 0
      %v530 = vsel %vm228, %v518, 0
      %v533 = vsel %vm228, %v519, 0
      %v536 = vsel %vm228, %v520, 0
      %v539 = vsel %vm228, %v521, 0
      %v542 = vsel %vm228, %v522, 0
      %v545 = vsel %vm228, %v523, 0
      %v548 = vsel %vm228, %v524, 0
      %v551 = vsel %vm228, %v525, 0
      %553 = vmatprep.subr.mxu0 0.0
      %554 = vmatpush1.msra.mxu0 0.0
      %555 = vmatprep.subr.mxu0 0.0
      %556 = vmatpush1.msra.mxu0 0.0
      %557 = vmatprep.subr.mxu0 0.0
      %558 = vmatpush1.msra.mxu0 0.0
      %559 = vmatprep.subr.mxu0 0.0
      %560 = vmatpush1.msra.mxu0 0.0
      %561 = vmatprep.subr.mxu0 0.0
      %562 = vmatpush1.msra.mxu0 0.0
      %563 = vmatprep.subr.mxu0 0.0
      %564 = vmatpush1.msra.mxu0 0.0
      %565 = vmatprep.subr.mxu0 0.0
      %566 = vmatpush1.msra.mxu0 0.0
      %567 = vmatprep.subr.mxu0 0.0
      %568 = vmatpush1.msra.mxu0 0.0
      %569 = vmatprep.subr.mxu0 0.0
      %570 = vmatpush1.msra.mxu0 0.0
      %571 = vmatprep.subr.mxu0 0.0
      %572 = vmatpush1.msra.mxu0 0.0
      %573 = vmatprep.subr.mxu0 0.0
      %574 = vmatpush1.msra.mxu0 0.0
      %575 = vmatprep.subr.mxu0 0.0
      %576 = vmatpush1.msra.mxu0 0.0
      %577 = vmatprep.subr.mxu0 0.0
      %578 = vmatpush1.msra.mxu0 %v226
      %579 = vmatprep.subr.mxu0 0.0
      %580 = vmatpush1.msra.mxu0 %v225
      %581 = vmatprep.subr.mxu0 0.0
      %582 = vmatpush1.msra.mxu0 %v224
      %583 = vmatprep.subr.mxu0 0.0
      %584 = vmatpush1.msra.mxu0 %v223
      %585 = vmatprep.subr.mxu0 0.0
      %586 = vmatpush2.msra.mxu0 0.0
      %587 = vmatprep.subr.mxu0 0.0
      %588 = vmatpush2.msra.mxu0 0.0
      %589 = vmatprep.subr.mxu0 0.0
      %590 = vmatpush2.msra.mxu0 0.0
      %591 = vmatprep.subr.mxu0 0.0
      %592 = vmatpush2.msra.mxu0 0.0
      %593 = vmatprep.subr.mxu0 0.0
      %594 = vmatpush2.msra.mxu0 0.0
      %595 = vmatprep.subr.mxu0 0.0
      %596 = vmatpush2.msra.mxu0 0.0
      %597 = vmatprep.subr.mxu0 0.0
      %598 = vmatpush2.msra.mxu0 0.0
      %599 = vmatprep.subr.mxu0 0.0
      %600 = vmatpush2.msra.mxu0 0.0
      %601 = vmatprep.subr.mxu0 0.0
      %602 = vmatpush2.msra.mxu0 0.0
      %603 = vmatprep.subr.mxu0 0.0
      %604 = vmatpush2.msra.mxu0 0.0
      %605 = vmatprep.subr.mxu0 0.0
      %606 = vmatpush2.msra.mxu0 0.0
      %607 = vmatprep.subr.mxu0 0.0
      %608 = vmatpush2.msra.mxu0 0.0
      %609 = vmatprep.subr.mxu0 0.0
      %610 = vmatpush2.msra.mxu0 0.0
      %611 = vmatprep.subr.mxu0 0.0
      %612 = vmatpush2.msra.mxu0 0.0
      %613 = vmatprep.subr.mxu0 0.0
      %614 = vmatpush2.msra.mxu0 0.0
      %615 = vmatprep.subr.mxu0 0.0
      %616 = vmatpush2.msra.mxu0 0.0
      %617 = vmatprep.mubr.f32.mxu0 0.0
      %618 = vmatmul.mubr.f32.gmra.mxu0 %v527
      %v619 = vpop.f32.mrf.mxu0
      %v620 = vadd.f32 0.0, %v619
      %v621 = vpop.f32.mrf.mxu0
      %622 = vmatprep.mubr.f32.mxu0 0.0
      %623 = vmatmul.mubr.f32.gmra.mxu0 %v530
      %v624 = vpop.f32.mrf.mxu0
      %v625 = vadd.f32 0.0, %v624
      %v626 = vpop.f32.mrf.mxu0
      %627 = vmatprep.mubr.f32.mxu0 0.0
      %628 = vmatmul.mubr.f32.gmra.mxu0 %v533
      %v629 = vpop.f32.mrf.mxu0
      %v630 = vadd.f32 0.0, %v629
      %v631 = vpop.f32.mrf.mxu0
      %632 = vmatprep.mubr.f32.mxu0 0.0
      %633 = vmatmul.mubr.f32.gmra.mxu0 %v536
      %v634 = vpop.f32.mrf.mxu0
      %v635 = vadd.f32 0.0, %v634
      %v636 = vpop.f32.mrf.mxu0
      %637 = vmatprep.mubr.f32.mxu0 0.0
      %638 = vmatmul.mubr.f32.gmra.mxu0 %v539
      %v639 = vpop.f32.mrf.mxu0
      %v640 = vadd.f32 0.0, %v639
      %v641 = vpop.f32.mrf.mxu0
      %642 = vmatprep.mubr.f32.mxu0 0.0
      %643 = vmatmul.mubr.f32.gmra.mxu0 %v542
      %v644 = vpop.f32.mrf.mxu0
      %v645 = vadd.f32 0.0, %v644
      %v646 = vpop.f32.mrf.mxu0
      %647 = vmatprep.mubr.f32.mxu0 0.0
      %648 = vmatmul.mubr.f32.gmra.mxu0 %v545
      %v649 = vpop.f32.mrf.mxu0
      %v650 = vadd.f32 0.0, %v649
      %v651 = vpop.f32.mrf.mxu0
      %652 = vmatprep.mubr.f32.mxu0 0.0
      %653 = vmatmul.mubr.f32.gmra.mxu0 %v548
      %v654 = vpop.f32.mrf.mxu0
      %v655 = vadd.f32 0.0, %v654
      %v656 = vpop.f32.mrf.mxu0
      %657 = vmatprep.mubr.f32.mxu0 0.0
      %658 = vmatmul.mubr.f32.gmra.mxu0 %v551
      %v659 = vpop.f32.mrf.mxu0
      %v660 = vadd.f32 0.0, %v659
      %v661 = vpop.f32.mrf.mxu0
      %662 = vdwg.mxu0
      %v664 = vsel %vm366, %v620, 0
      %v667 = vsel %vm366, %v625, 0
      %v670 = vsel %vm366, %v630, 0
      %v673 = vsel %vm366, %v635, 0
      %v676 = vsel %vm366, %v640, 0
      %v679 = vsel %vm366, %v645, 0
      %v682 = vsel %vm366, %v650, 0
      %v685 = vsel %vm366, %v655, 0
      %v688 = vsel %vm366, %v660, 0
      %690 = vmatprep.subr.mxu0 0.0
      %691 = vmatpush1.msra.mxu0 0.0
      %692 = vmatprep.subr.mxu0 0.0
      %693 = vmatpush1.msra.mxu0 0.0
      %694 = vmatprep.subr.mxu0 0.0
      %695 = vmatpush1.msra.mxu0 0.0
      %696 = vmatprep.subr.mxu0 0.0
      %697 = vmatpush1.msra.mxu0 0.0
      %698 = vmatprep.subr.mxu0 0.0
      %699 = vmatpush1.msra.mxu0 0.0
      %700 = vmatprep.subr.mxu0 0.0
      %701 = vmatpush1.msra.mxu0 0.0
      %702 = vmatprep.subr.mxu0 0.0
      %703 = vmatpush1.msra.mxu0 0.0
      %704 = vmatprep.subr.mxu0 0.0
      %705 = vmatpush1.msra.mxu0 0.0
      %706 = vmatprep.subr.mxu0 0.0
      %707 = vmatpush1.msra.mxu0 0.0
      %708 = vmatprep.subr.mxu0 0.0
      %709 = vmatpush1.msra.mxu0 0.0
      %710 = vmatprep.subr.mxu0 0.0
      %711 = vmatpush1.msra.mxu0 0.0
      %712 = vmatprep.subr.mxu0 0.0
      %713 = vmatpush1.msra.mxu0 0.0
      %714 = vmatprep.subr.mxu0 0.0
      %715 = vmatpush1.msra.mxu0 0.0
      %716 = vmatprep.subr.mxu0 0.0
      %717 = vmatpush1.msra.mxu0 0.0
      %718 = vmatprep.subr.mxu0 0.0
      %719 = vmatpush1.msra.mxu0 0.0
      %720 = vmatprep.subr.mxu0 0.0
      %721 = vmatpush1.msra.mxu0 %v396
      %722 = vmatprep.subr.mxu0 0.0
      %723 = vmatpush2.msra.mxu0 0.0
      %724 = vmatprep.subr.mxu0 0.0
      %725 = vmatpush2.msra.mxu0 0.0
      %726 = vmatprep.subr.mxu0 0.0
      %727 = vmatpush2.msra.mxu0 0.0
      %728 = vmatprep.subr.mxu0 0.0
      %729 = vmatpush2.msra.mxu0 0.0
      %730 = vmatprep.subr.mxu0 0.0
      %731 = vmatpush2.msra.mxu0 0.0
      %732 = vmatprep.subr.mxu0 0.0
      %733 = vmatpush2.msra.mxu0 0.0
      %734 = vmatprep.subr.mxu0 0.0
      %735 = vmatpush2.msra.mxu0 0.0
      %736 = vmatprep.subr.mxu0 0.0
      %737 = vmatpush2.msra.mxu0 0.0
      %738 = vmatprep.subr.mxu0 0.0
      %739 = vmatpush2.msra.mxu0 0.0
      %740 = vmatprep.subr.mxu0 0.0
      %741 = vmatpush2.msra.mxu0 0.0
      %742 = vmatprep.subr.mxu0 0.0
      %743 = vmatpush2.msra.mxu0 0.0
      %744 = vmatprep.subr.mxu0 0.0
      %745 = vmatpush2.msra.mxu0 0.0
      %746 = vmatprep.subr.mxu0 0.0
      %747 = vmatpush2.msra.mxu0 0.0
      %748 = vmatprep.subr.mxu0 0.0
      %749 = vmatpush2.msra.mxu0 0.0
      %750 = vmatprep.subr.mxu0 0.0
      %751 = vmatpush2.msra.mxu0 0.0
      %752 = vmatprep.subr.mxu0 0.0
      %753 = vmatpush2.msra.mxu0 0.0
      %754 = vmatprep.mubr.f32.mxu0 0.0
      %755 = vmatmul.mubr.f32.gmra.mxu0 %v664
      %v756 = vpop.f32.mrf.mxu0
      %v757 = vadd.f32 1e-05, %v756
      %v758 = vpop.f32.mrf.mxu0
      %759 = vmatprep.mubr.f32.mxu0 0.0
      %760 = vmatmul.mubr.f32.gmra.mxu0 %v667
      %v761 = vpop.f32.mrf.mxu0
      %v762 = vadd.f32 1e-05, %v761
      %v763 = vpop.f32.mrf.mxu0
      %764 = vmatprep.mubr.f32.mxu0 0.0
      %765 = vmatmul.mubr.f32.gmra.mxu0 %v670
      %v766 = vpop.f32.mrf.mxu0
      %v767 = vadd.f32 1e-05, %v766
      %v768 = vpop.f32.mrf.mxu0
      %769 = vmatprep.mubr.f32.mxu0 0.0
      %770 = vmatmul.mubr.f32.gmra.mxu0 %v673
      %v771 = vpop.f32.mrf.mxu0
      %v772 = vadd.f32 1e-05, %v771
      %v773 = vpop.f32.mrf.mxu0
      %774 = vmatprep.mubr.f32.mxu0 0.0
      %775 = vmatmul.mubr.f32.gmra.mxu0 %v676
      %v776 = vpop.f32.mrf.mxu0
      %v777 = vadd.f32 1e-05, %v776
      %v778 = vpop.f32.mrf.mxu0
      %779 = vmatprep.mubr.f32.mxu0 0.0
      %780 = vmatmul.mubr.f32.gmra.mxu0 %v679
      %v781 = vpop.f32.mrf.mxu0
      %v782 = vadd.f32 1e-05, %v781
      %v783 = vpop.f32.mrf.mxu0
      %784 = vmatprep.mubr.f32.mxu0 0.0
      %785 = vmatmul.mubr.f32.gmra.mxu0 %v682
      %v786 = vpop.f32.mrf.mxu0
      %v787 = vadd.f32 1e-05, %v786
      %v788 = vpop.f32.mrf.mxu0
      %789 = vmatprep.mubr.f32.mxu0 0.0
      %790 = vmatmul.mubr.f32.gmra.mxu0 %v685
      %v791 = vpop.f32.mrf.mxu0
      %v792 = vadd.f32 1e-05, %v791
      %v793 = vpop.f32.mrf.mxu0
      %794 = vmatprep.mubr.f32.mxu0 0.0
      %795 = vmatmul.mubr.f32.gmra.mxu0 %v688
      %v796 = vpop.f32.mrf.mxu0
      %v797 = vadd.f32 1e-05, %v796
      %v798 = vpop.f32.mrf.mxu0
      %799 = vdwg.mxu0
      %v800 = vrsqrt.pop %v757
      %v801 = vrsqrt.pop %v762
      %v802 = vrsqrt.pop %v767
      %v803 = vrsqrt.pop %v772
      %v804 = vrsqrt.pop %v777
      %v805 = vrsqrt.pop %v782
      %v806 = vrsqrt.pop %v787
      %v807 = vrsqrt.pop %v792
      %v808 = vrsqrt.pop %v797
      %v809 = vmul.f32 %v508, %v800
      %v810 = vmul.f32 %v509, %v801
      %v811 = vmul.f32 %v510, %v802
      %v812 = vmul.f32 %v511, %v803
      %v813 = vmul.f32 %v512, %v804
      %v814 = vmul.f32 %v513, %v805
      %v815 = vmul.f32 %v514, %v806
      %v816 = vmul.f32 %v515, %v807
      %v817 = vmul.f32 %v516, %v808
      %v818 = vlaneseq
      %v819 = vshrl.u32 %v818, 7
      %v820 = vsub.s32 0, %v819
      %v821 = vrot.slane %v218, %v820
      %v822 = vmul.f32 %v809, %v821
      %v823 = vmul.f32 %v810, %v821
      %v824 = vmul.f32 %v811, %v821
      %v825 = vmul.f32 %v812, %v821
      %v826 = vmul.f32 %v813, %v821
      %v827 = vmul.f32 %v814, %v821
      %v828 = vmul.f32 %v815, %v821
      %v829 = vmul.f32 %v816, %v821
      %v830 = vmul.f32 %v817, %v821
      %v831 = vlaneseq
      %v832 = vshrl.u32 %v831, 7
      %v833 = vsub.s32 0, %v832
      %v834 = vrot.slane %v220, %v833
      %v835 = vadd.f32 %v822, %v834
      %v836 = vadd.f32 %v823, %v834
      %v837 = vadd.f32 %v824, %v834
      %v838 = vadd.f32 %v825, %v834
      %v839 = vadd.f32 %v826, %v834
      %v840 = vadd.f32 %v827, %v834
      %v841 = vadd.f32 %v828, %v834
      %v842 = vadd.f32 %v829, %v834
      %v843 = vadd.f32 %v830, %v834
      %v844 = vpack.c.bf16 %v836, %v835
      %v845 = vpack.c.bf16 %v838, %v837
      %v846 = vpack.c.bf16 %v840, %v839
      %v847 = vpack.c.bf16 %v842, %v841
      %v848 = vpack.c.bf16 %v843, %v843
      %849 = vrot.lane.b32.xlu0 %v208, 96
      %v850 = vpop.permute.xlu0 %849
      %851 = vrot.lane.b32.xlu0 %v209, 96
      %v852 = vpop.permute.xlu0 %851
      %853 = vrot.lane.b32.xlu0 %v210, 96
      %v854 = vpop.permute.xlu0 %853
      %855 = vrot.lane.b32.xlu0 %v211, 96
      %v856 = vpop.permute.xlu0 %855
      %857 = vrot.lane.b32.xlu0 %v212, 96
      %v858 = vpop.permute.xlu0 %857
      %859 = vrot.lane.b32.xlu0 %v213, 96
      %v860 = vpop.permute.xlu0 %859
      %861 = vrot.lane.b32.xlu0 %v214, 96
      %v862 = vpop.permute.xlu0 %861
      %863 = vrot.lane.b32.xlu0 %v215, 96
      %v864 = vpop.permute.xlu0 %863
      %865 = vrot.lane.b32.xlu0 %v216, 96
      %v866 = vpop.permute.xlu0 %865
      %v867 = vsel %vm228, %v850, 0
      %v869 = vsel %vm228, %v852, 0
      %v871 = vsel %vm228, %v854, 0
      %v873 = vsel %vm228, %v856, 0
      %v875 = vsel %vm228, %v858, 0
      %v877 = vsel %vm228, %v860, 0
      %v879 = vsel %vm228, %v862, 0
      %v881 = vsel %vm228, %v864, 0
      %v883 = vsel %vm228, %v866, 0
      %885 = vmatprep.subr.mxu0 0.0
      %886 = vmatpush1.msra.mxu0 0.0
      %887 = vmatprep.subr.mxu0 0.0
      %888 = vmatpush1.msra.mxu0 0.0
      %889 = vmatprep.subr.mxu0 0.0
      %890 = vmatpush1.msra.mxu0 0.0
      %891 = vmatprep.subr.mxu0 0.0
      %892 = vmatpush1.msra.mxu0 0.0
      %893 = vmatprep.subr.mxu0 0.0
      %894 = vmatpush1.msra.mxu0 0.0
      %895 = vmatprep.subr.mxu0 0.0
      %896 = vmatpush1.msra.mxu0 0.0
      %897 = vmatprep.subr.mxu0 0.0
      %898 = vmatpush1.msra.mxu0 0.0
      %899 = vmatprep.subr.mxu0 0.0
      %900 = vmatpush1.msra.mxu0 0.0
      %901 = vmatprep.subr.mxu0 0.0
      %902 = vmatpush1.msra.mxu0 0.0
      %903 = vmatprep.subr.mxu0 0.0
      %904 = vmatpush1.msra.mxu0 0.0
      %905 = vmatprep.subr.mxu0 0.0
      %906 = vmatpush1.msra.mxu0 0.0
      %907 = vmatprep.subr.mxu0 0.0
      %908 = vmatpush1.msra.mxu0 0.0
      %909 = vmatprep.subr.mxu0 0.0
      %910 = vmatpush1.msra.mxu0 %v226
      %911 = vmatprep.subr.mxu0 0.0
      %912 = vmatpush1.msra.mxu0 %v225
      %913 = vmatprep.subr.mxu0 0.0
      %914 = vmatpush1.msra.mxu0 %v224
      %915 = vmatprep.subr.mxu0 0.0
      %916 = vmatpush1.msra.mxu0 %v223
      %917 = vmatprep.subr.mxu0 0.0
      %918 = vmatpush2.msra.mxu0 0.0
      %919 = vmatprep.subr.mxu0 0.0
      %920 = vmatpush2.msra.mxu0 0.0
      %921 = vmatprep.subr.mxu0 0.0
      %922 = vmatpush2.msra.mxu0 0.0
      %923 = vmatprep.subr.mxu0 0.0
      %924 = vmatpush2.msra.mxu0 0.0
      %925 = vmatprep.subr.mxu0 0.0
      %926 = vmatpush2.msra.mxu0 0.0
      %927 = vmatprep.subr.mxu0 0.0
      %928 = vmatpush2.msra.mxu0 0.0
      %929 = vmatprep.subr.mxu0 0.0
      %930 = vmatpush2.msra.mxu0 0.0
      %931 = vmatprep.subr.mxu0 0.0
      %932 = vmatpush2.msra.mxu0 0.0
      %933 = vmatprep.subr.mxu0 0.0
      %934 = vmatpush2.msra.mxu0 0.0
      %935 = vmatprep.subr.mxu0 0.0
      %936 = vmatpush2.msra.mxu0 0.0
      %937 = vmatprep.subr.mxu0 0.0
      %938 = vmatpush2.msra.mxu0 0.0
      %939 = vmatprep.subr.mxu0 0.0
      %940 = vmatpush2.msra.mxu0 0.0
      %941 = vmatprep.subr.mxu0 0.0
      %942 = vmatpush2.msra.mxu0 0.0
      %943 = vmatprep.subr.mxu0 0.0
      %944 = vmatpush2.msra.mxu0 0.0
      %945 = vmatprep.subr.mxu0 0.0
      %946 = vmatpush2.msra.mxu0 0.0
      %947 = vmatprep.subr.mxu0 0.0
      %948 = vmatpush2.msra.mxu0 0.0
      %949 = vmatprep.mubr.f32.mxu0 0.0
      %950 = vmatmul.mubr.f32.gmra.mxu0 %v867
      %v951 = vpop.f32.mrf.mxu0
      %v952 = vadd.f32 0.0, %v951
      %v953 = vpop.f32.mrf.mxu0
      %954 = vmatprep.mubr.f32.mxu0 0.0
      %955 = vmatmul.mubr.f32.gmra.mxu0 %v869
      %v956 = vpop.f32.mrf.mxu0
      %v957 = vadd.f32 0.0, %v956
      %v958 = vpop.f32.mrf.mxu0
      %959 = vmatprep.mubr.f32.mxu0 0.0
      %960 = vmatmul.mubr.f32.gmra.mxu0 %v871
      %v961 = vpop.f32.mrf.mxu0
      %v962 = vadd.f32 0.0, %v961
      %v963 = vpop.f32.mrf.mxu0
      %964 = vmatprep.mubr.f32.mxu0 0.0
      %965 = vmatmul.mubr.f32.gmra.mxu0 %v873
      %v966 = vpop.f32.mrf.mxu0
      %v967 = vadd.f32 0.0, %v966
      %v968 = vpop.f32.mrf.mxu0
      %969 = vmatprep.mubr.f32.mxu0 0.0
      %970 = vmatmul.mubr.f32.gmra.mxu0 %v875
      %v971 = vpop.f32.mrf.mxu0
      %v972 = vadd.f32 0.0, %v971
      %v973 = vpop.f32.mrf.mxu0
      %974 = vmatprep.mubr.f32.mxu0 0.0
      %975 = vmatmul.mubr.f32.gmra.mxu0 %v877
      %v976 = vpop.f32.mrf.mxu0
      %v977 = vadd.f32 0.0, %v976
      %v978 = vpop.f32.mrf.mxu0
      %979 = vmatprep.mubr.f32.mxu0 0.0
      %980 = vmatmul.mubr.f32.gmra.mxu0 %v879
      %v981 = vpop.f32.mrf.mxu0
      %v982 = vadd.f32 0.0, %v981
      %v983 = vpop.f32.mrf.mxu0
      %984 = vmatprep.mubr.f32.mxu0 0.0
      %985 = vmatmul.mubr.f32.gmra.mxu0 %v881
      %v986 = vpop.f32.mrf.mxu0
      %v987 = vadd.f32 0.0, %v986
      %v988 = vpop.f32.mrf.mxu0
      %989 = vmatprep.mubr.f32.mxu0 0.0
      %990 = vmatmul.mubr.f32.gmra.mxu0 %v883
      %v991 = vpop.f32.mrf.mxu0
      %v992 = vadd.f32 0.0, %v991
      %v993 = vpop.f32.mrf.mxu0
      %994 = vdwg.mxu0
      %v996 = vsel %vm366, %v952, 0
      %v999 = vsel %vm366, %v957, 0
      %v1002 = vsel %vm366, %v962, 0
      %v1005 = vsel %vm366, %v967, 0
      %v1008 = vsel %vm366, %v972, 0
      %v1011 = vsel %vm366, %v977, 0
      %v1014 = vsel %vm366, %v982, 0
      %v1017 = vsel %vm366, %v987, 0
      %v1020 = vsel %vm366, %v992, 0
      %1022 = vmatprep.subr.mxu0 0.0
      %1023 = vmatpush1.msra.mxu0 0.0
      %1024 = vmatprep.subr.mxu0 0.0
      %1025 = vmatpush1.msra.mxu0 0.0
      %1026 = vmatprep.subr.mxu0 0.0
      %1027 = vmatpush1.msra.mxu0 0.0
      %1028 = vmatprep.subr.mxu0 0.0
      %1029 = vmatpush1.msra.mxu0 0.0
      %1030 = vmatprep.subr.mxu0 0.0
      %1031 = vmatpush1.msra.mxu0 0.0
      %1032 = vmatprep.subr.mxu0 0.0
      %1033 = vmatpush1.msra.mxu0 0.0
      %1034 = vmatprep.subr.mxu0 0.0
      %1035 = vmatpush1.msra.mxu0 0.0
      %1036 = vmatprep.subr.mxu0 0.0
      %1037 = vmatpush1.msra.mxu0 0.0
      %1038 = vmatprep.subr.mxu0 0.0
      %1039 = vmatpush1.msra.mxu0 0.0
      %1040 = vmatprep.subr.mxu0 0.0
      %1041 = vmatpush1.msra.mxu0 0.0
      %1042 = vmatprep.subr.mxu0 0.0
      %1043 = vmatpush1.msra.mxu0 0.0
      %1044 = vmatprep.subr.mxu0 0.0
      %1045 = vmatpush1.msra.mxu0 0.0
      %1046 = vmatprep.subr.mxu0 0.0
      %1047 = vmatpush1.msra.mxu0 0.0
      %1048 = vmatprep.subr.mxu0 0.0
      %1049 = vmatpush1.msra.mxu0 0.0
      %1050 = vmatprep.subr.mxu0 0.0
      %1051 = vmatpush1.msra.mxu0 0.0
      %1052 = vmatprep.subr.mxu0 0.0
      %1053 = vmatpush1.msra.mxu0 %v396
      %1054 = vmatprep.subr.mxu0 0.0
      %1055 = vmatpush2.msra.mxu0 0.0
      %1056 = vmatprep.subr.mxu0 0.0
      %1057 = vmatpush2.msra.mxu0 0.0
      %1058 = vmatprep.subr.mxu0 0.0
      %1059 = vmatpush2.msra.mxu0 0.0
      %1060 = vmatprep.subr.mxu0 0.0
      %1061 = vmatpush2.msra.mxu0 0.0
      %1062 = vmatprep.subr.mxu0 0.0
      %1063 = vmatpush2.msra.mxu0 0.0
      %1064 = vmatprep.subr.mxu0 0.0
      %1065 = vmatpush2.msra.mxu0 0.0
      %1066 = vmatprep.subr.mxu0 0.0
      %1067 = vmatpush2.msra.mxu0 0.0
      %1068 = vmatprep.subr.mxu0 0.0
      %1069 = vmatpush2.msra.mxu0 0.0
      %1070 = vmatprep.subr.mxu0 0.0
      %1071 = vmatpush2.msra.mxu0 0.0
      %1072 = vmatprep.subr.mxu0 0.0
      %1073 = vmatpush2.msra.mxu0 0.0
      %1074 = vmatprep.subr.mxu0 0.0
      %1075 = vmatpush2.msra.mxu0 0.0
      %1076 = vmatprep.subr.mxu0 0.0
      %1077 = vmatpush2.msra.mxu0 0.0
      %1078 = vmatprep.subr.mxu0 0.0
      %1079 = vmatpush2.msra.mxu0 0.0
      %1080 = vmatprep.subr.mxu0 0.0
      %1081 = vmatpush2.msra.mxu0 0.0
      %1082 = vmatprep.subr.mxu0 0.0
      %1083 = vmatpush2.msra.mxu0 0.0
      %1084 = vmatprep.subr.mxu0 0.0
      %1085 = vmatpush2.msra.mxu0 0.0
      %1086 = vmatprep.mubr.f32.mxu0 0.0
      %1087 = vmatmul.mubr.f32.gmra.mxu0 %v996
      %v1088 = vpop.f32.mrf.mxu0
      %v1089 = vadd.f32 0.0, %v1088
      %v1090 = vpop.f32.mrf.mxu0
      %1091 = vmatprep.mubr.f32.mxu0 0.0
      %1092 = vmatmul.mubr.f32.gmra.mxu0 %v999
      %v1093 = vpop.f32.mrf.mxu0
      %v1094 = vadd.f32 0.0, %v1093
      %v1095 = vpop.f32.mrf.mxu0
      %1096 = vmatprep.mubr.f32.mxu0 0.0
      %1097 = vmatmul.mubr.f32.gmra.mxu0 %v1002
      %v1098 = vpop.f32.mrf.mxu0
      %v1099 = vadd.f32 0.0, %v1098
      %v1100 = vpop.f32.mrf.mxu0
      %1101 = vmatprep.mubr.f32.mxu0 0.0
      %1102 = vmatmul.mubr.f32.gmra.mxu0 %v1005
      %v1103 = vpop.f32.mrf.mxu0
      %v1104 = vadd.f32 0.0, %v1103
      %v1105 = vpop.f32.mrf.mxu0
      %1106 = vmatprep.mubr.f32.mxu0 0.0
      %1107 = vmatmul.mubr.f32.gmra.mxu0 %v1008
      %v1108 = vpop.f32.mrf.mxu0
      %v1109 = vadd.f32 0.0, %v1108
      %v1110 = vpop.f32.mrf.mxu0
      %1111 = vmatprep.mubr.f32.mxu0 0.0
      %1112 = vmatmul.mubr.f32.gmra.mxu0 %v1011
      %v1113 = vpop.f32.mrf.mxu0
      %v1114 = vadd.f32 0.0, %v1113
      %v1115 = vpop.f32.mrf.mxu0
      %1116 = vmatprep.mubr.f32.mxu0 0.0
      %1117 = vmatmul.mubr.f32.gmra.mxu0 %v1014
      %v1118 = vpop.f32.mrf.mxu0
      %v1119 = vadd.f32 0.0, %v1118
      %v1120 = vpop.f32.mrf.mxu0
      %1121 = vmatprep.mubr.f32.mxu0 0.0
      %1122 = vmatmul.mubr.f32.gmra.mxu0 %v1017
      %v1123 = vpop.f32.mrf.mxu0
      %v1124 = vadd.f32 0.0, %v1123
      %v1125 = vpop.f32.mrf.mxu0
      %1126 = vmatprep.mubr.f32.mxu0 0.0
      %1127 = vmatmul.mubr.f32.gmra.mxu0 %v1020
      %v1128 = vpop.f32.mrf.mxu0
      %v1129 = vadd.f32 0.0, %v1128
      %v1130 = vpop.f32.mrf.mxu0
      %1131 = vdwg.mxu0
      %1141 = vrot.lane.b32.xlu0 %v1089, 32
      %v1142 = vpop.permute.xlu0 %1141
      %1143 = vrot.lane.b32.xlu0 %v1094, 32
      %v1144 = vpop.permute.xlu0 %1143
      %1145 = vrot.lane.b32.xlu0 %v1099, 32
      %v1146 = vpop.permute.xlu0 %1145
      %1147 = vrot.lane.b32.xlu0 %v1104, 32
      %v1148 = vpop.permute.xlu0 %1147
      %1149 = vrot.lane.b32.xlu0 %v1109, 32
      %v1150 = vpop.permute.xlu0 %1149
      %1151 = vrot.lane.b32.xlu0 %v1114, 32
      %v1152 = vpop.permute.xlu0 %1151
      %1153 = vrot.lane.b32.xlu0 %v1119, 32
      %v1154 = vpop.permute.xlu0 %1153
      %1155 = vrot.lane.b32.xlu0 %v1124, 32
      %v1156 = vpop.permute.xlu0 %1155
      %1157 = vrot.lane.b32.xlu0 %v1129, 32
      %v1158 = vpop.permute.xlu0 %1157
      %v1168 = vsub.f32 %v208, %v1142
      %v1169 = vsub.f32 %v209, %v1144
      %v1170 = vsub.f32 %v210, %v1146
      %v1171 = vsub.f32 %v211, %v1148
      %v1172 = vsub.f32 %v212, %v1150
      %v1173 = vsub.f32 %v213, %v1152
      %v1174 = vsub.f32 %v214, %v1154
      %v1175 = vsub.f32 %v215, %v1156
      %v1176 = vsub.f32 %v216, %v1158
      %v1177 = vmul.f32 %v1168, %v1168
      %v1178 = vmul.f32 %v1169, %v1169
      %v1179 = vmul.f32 %v1170, %v1170
      %v1180 = vmul.f32 %v1171, %v1171
      %v1181 = vmul.f32 %v1172, %v1172
      %v1182 = vmul.f32 %v1173, %v1173
      %v1183 = vmul.f32 %v1174, %v1174
      %v1184 = vmul.f32 %v1175, %v1175
      %v1185 = vmul.f32 %v1176, %v1176
      %1195 = vrot.lane.b32.xlu0 %v1177, 96
      %v1196 = vpop.permute.xlu0 %1195
      %1197 = vrot.lane.b32.xlu0 %v1178, 96
      %v1198 = vpop.permute.xlu0 %1197
      %1199 = vrot.lane.b32.xlu0 %v1179, 96
      %v1200 = vpop.permute.xlu0 %1199
      %1201 = vrot.lane.b32.xlu0 %v1180, 96
      %v1202 = vpop.permute.xlu0 %1201
      %1203 = vrot.lane.b32.xlu0 %v1181, 96
      %v1204 = vpop.permute.xlu0 %1203
      %1205 = vrot.lane.b32.xlu0 %v1182, 96
      %v1206 = vpop.permute.xlu0 %1205
      %1207 = vrot.lane.b32.xlu0 %v1183, 96
      %v1208 = vpop.permute.xlu0 %1207
      %1209 = vrot.lane.b32.xlu0 %v1184, 96
      %v1210 = vpop.permute.xlu0 %1209
      %1211 = vrot.lane.b32.xlu0 %v1185, 96
      %v1212 = vpop.permute.xlu0 %1211
      %v1213 = vsel %vm228, %v1196, 0
      %v1215 = vsel %vm228, %v1198, 0
      %v1217 = vsel %vm228, %v1200, 0
      %v1219 = vsel %vm228, %v1202, 0
      %v1221 = vsel %vm228, %v1204, 0
      %v1223 = vsel %vm228, %v1206, 0
      %v1225 = vsel %vm228, %v1208, 0
      %v1227 = vsel %vm228, %v1210, 0
      %v1229 = vsel %vm228, %v1212, 0
      %1231 = vmatprep.subr.mxu0 0.0
      %1232 = vmatpush1.msra.mxu0 0.0
      %1233 = vmatprep.subr.mxu0 0.0
      %1234 = vmatpush1.msra.mxu0 0.0
      %1235 = vmatprep.subr.mxu0 0.0
      %1236 = vmatpush1.msra.mxu0 0.0
      %1237 = vmatprep.subr.mxu0 0.0
      %1238 = vmatpush1.msra.mxu0 0.0
      %1239 = vmatprep.subr.mxu0 0.0
      %1240 = vmatpush1.msra.mxu0 0.0
      %1241 = vmatprep.subr.mxu0 0.0
      %1242 = vmatpush1.msra.mxu0 0.0
      %1243 = vmatprep.subr.mxu0 0.0
      %1244 = vmatpush1.msra.mxu0 0.0
      %1245 = vmatprep.subr.mxu0 0.0
      %1246 = vmatpush1.msra.mxu0 0.0
      %1247 = vmatprep.subr.mxu0 0.0
      %1248 = vmatpush1.msra.mxu0 0.0
      %1249 = vmatprep.subr.mxu0 0.0
      %1250 = vmatpush1.msra.mxu0 0.0
      %1251 = vmatprep.subr.mxu0 0.0
      %1252 = vmatpush1.msra.mxu0 0.0
      %1253 = vmatprep.subr.mxu0 0.0
      %1254 = vmatpush1.msra.mxu0 0.0
      %1255 = vmatprep.subr.mxu0 0.0
      %1256 = vmatpush1.msra.mxu0 %v226
      %1257 = vmatprep.subr.mxu0 0.0
      %1258 = vmatpush1.msra.mxu0 %v225
      %1259 = vmatprep.subr.mxu0 0.0
      %1260 = vmatpush1.msra.mxu0 %v224
      %1261 = vmatprep.subr.mxu0 0.0
      %1262 = vmatpush1.msra.mxu0 %v223
      %1263 = vmatprep.subr.mxu0 0.0
      %1264 = vmatpush2.msra.mxu0 0.0
      %1265 = vmatprep.subr.mxu0 0.0
      %1266 = vmatpush2.msra.mxu0 0.0
      %1267 = vmatprep.subr.mxu0 0.0
      %1268 = vmatpush2.msra.mxu0 0.0
      %1269 = vmatprep.subr.mxu0 0.0
      %1270 = vmatpush2.msra.mxu0 0.0
      %1271 = vmatprep.subr.mxu0 0.0
      %1272 = vmatpush2.msra.mxu0 0.0
      %1273 = vmatprep.subr.mxu0 0.0
      %1274 = vmatpush2.msra.mxu0 0.0
      %1275 = vmatprep.subr.mxu0 0.0
      %1276 = vmatpush2.msra.mxu0 0.0
      %1277 = vmatprep.subr.mxu0 0.0
      %1278 = vmatpush2.msra.mxu0 0.0
      %1279 = vmatprep.subr.mxu0 0.0
      %1280 = vmatpush2.msra.mxu0 0.0
      %1281 = vmatprep.subr.mxu0 0.0
      %1282 = vmatpush2.msra.mxu0 0.0
      %1283 = vmatprep.subr.mxu0 0.0
      %1284 = vmatpush2.msra.mxu0 0.0
      %1285 = vmatprep.subr.mxu0 0.0
      %1286 = vmatpush2.msra.mxu0 0.0
      %1287 = vmatprep.subr.mxu0 0.0
      %1288 = vmatpush2.msra.mxu0 0.0
      %1289 = vmatprep.subr.mxu0 0.0
      %1290 = vmatpush2.msra.mxu0 0.0
      %1291 = vmatprep.subr.mxu0 0.0
      %1292 = vmatpush2.msra.mxu0 0.0
      %1293 = vmatprep.subr.mxu0 0.0
      %1294 = vmatpush2.msra.mxu0 0.0
      %1295 = vmatprep.mubr.f32.mxu0 0.0
      %1296 = vmatmul.mubr.f32.gmra.mxu0 %v1213
      %v1297 = vpop.f32.mrf.mxu0
      %v1298 = vadd.f32 0.0, %v1297
      %v1299 = vpop.f32.mrf.mxu0
      %1300 = vmatprep.mubr.f32.mxu0 0.0
      %1301 = vmatmul.mubr.f32.gmra.mxu0 %v1215
      %v1302 = vpop.f32.mrf.mxu0
      %v1303 = vadd.f32 0.0, %v1302
      %v1304 = vpop.f32.mrf.mxu0
      %1305 = vmatprep.mubr.f32.mxu0 0.0
      %1306 = vmatmul.mubr.f32.gmra.mxu0 %v1217
      %v1307 = vpop.f32.mrf.mxu0
      %v1308 = vadd.f32 0.0, %v1307
      %v1309 = vpop.f32.mrf.mxu0
      %1310 = vmatprep.mubr.f32.mxu0 0.0
      %1311 = vmatmul.mubr.f32.gmra.mxu0 %v1219
      %v1312 = vpop.f32.mrf.mxu0
      %v1313 = vadd.f32 0.0, %v1312
      %v1314 = vpop.f32.mrf.mxu0
      %1315 = vmatprep.mubr.f32.mxu0 0.0
      %1316 = vmatmul.mubr.f32.gmra.mxu0 %v1221
      %v1317 = vpop.f32.mrf.mxu0
      %v1318 = vadd.f32 0.0, %v1317
      %v1319 = vpop.f32.mrf.mxu0
      %1320 = vmatprep.mubr.f32.mxu0 0.0
      %1321 = vmatmul.mubr.f32.gmra.mxu0 %v1223
      %v1322 = vpop.f32.mrf.mxu0
      %v1323 = vadd.f32 0.0, %v1322
      %v1324 = vpop.f32.mrf.mxu0
      %1325 = vmatprep.mubr.f32.mxu0 0.0
      %1326 = vmatmul.mubr.f32.gmra.mxu0 %v1225
      %v1327 = vpop.f32.mrf.mxu0
      %v1328 = vadd.f32 0.0, %v1327
      %v1329 = vpop.f32.mrf.mxu0
      %1330 = vmatprep.mubr.f32.mxu0 0.0
      %1331 = vmatmul.mubr.f32.gmra.mxu0 %v1227
      %v1332 = vpop.f32.mrf.mxu0
      %v1333 = vadd.f32 0.0, %v1332
      %v1334 = vpop.f32.mrf.mxu0
      %1335 = vmatprep.mubr.f32.mxu0 0.0
      %1336 = vmatmul.mubr.f32.gmra.mxu0 %v1229
      %v1337 = vpop.f32.mrf.mxu0
      %v1338 = vadd.f32 0.0, %v1337
      %v1339 = vpop.f32.mrf.mxu0
      %1340 = vdwg.mxu0
      %v1342 = vsel %vm366, %v1298, 0
      %v1345 = vsel %vm366, %v1303, 0
      %v1348 = vsel %vm366, %v1308, 0
      %v1351 = vsel %vm366, %v1313, 0
      %v1354 = vsel %vm366, %v1318, 0
      %v1357 = vsel %vm366, %v1323, 0
      %v1360 = vsel %vm366, %v1328, 0
      %v1363 = vsel %vm366, %v1333, 0
      %v1366 = vsel %vm366, %v1338, 0
      %1368 = vmatprep.subr.mxu0 0.0
      %1369 = vmatpush1.msra.mxu0 0.0
      %1370 = vmatprep.subr.mxu0 0.0
      %1371 = vmatpush1.msra.mxu0 0.0
      %1372 = vmatprep.subr.mxu0 0.0
      %1373 = vmatpush1.msra.mxu0 0.0
      %1374 = vmatprep.subr.mxu0 0.0
      %1375 = vmatpush1.msra.mxu0 0.0
      %1376 = vmatprep.subr.mxu0 0.0
      %1377 = vmatpush1.msra.mxu0 0.0
      %1378 = vmatprep.subr.mxu0 0.0
      %1379 = vmatpush1.msra.mxu0 0.0
      %1380 = vmatprep.subr.mxu0 0.0
      %1381 = vmatpush1.msra.mxu0 0.0
      %1382 = vmatprep.subr.mxu0 0.0
      %1383 = vmatpush1.msra.mxu0 0.0
      %1384 = vmatprep.subr.mxu0 0.0
      %1385 = vmatpush1.msra.mxu0 0.0
      %1386 = vmatprep.subr.mxu0 0.0
      %1387 = vmatpush1.msra.mxu0 0.0
      %1388 = vmatprep.subr.mxu0 0.0
      %1389 = vmatpush1.msra.mxu0 0.0
      %1390 = vmatprep.subr.mxu0 0.0
      %1391 = vmatpush1.msra.mxu0 0.0
      %1392 = vmatprep.subr.mxu0 0.0
      %1393 = vmatpush1.msra.mxu0 0.0
      %1394 = vmatprep.subr.mxu0 0.0
      %1395 = vmatpush1.msra.mxu0 0.0
      %1396 = vmatprep.subr.mxu0 0.0
      %1397 = vmatpush1.msra.mxu0 0.0
      %1398 = vmatprep.subr.mxu0 0.0
      %1399 = vmatpush1.msra.mxu0 %v396
      %1400 = vmatprep.subr.mxu0 0.0
      %1401 = vmatpush2.msra.mxu0 0.0
      %1402 = vmatprep.subr.mxu0 0.0
      %1403 = vmatpush2.msra.mxu0 0.0
      %1404 = vmatprep.subr.mxu0 0.0
      %1405 = vmatpush2.msra.mxu0 0.0
      %1406 = vmatprep.subr.mxu0 0.0
      %1407 = vmatpush2.msra.mxu0 0.0
      %1408 = vmatprep.subr.mxu0 0.0
      %1409 = vmatpush2.msra.mxu0 0.0
      %1410 = vmatprep.subr.mxu0 0.0
      %1411 = vmatpush2.msra.mxu0 0.0
      %1412 = vmatprep.subr.mxu0 0.0
      %1413 = vmatpush2.msra.mxu0 0.0
      %1414 = vmatprep.subr.mxu0 0.0
      %1415 = vmatpush2.msra.mxu0 0.0
      %1416 = vmatprep.subr.mxu0 0.0
      %1417 = vmatpush2.msra.mxu0 0.0
      %1418 = vmatprep.subr.mxu0 0.0
      %1419 = vmatpush2.msra.mxu0 0.0
      %1420 = vmatprep.subr.mxu0 0.0
      %1421 = vmatpush2.msra.mxu0 0.0
      %1422 = vmatprep.subr.mxu0 0.0
      %1423 = vmatpush2.msra.mxu0 0.0
      %1424 = vmatprep.subr.mxu0 0.0
      %1425 = vmatpush2.msra.mxu0 0.0
      %1426 = vmatprep.subr.mxu0 0.0
      %1427 = vmatpush2.msra.mxu0 0.0
      %1428 = vmatprep.subr.mxu0 0.0
      %1429 = vmatpush2.msra.mxu0 0.0
      %1430 = vmatprep.subr.mxu0 0.0
      %1431 = vmatpush2.msra.mxu0 0.0
      %1432 = vmatprep.mubr.f32.mxu0 0.0
      %1433 = vmatmul.mubr.f32.gmra.mxu0 %v1342
      %v1434 = vpop.f32.mrf.mxu0
      %v1435 = vadd.f32 1e-05, %v1434
      %v1436 = vpop.f32.mrf.mxu0
      %1437 = vmatprep.mubr.f32.mxu0 0.0
      %1438 = vmatmul.mubr.f32.gmra.mxu0 %v1345
      %v1439 = vpop.f32.mrf.mxu0
      %v1440 = vadd.f32 1e-05, %v1439
      %v1441 = vpop.f32.mrf.mxu0
      %1442 = vmatprep.mubr.f32.mxu0 0.0
      %1443 = vmatmul.mubr.f32.gmra.mxu0 %v1348
      %v1444 = vpop.f32.mrf.mxu0
      %v1445 = vadd.f32 1e-05, %v1444
      %v1446 = vpop.f32.mrf.mxu0
      %1447 = vmatprep.mubr.f32.mxu0 0.0
      %1448 = vmatmul.mubr.f32.gmra.mxu0 %v1351
      %v1449 = vpop.f32.mrf.mxu0
      %v1450 = vadd.f32 1e-05, %v1449
      %v1451 = vpop.f32.mrf.mxu0
      %1452 = vmatprep.mubr.f32.mxu0 0.0
      %1453 = vmatmul.mubr.f32.gmra.mxu0 %v1354
      %v1454 = vpop.f32.mrf.mxu0
      %v1455 = vadd.f32 1e-05, %v1454
      %v1456 = vpop.f32.mrf.mxu0
      %1457 = vmatprep.mubr.f32.mxu0 0.0
      %1458 = vmatmul.mubr.f32.gmra.mxu0 %v1357
      %v1459 = vpop.f32.mrf.mxu0
      %v1460 = vadd.f32 1e-05, %v1459
      %v1461 = vpop.f32.mrf.mxu0
      %1462 = vmatprep.mubr.f32.mxu0 0.0
      %1463 = vmatmul.mubr.f32.gmra.mxu0 %v1360
      %v1464 = vpop.f32.mrf.mxu0
      %v1465 = vadd.f32 1e-05, %v1464
      %v1466 = vpop.f32.mrf.mxu0
      %1467 = vmatprep.mubr.f32.mxu0 0.0
      %1468 = vmatmul.mubr.f32.gmra.mxu0 %v1363
      %v1469 = vpop.f32.mrf.mxu0
      %v1470 = vadd.f32 1e-05, %v1469
      %v1471 = vpop.f32.mrf.mxu0
      %1472 = vmatprep.mubr.f32.mxu0 0.0
      %1473 = vmatmul.mubr.f32.gmra.mxu0 %v1366
      %v1474 = vpop.f32.mrf.mxu0
      %v1475 = vadd.f32 1e-05, %v1474
      %v1476 = vpop.f32.mrf.mxu0
      %1477 = vdwg.mxu0
      %v1478 = vrsqrt.pop %v1435
      %v1479 = vrsqrt.pop %v1440
      %v1480 = vrsqrt.pop %v1445
      %v1481 = vrsqrt.pop %v1450
      %v1482 = vrsqrt.pop %v1455
      %v1483 = vrsqrt.pop %v1460
      %v1484 = vrsqrt.pop %v1465
      %v1485 = vrsqrt.pop %v1470
      %v1486 = vrsqrt.pop %v1475
      %1496 = vrot.lane.b32.xlu0 %v1478, 32
      %v1497 = vpop.permute.xlu0 %1496
      %1498 = vrot.lane.b32.xlu0 %v1479, 32
      %v1499 = vpop.permute.xlu0 %1498
      %1500 = vrot.lane.b32.xlu0 %v1480, 32
      %v1501 = vpop.permute.xlu0 %1500
      %1502 = vrot.lane.b32.xlu0 %v1481, 32
      %v1503 = vpop.permute.xlu0 %1502
      %1504 = vrot.lane.b32.xlu0 %v1482, 32
      %v1505 = vpop.permute.xlu0 %1504
      %1506 = vrot.lane.b32.xlu0 %v1483, 32
      %v1507 = vpop.permute.xlu0 %1506
      %1508 = vrot.lane.b32.xlu0 %v1484, 32
      %v1509 = vpop.permute.xlu0 %1508
      %1510 = vrot.lane.b32.xlu0 %v1485, 32
      %v1511 = vpop.permute.xlu0 %1510
      %1512 = vrot.lane.b32.xlu0 %v1486, 32
      %v1513 = vpop.permute.xlu0 %1512
      %v1523 = vmul.f32 %v1168, %v1497
      %v1524 = vmul.f32 %v1169, %v1499
      %v1525 = vmul.f32 %v1170, %v1501
      %v1526 = vmul.f32 %v1171, %v1503
      %v1527 = vmul.f32 %v1172, %v1505
      %v1528 = vmul.f32 %v1173, %v1507
      %v1529 = vmul.f32 %v1174, %v1509
      %v1530 = vmul.f32 %v1175, %v1511
      %v1531 = vmul.f32 %v1176, %v1513
      %v1532 = vlaneseq
      %v1533 = vshrl.u32 %v1532, 7
      %v1534 = vsub.s32 0, %v1533
      %v1535 = vrot.slane %v221, %v1534
      %1537 = vrot.lane.b32.xlu0 %v1535, 32
      %v1538 = vpop.permute.xlu0 %1537
      %v1540 = vmul.f32 %v1523, %v1538
      %v1541 = vmul.f32 %v1524, %v1538
      %v1542 = vmul.f32 %v1525, %v1538
      %v1543 = vmul.f32 %v1526, %v1538
      %v1544 = vmul.f32 %v1527, %v1538
      %v1545 = vmul.f32 %v1528, %v1538
      %v1546 = vmul.f32 %v1529, %v1538
      %v1547 = vmul.f32 %v1530, %v1538
      %v1548 = vmul.f32 %v1531, %v1538
      %v1549 = vlaneseq
      %v1550 = vshrl.u32 %v1549, 7
      %v1551 = vsub.s32 0, %v1550
      %v1552 = vrot.slane %v222, %v1551
      %1554 = vrot.lane.b32.xlu0 %v1552, 32
      %v1555 = vpop.permute.xlu0 %1554
      %v1557 = vadd.f32 %v1540, %v1555
      %v1558 = vadd.f32 %v1541, %v1555
      %v1559 = vadd.f32 %v1542, %v1555
      %v1560 = vadd.f32 %v1543, %v1555
      %v1561 = vadd.f32 %v1544, %v1555
      %v1562 = vadd.f32 %v1545, %v1555
      %v1563 = vadd.f32 %v1546, %v1555
      %v1564 = vadd.f32 %v1547, %v1555
      %v1565 = vadd.f32 %v1548, %v1555
      %v1566 = vpack.c.bf16 %v1558, %v1557
      %v1567 = vpack.c.bf16 %v1560, %v1559
      %v1568 = vpack.c.bf16 %v1562, %v1561
      %v1569 = vpack.c.bf16 %v1564, %v1563
      %v1570 = vpack.c.bf16 %v1565, %v1565
      %1576 = vrot.lane.b32.xlu0 %v1566, 96
      %v1577 = vpop.permute.xlu0 %1576
      %1578 = vrot.lane.b32.xlu0 %v1567, 96
      %v1579 = vpop.permute.xlu0 %1578
      %1580 = vrot.lane.b32.xlu0 %v1568, 96
      %v1581 = vpop.permute.xlu0 %1580
      %1582 = vrot.lane.b32.xlu0 %v1569, 96
      %v1583 = vpop.permute.xlu0 %1582
      %1584 = vrot.lane.b32.xlu0 %v1570, 96
      %v1585 = vpop.permute.xlu0 %1584
      %vm1586 = vcmask 64512
      %v1588 = vsel %vm1586, %v844, 0
      %v1591 = vsel %vm1586, %v845, 0
      %v1594 = vsel %vm1586, %v846, 0
      %v1597 = vsel %vm1586, %v847, 0
      %v1600 = vsel %vm1586, %v848, 0
      %v1603 = vsel %vm1586, %v1577, 0
      %v1606 = vsel %vm1586, %v1579, 0
      %v1609 = vsel %vm1586, %v1581, 0
      %v1612 = vsel %vm1586, %v1583, 0
      %v1615 = vsel %vm1586, %v1585, 0
      %1617 = vmatprep.subr.bf16.mxu0 0
      %1618 = vmatpush1.bf16.xpose.msra.mxu0 0
      %1619 = vmatprep.subr.bf16.mxu0 0
      %1620 = vmatpush1.bf16.xpose.msra.mxu0 0
      %1621 = vmatprep.subr.bf16.mxu0 0
      %1622 = vmatpush1.bf16.xpose.msra.mxu0 0
      %1623 = vmatprep.subr.bf16.mxu0 0
      %1624 = vmatpush1.bf16.xpose.msra.mxu0 %v1615
      %1625 = vmatprep.subr.bf16.mxu0 0
      %1626 = vmatpush1.bf16.xpose.msra.mxu0 %v1612
      %1627 = vmatprep.subr.bf16.mxu0 0
      %1628 = vmatpush1.bf16.xpose.msra.mxu0 %v1609
      %1629 = vmatprep.subr.bf16.mxu0 0
      %1630 = vmatpush1.bf16.xpose.msra.mxu0 %v1606
      %1631 = vmatprep.subr.bf16.mxu0 0
      %1632 = vmatpush1.bf16.xpose.msra.mxu0 %v1603
      %1633 = vmatprep.subr.bf16.mxu0 0
      %1634 = vmatpush2.bf16.xpose.msra.mxu0 0
      %1635 = vmatprep.subr.bf16.mxu0 0
      %1636 = vmatpush2.bf16.xpose.msra.mxu0 0
      %1637 = vmatprep.subr.bf16.mxu0 0
      %1638 = vmatpush2.bf16.xpose.msra.mxu0 0
      %1639 = vmatprep.subr.bf16.mxu0 0
      %1640 = vmatpush2.bf16.xpose.msra.mxu0 0
      %1641 = vmatprep.subr.bf16.mxu0 0
      %1642 = vmatpush2.bf16.xpose.msra.mxu0 0
      %1643 = vmatprep.subr.bf16.mxu0 0
      %1644 = vmatpush2.bf16.xpose.msra.mxu0 0
      %1645 = vmatprep.subr.bf16.mxu0 0
      %1646 = vmatpush2.bf16.xpose.msra.mxu0 0
      %1647 = vmatprep.subr.bf16.mxu0 0
      %1648 = vmatpush2.bf16.xpose.msra.mxu0 0
      %1649 = vmatprep.mubr.bf16.mxu0 0
      %1650 = vmatmul.mubr.bf16.gmra.mxu0 %v1588
      %v1651 = vpop.f32.mrf.mxu0
      %v1652 = vadd.f32 0.0, %v1651
      %v1653 = vpop.f32.mrf.mxu0
      %v1654 = vpop.f32.mrf.mxu0
      %v1655 = vadd.f32 0.0, %v1654
      %v1656 = vpop.f32.mrf.mxu0
      %1657 = vmatprep.mubr.bf16.mxu0 0
      %1658 = vmatmul.mubr.bf16.gmra.mxu0 %v1591
      %v1659 = vpop.f32.mrf.mxu0
      %v1660 = vadd.f32 0.0, %v1659
      %v1661 = vpop.f32.mrf.mxu0
      %v1662 = vpop.f32.mrf.mxu0
      %v1663 = vadd.f32 0.0, %v1662
      %v1664 = vpop.f32.mrf.mxu0
      %1665 = vmatprep.mubr.bf16.mxu0 0
      %1666 = vmatmul.mubr.bf16.gmra.mxu0 %v1594
      %v1667 = vpop.f32.mrf.mxu0
      %v1668 = vadd.f32 0.0, %v1667
      %v1669 = vpop.f32.mrf.mxu0
      %v1670 = vpop.f32.mrf.mxu0
      %v1671 = vadd.f32 0.0, %v1670
      %v1672 = vpop.f32.mrf.mxu0
      %1673 = vmatprep.mubr.bf16.mxu0 0
      %1674 = vmatmul.mubr.bf16.gmra.mxu0 %v1597
      %v1675 = vpop.f32.mrf.mxu0
      %v1676 = vadd.f32 0.0, %v1675
      %v1677 = vpop.f32.mrf.mxu0
      %v1678 = vpop.f32.mrf.mxu0
      %v1679 = vadd.f32 0.0, %v1678
      %v1680 = vpop.f32.mrf.mxu0
      %1681 = vmatprep.mubr.bf16.mxu0 0
      %1682 = vmatmul.mubr.bf16.gmra.mxu0 %v1600
      %v1683 = vpop.f32.mrf.mxu0
      %v1684 = vadd.f32 0.0, %v1683
      %v1685 = vpop.f32.mrf.mxu0
      %v1686 = vpop.f32.mrf.mxu0
      %v1687 = vpop.f32.mrf.mxu0
      %1688 = vdwg.mxu0
      %vm1689 = vcmask 539648
      %v1690 = vsel %vm1689, %v1652, -inf
      %1691 = vmax.xlane.f32.xlu0 %v1690
      %v1692 = vpop.xlane.xlu0 %1691
      %v1693 = vsel %vm1689, %v1655, -inf
      %1694 = vmax.xlane.f32.xlu0 %v1693
      %v1695 = vpop.xlane.xlu0 %1694
      %v1696 = vsel %vm1689, %v1660, -inf
      %1697 = vmax.xlane.f32.xlu0 %v1696
      %v1698 = vpop.xlane.xlu0 %1697
      %v1699 = vsel %vm1689, %v1663, -inf
      %1700 = vmax.xlane.f32.xlu0 %v1699
      %v1701 = vpop.xlane.xlu0 %1700
      %v1702 = vsel %vm1689, %v1668, -inf
      %1703 = vmax.xlane.f32.xlu0 %v1702
      %v1704 = vpop.xlane.xlu0 %1703
      %v1705 = vsel %vm1689, %v1671, -inf
      %1706 = vmax.xlane.f32.xlu0 %v1705
      %v1707 = vpop.xlane.xlu0 %1706
      %v1708 = vsel %vm1689, %v1676, -inf
      %1709 = vmax.xlane.f32.xlu0 %v1708
      %v1710 = vpop.xlane.xlu0 %1709
      %v1711 = vsel %vm1689, %v1679, -inf
      %1712 = vmax.xlane.f32.xlu0 %v1711
      %v1713 = vpop.xlane.xlu0 %1712
      %vm1714 = vcmask 533504
      %v1715 = vsel %vm1714, %v1684, -inf
      %1716 = vmax.xlane.f32.xlu0 %v1715
      %v1717 = vpop.xlane.xlu0 %1716
      %v1718 = vsub.f32 %v1652, %v1692
      %v1719 = vsub.f32 %v1655, %v1695
      %v1720 = vsub.f32 %v1660, %v1698
      %v1721 = vsub.f32 %v1663, %v1701
      %v1722 = vsub.f32 %v1668, %v1704
      %v1723 = vsub.f32 %v1671, %v1707
      %v1724 = vsub.f32 %v1676, %v1710
      %v1725 = vsub.f32 %v1679, %v1713
      %v1726 = vsub.f32 %v1684, %v1717
      %v1727 = vmul.f32 %v1718, 1.442695
      %v1728 = vpow.pop %v1727
      %v1729 = vmul.f32 %v1719, 1.442695
      %v1730 = vpow.pop %v1729
      %v1731 = vmul.f32 %v1720, 1.442695
      %v1732 = vpow.pop %v1731
      %v1733 = vmul.f32 %v1721, 1.442695
      %v1734 = vpow.pop %v1733
      %v1735 = vmul.f32 %v1722, 1.442695
      %v1736 = vpow.pop %v1735
      %v1737 = vmul.f32 %v1723, 1.442695
      %v1738 = vpow.pop %v1737
      %v1739 = vmul.f32 %v1724, 1.442695
      %v1740 = vpow.pop %v1739
      %v1741 = vmul.f32 %v1725, 1.442695
      %v1742 = vpow.pop %v1741
      %v1743 = vmul.f32 %v1726, 1.442695
      %v1744 = vpow.pop %v1743
      %v1745 = vsel %vm1689, %v1728, 0.0
      %1746 = vadd.xlane.f32.xlu0 %v1745
      %v1747 = vpop.xlane.xlu0 %1746
      %v1748 = vsel %vm1689, %v1730, 0.0
      %1749 = vadd.xlane.f32.xlu0 %v1748
      %v1750 = vpop.xlane.xlu0 %1749
      %v1751 = vsel %vm1689, %v1732, 0.0
      %1752 = vadd.xlane.f32.xlu0 %v1751
      %v1753 = vpop.xlane.xlu0 %1752
      %v1754 = vsel %vm1689, %v1734, 0.0
      %1755 = vadd.xlane.f32.xlu0 %v1754
      %v1756 = vpop.xlane.xlu0 %1755
      %v1757 = vsel %vm1689, %v1736, 0.0
      %1758 = vadd.xlane.f32.xlu0 %v1757
      %v1759 = vpop.xlane.xlu0 %1758
      %v1760 = vsel %vm1689, %v1738, 0.0
      %1761 = vadd.xlane.f32.xlu0 %v1760
      %v1762 = vpop.xlane.xlu0 %1761
      %v1763 = vsel %vm1689, %v1740, 0.0
      %1764 = vadd.xlane.f32.xlu0 %v1763
      %v1765 = vpop.xlane.xlu0 %1764
      %v1766 = vsel %vm1689, %v1742, 0.0
      %1767 = vadd.xlane.f32.xlu0 %v1766
      %v1768 = vpop.xlane.xlu0 %1767
      %v1769 = vsel %vm1714, %v1744, 0.0
      %1770 = vadd.xlane.f32.xlu0 %v1769
      %v1771 = vpop.xlane.xlu0 %1770
      %v1772 = vrcp.pop %v1747
      %v1773 = vrcp.pop %v1750
      %v1774 = vrcp.pop %v1753
      %v1775 = vrcp.pop %v1756
      %v1776 = vrcp.pop %v1759
      %v1777 = vrcp.pop %v1762
      %v1778 = vrcp.pop %v1765
      %v1779 = vrcp.pop %v1768
      %v1780 = vrcp.pop %v1771
      %v1781 = vmul.f32 %v1728, %v1772
      %v1782 = vmul.f32 %v1730, %v1773
      %v1783 = vmul.f32 %v1732, %v1774
      %v1784 = vmul.f32 %v1734, %v1775
      %v1785 = vmul.f32 %v1736, %v1776
      %v1786 = vmul.f32 %v1738, %v1777
      %v1787 = vmul.f32 %v1740, %v1778
      %v1788 = vmul.f32 %v1742, %v1779
      %v1789 = vmul.f32 %v1744, %v1780
      %v1790 = vpack.c.bf16 %v1782, %v1781
      %v1791 = vpack.c.bf16 %v1784, %v1783
      %v1792 = vpack.c.bf16 %v1786, %v1785
      %v1793 = vpack.c.bf16 %v1788, %v1787
      %v1794 = vpack.c.bf16 %v1789, %v1789
      %v1804 = vunpack.c.l.b16 %v199
      %v1805 = vunpack.c.l.b16 %v200
      %v1806 = vunpack.c.l.b16 %v201
      %v1807 = vunpack.c.l.b16 %v202
      %v1808 = vunpack.c.l.b16 %v203
      %v1809 = vunpack.c.l.b16 %v204
      %v1810 = vunpack.c.l.b16 %v205
      %v1811 = vunpack.c.l.b16 %v206
      %v1812 = vunpack.c.l.b16 %v207
      %v1813 = vpack.c.b16 %v1805, %v1804
      %v1814 = vpack.c.b16 %v1807, %v1806
      %v1815 = vpack.c.b16 %v1809, %v1808
      %v1816 = vpack.c.b16 %v1811, %v1810
      %v1817 = vpack.c.b16 %v1812, %v1812
      %1818 = vrot.lane.b32.xlu0 %v1813, 64
      %v1819 = vpop.permute.xlu0 %1818
      %1820 = vrot.lane.b32.xlu0 %v1814, 64
      %v1821 = vpop.permute.xlu0 %1820
      %1822 = vrot.lane.b32.xlu0 %v1815, 64
      %v1823 = vpop.permute.xlu0 %1822
      %1824 = vrot.lane.b32.xlu0 %v1816, 64
      %v1825 = vpop.permute.xlu0 %1824
      %1826 = vrot.lane.b32.xlu0 %v1817, 64
      %v1827 = vpop.permute.xlu0 %1826
      %v1833 = vsel %vm1689, %v1790, 0
      %v1836 = vsel %vm1689, %v1791, 0
      %v1839 = vsel %vm1689, %v1792, 0
      %v1842 = vsel %vm1689, %v1793, 0
      %v1845 = vsel %vm1689, %v1794, 0
      %vm1847 = vcmask 1040384
      %v1849 = vsel %vm1847, %v1827, 0
      %1851 = vmatprep.subr.bf16.mxu0 0
      %1852 = vmatpush1.bf16.msra.mxu0 0
      %1853 = vmatprep.subr.bf16.mxu0 0
      %1854 = vmatpush1.bf16.msra.mxu0 0
      %1855 = vmatprep.subr.bf16.mxu0 0
      %1856 = vmatpush1.bf16.msra.mxu0 0
      %1857 = vmatprep.subr.bf16.mxu0 0
      %1858 = vmatpush1.bf16.msra.mxu0 %v1849
      %1859 = vmatprep.subr.bf16.mxu0 0
      %1860 = vmatpush1.bf16.msra.mxu0 %v1825
      %1861 = vmatprep.subr.bf16.mxu0 0
      %1862 = vmatpush1.bf16.msra.mxu0 %v1823
      %1863 = vmatprep.subr.bf16.mxu0 0
      %1864 = vmatpush1.bf16.msra.mxu0 %v1821
      %1865 = vmatprep.subr.bf16.mxu0 0
      %1866 = vmatpush1.bf16.msra.mxu0 %v1819
      %1867 = vmatprep.subr.bf16.mxu0 0
      %1868 = vmatpush2.bf16.msra.mxu0 0
      %1869 = vmatprep.subr.bf16.mxu0 0
      %1870 = vmatpush2.bf16.msra.mxu0 0
      %1871 = vmatprep.subr.bf16.mxu0 0
      %1872 = vmatpush2.bf16.msra.mxu0 0
      %1873 = vmatprep.subr.bf16.mxu0 0
      %1874 = vmatpush2.bf16.msra.mxu0 0
      %1875 = vmatprep.subr.bf16.mxu0 0
      %1876 = vmatpush2.bf16.msra.mxu0 0
      %1877 = vmatprep.subr.bf16.mxu0 0
      %1878 = vmatpush2.bf16.msra.mxu0 0
      %1879 = vmatprep.subr.bf16.mxu0 0
      %1880 = vmatpush2.bf16.msra.mxu0 0
      %1881 = vmatprep.subr.bf16.mxu0 0
      %1882 = vmatpush2.bf16.msra.mxu0 0
      %1883 = vmatprep.mubr.bf16.mxu0 0
      %1884 = vmatmul.mubr.bf16.gmra.mxu0 %v1833
      %v1885 = vpop.f32.mrf.mxu0
      %v1886 = vadd.f32 0.0, %v1885
      %v1887 = vpop.f32.mrf.mxu0
      %v1888 = vpop.f32.mrf.mxu0
      %v1889 = vadd.f32 0.0, %v1888
      %v1890 = vpop.f32.mrf.mxu0
      %1891 = vmatprep.mubr.bf16.mxu0 0
      %1892 = vmatmul.mubr.bf16.gmra.mxu0 %v1836
      %v1893 = vpop.f32.mrf.mxu0
      %v1894 = vadd.f32 0.0, %v1893
      %v1895 = vpop.f32.mrf.mxu0
      %v1896 = vpop.f32.mrf.mxu0
      %v1897 = vadd.f32 0.0, %v1896
      %v1898 = vpop.f32.mrf.mxu0
      %1899 = vmatprep.mubr.bf16.mxu0 0
      %1900 = vmatmul.mubr.bf16.gmra.mxu0 %v1839
      %v1901 = vpop.f32.mrf.mxu0
      %v1902 = vadd.f32 0.0, %v1901
      %v1903 = vpop.f32.mrf.mxu0
      %v1904 = vpop.f32.mrf.mxu0
      %v1905 = vadd.f32 0.0, %v1904
      %v1906 = vpop.f32.mrf.mxu0
      %1907 = vmatprep.mubr.bf16.mxu0 0
      %1908 = vmatmul.mubr.bf16.gmra.mxu0 %v1842
      %v1909 = vpop.f32.mrf.mxu0
      %v1910 = vadd.f32 0.0, %v1909
      %v1911 = vpop.f32.mrf.mxu0
      %v1912 = vpop.f32.mrf.mxu0
      %v1913 = vadd.f32 0.0, %v1912
      %v1914 = vpop.f32.mrf.mxu0
      %1915 = vmatprep.mubr.bf16.mxu0 0
      %1916 = vmatmul.mubr.bf16.gmra.mxu0 %v1845
      %v1917 = vpop.f32.mrf.mxu0
      %v1918 = vadd.f32 0.0, %v1917
      %v1919 = vpop.f32.mrf.mxu0
      %v1920 = vpop.f32.mrf.mxu0
      %v1921 = vpop.f32.mrf.mxu0
      %1922 = vdwg.mxu0
      %1928 = vrot.lane.b32.xlu0 %v844, 120
      %v1929 = vpop.permute.xlu0 %1928
      %1930 = vrot.lane.b32.xlu0 %v845, 120
      %v1931 = vpop.permute.xlu0 %1930
      %1932 = vrot.lane.b32.xlu0 %v846, 120
      %v1933 = vpop.permute.xlu0 %1932
      %1934 = vrot.lane.b32.xlu0 %v847, 120
      %v1935 = vpop.permute.xlu0 %1934
      %1936 = vrot.lane.b32.xlu0 %v848, 120
      %v1937 = vpop.permute.xlu0 %1936
      %1938 = vrot.lane.b32.xlu0 %v1566, 88
      %v1939 = vpop.permute.xlu0 %1938
      %1940 = vrot.lane.b32.xlu0 %v1567, 88
      %v1941 = vpop.permute.xlu0 %1940
      %1942 = vrot.lane.b32.xlu0 %v1568, 88
      %v1943 = vpop.permute.xlu0 %1942
      %1944 = vrot.lane.b32.xlu0 %v1569, 88
      %v1945 = vpop.permute.xlu0 %1944
      %1946 = vrot.lane.b32.xlu0 %v1570, 88
      %v1947 = vpop.permute.xlu0 %1946
      %v1949 = vsel %vm1586, %v1929, 0
      %v1952 = vsel %vm1586, %v1931, 0
      %v1955 = vsel %vm1586, %v1933, 0
      %v1958 = vsel %vm1586, %v1935, 0
      %v1961 = vsel %vm1586, %v1937, 0
      %v1964 = vsel %vm1586, %v1939, 0
      %v1967 = vsel %vm1586, %v1941, 0
      %v1970 = vsel %vm1586, %v1943, 0
      %v1973 = vsel %vm1586, %v1945, 0
      %v1976 = vsel %vm1586, %v1947, 0
      %1978 = vmatprep.subr.bf16.mxu0 0
      %1979 = vmatpush1.bf16.xpose.msra.mxu0 0
      %1980 = vmatprep.subr.bf16.mxu0 0
      %1981 = vmatpush1.bf16.xpose.msra.mxu0 0
      %1982 = vmatprep.subr.bf16.mxu0 0
      %1983 = vmatpush1.bf16.xpose.msra.mxu0 0
      %1984 = vmatprep.subr.bf16.mxu0 0
      %1985 = vmatpush1.bf16.xpose.msra.mxu0 %v1976
      %1986 = vmatprep.subr.bf16.mxu0 0
      %1987 = vmatpush1.bf16.xpose.msra.mxu0 %v1973
      %1988 = vmatprep.subr.bf16.mxu0 0
      %1989 = vmatpush1.bf16.xpose.msra.mxu0 %v1970
      %1990 = vmatprep.subr.bf16.mxu0 0
      %1991 = vmatpush1.bf16.xpose.msra.mxu0 %v1967
      %1992 = vmatprep.subr.bf16.mxu0 0
      %1993 = vmatpush1.bf16.xpose.msra.mxu0 %v1964
      %1994 = vmatprep.subr.bf16.mxu0 0
      %1995 = vmatpush2.bf16.xpose.msra.mxu0 0
      %1996 = vmatprep.subr.bf16.mxu0 0
      %1997 = vmatpush2.bf16.xpose.msra.mxu0 0
      %1998 = vmatprep.subr.bf16.mxu0 0
      %1999 = vmatpush2.bf16.xpose.msra.mxu0 0
      %2000 = vmatprep.subr.bf16.mxu0 0
      %2001 = vmatpush2.bf16.xpose.msra.mxu0 0
      %2002 = vmatprep.subr.bf16.mxu0 0
      %2003 = vmatpush2.bf16.xpose.msra.mxu0 0
      %2004 = vmatprep.subr.bf16.mxu0 0
      %2005 = vmatpush2.bf16.xpose.msra.mxu0 0
      %2006 = vmatprep.subr.bf16.mxu0 0
      %2007 = vmatpush2.bf16.xpose.msra.mxu0 0
      %2008 = vmatprep.subr.bf16.mxu0 0
      %2009 = vmatpush2.bf16.xpose.msra.mxu0 0
      %2010 = vmatprep.mubr.bf16.mxu0 0
      %2011 = vmatmul.mubr.bf16.gmra.mxu0 %v1949
      %v2012 = vpop.f32.mrf.mxu0
      %v2013 = vadd.f32 0.0, %v2012
      %v2014 = vpop.f32.mrf.mxu0
      %v2015 = vpop.f32.mrf.mxu0
      %v2016 = vadd.f32 0.0, %v2015
      %v2017 = vpop.f32.mrf.mxu0
      %2018 = vmatprep.mubr.bf16.mxu0 0
      %2019 = vmatmul.mubr.bf16.gmra.mxu0 %v1952
      %v2020 = vpop.f32.mrf.mxu0
      %v2021 = vadd.f32 0.0, %v2020
      %v2022 = vpop.f32.mrf.mxu0
      %v2023 = vpop.f32.mrf.mxu0
      %v2024 = vadd.f32 0.0, %v2023
      %v2025 = vpop.f32.mrf.mxu0
      %2026 = vmatprep.mubr.bf16.mxu0 0
      %2027 = vmatmul.mubr.bf16.gmra.mxu0 %v1955
      %v2028 = vpop.f32.mrf.mxu0
      %v2029 = vadd.f32 0.0, %v2028
      %v2030 = vpop.f32.mrf.mxu0
      %v2031 = vpop.f32.mrf.mxu0
      %v2032 = vadd.f32 0.0, %v2031
      %v2033 = vpop.f32.mrf.mxu0
      %2034 = vmatprep.mubr.bf16.mxu0 0
      %2035 = vmatmul.mubr.bf16.gmra.mxu0 %v1958
      %v2036 = vpop.f32.mrf.mxu0
      %v2037 = vadd.f32 0.0, %v2036
      %v2038 = vpop.f32.mrf.mxu0
      %v2039 = vpop.f32.mrf.mxu0
      %v2040 = vadd.f32 0.0, %v2039
      %v2041 = vpop.f32.mrf.mxu0
      %2042 = vmatprep.mubr.bf16.mxu0 0
      %2043 = vmatmul.mubr.bf16.gmra.mxu0 %v1961
      %v2044 = vpop.f32.mrf.mxu0
      %v2045 = vadd.f32 0.0, %v2044
      %v2046 = vpop.f32.mrf.mxu0
      %v2047 = vpop.f32.mrf.mxu0
      %v2048 = vpop.f32.mrf.mxu0
      %2049 = vdwg.mxu0
      %v2050 = vsel %vm1689, %v2013, -inf
      %2051 = vmax.xlane.f32.xlu0 %v2050
      %v2052 = vpop.xlane.xlu0 %2051
      %v2053 = vsel %vm1689, %v2016, -inf
      %2054 = vmax.xlane.f32.xlu0 %v2053
      %v2055 = vpop.xlane.xlu0 %2054
      %v2056 = vsel %vm1689, %v2021, -inf
      %2057 = vmax.xlane.f32.xlu0 %v2056
      %v2058 = vpop.xlane.xlu0 %2057
      %v2059 = vsel %vm1689, %v2024, -inf
      %2060 = vmax.xlane.f32.xlu0 %v2059
      %v2061 = vpop.xlane.xlu0 %2060
      %v2062 = vsel %vm1689, %v2029, -inf
      %2063 = vmax.xlane.f32.xlu0 %v2062
      %v2064 = vpop.xlane.xlu0 %2063
      %v2065 = vsel %vm1689, %v2032, -inf
      %2066 = vmax.xlane.f32.xlu0 %v2065
      %v2067 = vpop.xlane.xlu0 %2066
      %v2068 = vsel %vm1689, %v2037, -inf
      %2069 = vmax.xlane.f32.xlu0 %v2068
      %v2070 = vpop.xlane.xlu0 %2069
      %v2071 = vsel %vm1689, %v2040, -inf
      %2072 = vmax.xlane.f32.xlu0 %v2071
      %v2073 = vpop.xlane.xlu0 %2072
      %v2074 = vsel %vm1714, %v2045, -inf
      %2075 = vmax.xlane.f32.xlu0 %v2074
      %v2076 = vpop.xlane.xlu0 %2075
      %v2077 = vsub.f32 %v2013, %v2052
      %v2078 = vsub.f32 %v2016, %v2055
      %v2079 = vsub.f32 %v2021, %v2058
      %v2080 = vsub.f32 %v2024, %v2061
      %v2081 = vsub.f32 %v2029, %v2064
      %v2082 = vsub.f32 %v2032, %v2067
      %v2083 = vsub.f32 %v2037, %v2070
      %v2084 = vsub.f32 %v2040, %v2073
      %v2085 = vsub.f32 %v2045, %v2076
      %v2086 = vmul.f32 %v2077, 1.442695
      %v2087 = vpow.pop %v2086
      %v2088 = vmul.f32 %v2078, 1.442695
      %v2089 = vpow.pop %v2088
      %v2090 = vmul.f32 %v2079, 1.442695
      %v2091 = vpow.pop %v2090
      %v2092 = vmul.f32 %v2080, 1.442695
      %v2093 = vpow.pop %v2092
      %v2094 = vmul.f32 %v2081, 1.442695
      %v2095 = vpow.pop %v2094
      %v2096 = vmul.f32 %v2082, 1.442695
      %v2097 = vpow.pop %v2096
      %v2098 = vmul.f32 %v2083, 1.442695
      %v2099 = vpow.pop %v2098
      %v2100 = vmul.f32 %v2084, 1.442695
      %v2101 = vpow.pop %v2100
      %v2102 = vmul.f32 %v2085, 1.442695
      %v2103 = vpow.pop %v2102
      %v2104 = vsel %vm1689, %v2087, 0.0
      %2105 = vadd.xlane.f32.xlu0 %v2104
      %v2106 = vpop.xlane.xlu0 %2105
      %v2107 = vsel %vm1689, %v2089, 0.0
      %2108 = vadd.xlane.f32.xlu0 %v2107
      %v2109 = vpop.xlane.xlu0 %2108
      %v2110 = vsel %vm1689, %v2091, 0.0
      %2111 = vadd.xlane.f32.xlu0 %v2110
      %v2112 = vpop.xlane.xlu0 %2111
      %v2113 = vsel %vm1689, %v2093, 0.0
      %2114 = vadd.xlane.f32.xlu0 %v2113
      %v2115 = vpop.xlane.xlu0 %2114
      %v2116 = vsel %vm1689, %v2095, 0.0
      %2117 = vadd.xlane.f32.xlu0 %v2116
      %v2118 = vpop.xlane.xlu0 %2117
      %v2119 = vsel %vm1689, %v2097, 0.0
      %2120 = vadd.xlane.f32.xlu0 %v2119
      %v2121 = vpop.xlane.xlu0 %2120
      %v2122 = vsel %vm1689, %v2099, 0.0
      %2123 = vadd.xlane.f32.xlu0 %v2122
      %v2124 = vpop.xlane.xlu0 %2123
      %v2125 = vsel %vm1689, %v2101, 0.0
      %2126 = vadd.xlane.f32.xlu0 %v2125
      %v2127 = vpop.xlane.xlu0 %2126
      %v2128 = vsel %vm1714, %v2103, 0.0
      %2129 = vadd.xlane.f32.xlu0 %v2128
      %v2130 = vpop.xlane.xlu0 %2129
      %v2131 = vrcp.pop %v2106
      %v2132 = vrcp.pop %v2109
      %v2133 = vrcp.pop %v2112
      %v2134 = vrcp.pop %v2115
      %v2135 = vrcp.pop %v2118
      %v2136 = vrcp.pop %v2121
      %v2137 = vrcp.pop %v2124
      %v2138 = vrcp.pop %v2127
      %v2139 = vrcp.pop %v2130
      %v2140 = vmul.f32 %v2087, %v2131
      %v2141 = vmul.f32 %v2089, %v2132
      %v2142 = vmul.f32 %v2091, %v2133
      %v2143 = vmul.f32 %v2093, %v2134
      %v2144 = vmul.f32 %v2095, %v2135
      %v2145 = vmul.f32 %v2097, %v2136
      %v2146 = vmul.f32 %v2099, %v2137
      %v2147 = vmul.f32 %v2101, %v2138
      %v2148 = vmul.f32 %v2103, %v2139
      %v2149 = vpack.c.bf16 %v2141, %v2140
      %v2150 = vpack.c.bf16 %v2143, %v2142
      %v2151 = vpack.c.bf16 %v2145, %v2144
      %v2152 = vpack.c.bf16 %v2147, %v2146
      %v2153 = vpack.c.bf16 %v2148, %v2148
      %2154 = vrot.lane.b32.xlu0 %v1813, 56
      %v2155 = vpop.permute.xlu0 %2154
      %2156 = vrot.lane.b32.xlu0 %v1814, 56
      %v2157 = vpop.permute.xlu0 %2156
      %2158 = vrot.lane.b32.xlu0 %v1815, 56
      %v2159 = vpop.permute.xlu0 %2158
      %2160 = vrot.lane.b32.xlu0 %v1816, 56
      %v2161 = vpop.permute.xlu0 %2160
      %2162 = vrot.lane.b32.xlu0 %v1817, 56
      %v2163 = vpop.permute.xlu0 %2162
      %v2169 = vsel %vm1689, %v2149, 0
      %v2172 = vsel %vm1689, %v2150, 0
      %v2175 = vsel %vm1689, %v2151, 0
      %v2178 = vsel %vm1689, %v2152, 0
      %v2181 = vsel %vm1689, %v2153, 0
      %v2184 = vsel %vm1847, %v2163, 0
      %2186 = vmatprep.subr.bf16.mxu0 0
      %2187 = vmatpush1.bf16.msra.mxu0 0
      %2188 = vmatprep.subr.bf16.mxu0 0
      %2189 = vmatpush1.bf16.msra.mxu0 0
      %2190 = vmatprep.subr.bf16.mxu0 0
      %2191 = vmatpush1.bf16.msra.mxu0 0
      %2192 = vmatprep.subr.bf16.mxu0 0
      %2193 = vmatpush1.bf16.msra.mxu0 %v2184
      %2194 = vmatprep.subr.bf16.mxu0 0
      %2195 = vmatpush1.bf16.msra.mxu0 %v2161
      %2196 = vmatprep.subr.bf16.mxu0 0
      %2197 = vmatpush1.bf16.msra.mxu0 %v2159
      %2198 = vmatprep.subr.bf16.mxu0 0
      %2199 = vmatpush1.bf16.msra.mxu0 %v2157
      %2200 = vmatprep.subr.bf16.mxu0 0
      %2201 = vmatpush1.bf16.msra.mxu0 %v2155
      %2202 = vmatprep.subr.bf16.mxu0 0
      %2203 = vmatpush2.bf16.msra.mxu0 0
      %2204 = vmatprep.subr.bf16.mxu0 0
      %2205 = vmatpush2.bf16.msra.mxu0 0
      %2206 = vmatprep.subr.bf16.mxu0 0
      %2207 = vmatpush2.bf16.msra.mxu0 0
      %2208 = vmatprep.subr.bf16.mxu0 0
      %2209 = vmatpush2.bf16.msra.mxu0 0
      %2210 = vmatprep.subr.bf16.mxu0 0
      %2211 = vmatpush2.bf16.msra.mxu0 0
      %2212 = vmatprep.subr.bf16.mxu0 0
      %2213 = vmatpush2.bf16.msra.mxu0 0
      %2214 = vmatprep.subr.bf16.mxu0 0
      %2215 = vmatpush2.bf16.msra.mxu0 0
      %2216 = vmatprep.subr.bf16.mxu0 0
      %2217 = vmatpush2.bf16.msra.mxu0 0
      %2218 = vmatprep.mubr.bf16.mxu0 0
      %2219 = vmatmul.mubr.bf16.gmra.mxu0 %v2169
      %v2220 = vpop.f32.mrf.mxu0
      %v2221 = vadd.f32 0.0, %v2220
      %v2222 = vpop.f32.mrf.mxu0
      %v2223 = vpop.f32.mrf.mxu0
      %v2224 = vadd.f32 0.0, %v2223
      %v2225 = vpop.f32.mrf.mxu0
      %2226 = vmatprep.mubr.bf16.mxu0 0
      %2227 = vmatmul.mubr.bf16.gmra.mxu0 %v2172
      %v2228 = vpop.f32.mrf.mxu0
      %v2229 = vadd.f32 0.0, %v2228
      %v2230 = vpop.f32.mrf.mxu0
      %v2231 = vpop.f32.mrf.mxu0
      %v2232 = vadd.f32 0.0, %v2231
      %v2233 = vpop.f32.mrf.mxu0
      %2234 = vmatprep.mubr.bf16.mxu0 0
      %2235 = vmatmul.mubr.bf16.gmra.mxu0 %v2175
      %v2236 = vpop.f32.mrf.mxu0
      %v2237 = vadd.f32 0.0, %v2236
      %v2238 = vpop.f32.mrf.mxu0
      %v2239 = vpop.f32.mrf.mxu0
      %v2240 = vadd.f32 0.0, %v2239
      %v2241 = vpop.f32.mrf.mxu0
      %2242 = vmatprep.mubr.bf16.mxu0 0
      %2243 = vmatmul.mubr.bf16.gmra.mxu0 %v2178
      %v2244 = vpop.f32.mrf.mxu0
      %v2245 = vadd.f32 0.0, %v2244
      %v2246 = vpop.f32.mrf.mxu0
      %v2247 = vpop.f32.mrf.mxu0
      %v2248 = vadd.f32 0.0, %v2247
      %v2249 = vpop.f32.mrf.mxu0
      %2250 = vmatprep.mubr.bf16.mxu0 0
      %2251 = vmatmul.mubr.bf16.gmra.mxu0 %v2181
      %v2252 = vpop.f32.mrf.mxu0
      %v2253 = vadd.f32 0.0, %v2252
      %v2254 = vpop.f32.mrf.mxu0
      %v2255 = vpop.f32.mrf.mxu0
      %v2256 = vpop.f32.mrf.mxu0
      %2257 = vdwg.mxu0
      %2258 = vrot.lane.b32.xlu0 %v844, 112
      %v2259 = vpop.permute.xlu0 %2258
      %2260 = vrot.lane.b32.xlu0 %v845, 112
      %v2261 = vpop.permute.xlu0 %2260
      %2262 = vrot.lane.b32.xlu0 %v846, 112
      %v2263 = vpop.permute.xlu0 %2262
      %2264 = vrot.lane.b32.xlu0 %v847, 112
      %v2265 = vpop.permute.xlu0 %2264
      %2266 = vrot.lane.b32.xlu0 %v848, 112
      %v2267 = vpop.permute.xlu0 %2266
      %2268 = vrot.lane.b32.xlu0 %v1566, 80
      %v2269 = vpop.permute.xlu0 %2268
      %2270 = vrot.lane.b32.xlu0 %v1567, 80
      %v2271 = vpop.permute.xlu0 %2270
      %2272 = vrot.lane.b32.xlu0 %v1568, 80
      %v2273 = vpop.permute.xlu0 %2272
      %2274 = vrot.lane.b32.xlu0 %v1569, 80
      %v2275 = vpop.permute.xlu0 %2274
      %2276 = vrot.lane.b32.xlu0 %v1570, 80
      %v2277 = vpop.permute.xlu0 %2276
      %v2279 = vsel %vm1586, %v2259, 0
      %v2282 = vsel %vm1586, %v2261, 0
      %v2285 = vsel %vm1586, %v2263, 0
      %v2288 = vsel %vm1586, %v2265, 0
      %v2291 = vsel %vm1586, %v2267, 0
      %v2294 = vsel %vm1586, %v2269, 0
      %v2297 = vsel %vm1586, %v2271, 0
      %v2300 = vsel %vm1586, %v2273, 0
      %v2303 = vsel %vm1586, %v2275, 0
      %v2306 = vsel %vm1586, %v2277, 0
      %2308 = vmatprep.subr.bf16.mxu0 0
      %2309 = vmatpush1.bf16.xpose.msra.mxu0 0
      %2310 = vmatprep.subr.bf16.mxu0 0
      %2311 = vmatpush1.bf16.xpose.msra.mxu0 0
      %2312 = vmatprep.subr.bf16.mxu0 0
      %2313 = vmatpush1.bf16.xpose.msra.mxu0 0
      %2314 = vmatprep.subr.bf16.mxu0 0
      %2315 = vmatpush1.bf16.xpose.msra.mxu0 %v2306
      %2316 = vmatprep.subr.bf16.mxu0 0
      %2317 = vmatpush1.bf16.xpose.msra.mxu0 %v2303
      %2318 = vmatprep.subr.bf16.mxu0 0
      %2319 = vmatpush1.bf16.xpose.msra.mxu0 %v2300
      %2320 = vmatprep.subr.bf16.mxu0 0
      %2321 = vmatpush1.bf16.xpose.msra.mxu0 %v2297
      %2322 = vmatprep.subr.bf16.mxu0 0
      %2323 = vmatpush1.bf16.xpose.msra.mxu0 %v2294
      %2324 = vmatprep.subr.bf16.mxu0 0
      %2325 = vmatpush2.bf16.xpose.msra.mxu0 0
      %2326 = vmatprep.subr.bf16.mxu0 0
      %2327 = vmatpush2.bf16.xpose.msra.mxu0 0
      %2328 = vmatprep.subr.bf16.mxu0 0
      %2329 = vmatpush2.bf16.xpose.msra.mxu0 0
      %2330 = vmatprep.subr.bf16.mxu0 0
      %2331 = vmatpush2.bf16.xpose.msra.mxu0 0
      %2332 = vmatprep.subr.bf16.mxu0 0
      %2333 = vmatpush2.bf16.xpose.msra.mxu0 0
      %2334 = vmatprep.subr.bf16.mxu0 0
      %2335 = vmatpush2.bf16.xpose.msra.mxu0 0
      %2336 = vmatprep.subr.bf16.mxu0 0
      %2337 = vmatpush2.bf16.xpose.msra.mxu0 0
      %2338 = vmatprep.subr.bf16.mxu0 0
      %2339 = vmatpush2.bf16.xpose.msra.mxu0 0
      %2340 = vmatprep.mubr.bf16.mxu0 0
      %2341 = vmatmul.mubr.bf16.gmra.mxu0 %v2279
      %v2342 = vpop.f32.mrf.mxu0
      %v2343 = vadd.f32 0.0, %v2342
      %v2344 = vpop.f32.mrf.mxu0
      %v2345 = vpop.f32.mrf.mxu0
      %v2346 = vadd.f32 0.0, %v2345
      %v2347 = vpop.f32.mrf.mxu0
      %2348 = vmatprep.mubr.bf16.mxu0 0
      %2349 = vmatmul.mubr.bf16.gmra.mxu0 %v2282
      %v2350 = vpop.f32.mrf.mxu0
      %v2351 = vadd.f32 0.0, %v2350
      %v2352 = vpop.f32.mrf.mxu0
      %v2353 = vpop.f32.mrf.mxu0
      %v2354 = vadd.f32 0.0, %v2353
      %v2355 = vpop.f32.mrf.mxu0
      %2356 = vmatprep.mubr.bf16.mxu0 0
      %2357 = vmatmul.mubr.bf16.gmra.mxu0 %v2285
      %v2358 = vpop.f32.mrf.mxu0
      %v2359 = vadd.f32 0.0, %v2358
      %v2360 = vpop.f32.mrf.mxu0
      %v2361 = vpop.f32.mrf.mxu0
      %v2362 = vadd.f32 0.0, %v2361
      %v2363 = vpop.f32.mrf.mxu0
      %2364 = vmatprep.mubr.bf16.mxu0 0
      %2365 = vmatmul.mubr.bf16.gmra.mxu0 %v2288
      %v2366 = vpop.f32.mrf.mxu0
      %v2367 = vadd.f32 0.0, %v2366
      %v2368 = vpop.f32.mrf.mxu0
      %v2369 = vpop.f32.mrf.mxu0
      %v2370 = vadd.f32 0.0, %v2369
      %v2371 = vpop.f32.mrf.mxu0
      %2372 = vmatprep.mubr.bf16.mxu0 0
      %2373 = vmatmul.mubr.bf16.gmra.mxu0 %v2291
      %v2374 = vpop.f32.mrf.mxu0
      %v2375 = vadd.f32 0.0, %v2374
      %v2376 = vpop.f32.mrf.mxu0
      %v2377 = vpop.f32.mrf.mxu0
      %v2378 = vpop.f32.mrf.mxu0
      %2379 = vdwg.mxu0
      %v2380 = vsel %vm1689, %v2343, -inf
      %2381 = vmax.xlane.f32.xlu0 %v2380
      %v2382 = vpop.xlane.xlu0 %2381
      %v2383 = vsel %vm1689, %v2346, -inf
      %2384 = vmax.xlane.f32.xlu0 %v2383
      %v2385 = vpop.xlane.xlu0 %2384
      %v2386 = vsel %vm1689, %v2351, -inf
      %2387 = vmax.xlane.f32.xlu0 %v2386
      %v2388 = vpop.xlane.xlu0 %2387
      %v2389 = vsel %vm1689, %v2354, -inf
      %2390 = vmax.xlane.f32.xlu0 %v2389
      %v2391 = vpop.xlane.xlu0 %2390
      %v2392 = vsel %vm1689, %v2359, -inf
      %2393 = vmax.xlane.f32.xlu0 %v2392
      %v2394 = vpop.xlane.xlu0 %2393
      %v2395 = vsel %vm1689, %v2362, -inf
      %2396 = vmax.xlane.f32.xlu0 %v2395
      %v2397 = vpop.xlane.xlu0 %2396
      %v2398 = vsel %vm1689, %v2367, -inf
      %2399 = vmax.xlane.f32.xlu0 %v2398
      %v2400 = vpop.xlane.xlu0 %2399
      %v2401 = vsel %vm1689, %v2370, -inf
      %2402 = vmax.xlane.f32.xlu0 %v2401
      %v2403 = vpop.xlane.xlu0 %2402
      %v2404 = vsel %vm1714, %v2375, -inf
      %2405 = vmax.xlane.f32.xlu0 %v2404
      %v2406 = vpop.xlane.xlu0 %2405
      %v2407 = vsub.f32 %v2343, %v2382
      %v2408 = vsub.f32 %v2346, %v2385
      %v2409 = vsub.f32 %v2351, %v2388
      %v2410 = vsub.f32 %v2354, %v2391
      %v2411 = vsub.f32 %v2359, %v2394
      %v2412 = vsub.f32 %v2362, %v2397
      %v2413 = vsub.f32 %v2367, %v2400
      %v2414 = vsub.f32 %v2370, %v2403
      %v2415 = vsub.f32 %v2375, %v2406
      %v2416 = vmul.f32 %v2407, 1.442695
      %v2417 = vpow.pop %v2416
      %v2418 = vmul.f32 %v2408, 1.442695
      %v2419 = vpow.pop %v2418
      %v2420 = vmul.f32 %v2409, 1.442695
      %v2421 = vpow.pop %v2420
      %v2422 = vmul.f32 %v2410, 1.442695
      %v2423 = vpow.pop %v2422
      %v2424 = vmul.f32 %v2411, 1.442695
      %v2425 = vpow.pop %v2424
      %v2426 = vmul.f32 %v2412, 1.442695
      %v2427 = vpow.pop %v2426
      %v2428 = vmul.f32 %v2413, 1.442695
      %v2429 = vpow.pop %v2428
      %v2430 = vmul.f32 %v2414, 1.442695
      %v2431 = vpow.pop %v2430
      %v2432 = vmul.f32 %v2415, 1.442695
      %v2433 = vpow.pop %v2432
      %v2434 = vsel %vm1689, %v2417, 0.0
      %2435 = vadd.xlane.f32.xlu0 %v2434
      %v2436 = vpop.xlane.xlu0 %2435
      %v2437 = vsel %vm1689, %v2419, 0.0
      %2438 = vadd.xlane.f32.xlu0 %v2437
      %v2439 = vpop.xlane.xlu0 %2438
      %v2440 = vsel %vm1689, %v2421, 0.0
      %2441 = vadd.xlane.f32.xlu0 %v2440
      %v2442 = vpop.xlane.xlu0 %2441
      %v2443 = vsel %vm1689, %v2423, 0.0
      %2444 = vadd.xlane.f32.xlu0 %v2443
      %v2445 = vpop.xlane.xlu0 %2444
      %v2446 = vsel %vm1689, %v2425, 0.0
      %2447 = vadd.xlane.f32.xlu0 %v2446
      %v2448 = vpop.xlane.xlu0 %2447
      %v2449 = vsel %vm1689, %v2427, 0.0
      %2450 = vadd.xlane.f32.xlu0 %v2449
      %v2451 = vpop.xlane.xlu0 %2450
      %v2452 = vsel %vm1689, %v2429, 0.0
      %2453 = vadd.xlane.f32.xlu0 %v2452
      %v2454 = vpop.xlane.xlu0 %2453
      %v2455 = vsel %vm1689, %v2431, 0.0
      %2456 = vadd.xlane.f32.xlu0 %v2455
      %v2457 = vpop.xlane.xlu0 %2456
      %v2458 = vsel %vm1714, %v2433, 0.0
      %2459 = vadd.xlane.f32.xlu0 %v2458
      %v2460 = vpop.xlane.xlu0 %2459
      %v2461 = vrcp.pop %v2436
      %v2462 = vrcp.pop %v2439
      %v2463 = vrcp.pop %v2442
      %v2464 = vrcp.pop %v2445
      %v2465 = vrcp.pop %v2448
      %v2466 = vrcp.pop %v2451
      %v2467 = vrcp.pop %v2454
      %v2468 = vrcp.pop %v2457
      %v2469 = vrcp.pop %v2460
      %v2470 = vmul.f32 %v2417, %v2461
      %v2471 = vmul.f32 %v2419, %v2462
      %v2472 = vmul.f32 %v2421, %v2463
      %v2473 = vmul.f32 %v2423, %v2464
      %v2474 = vmul.f32 %v2425, %v2465
      %v2475 = vmul.f32 %v2427, %v2466
      %v2476 = vmul.f32 %v2429, %v2467
      %v2477 = vmul.f32 %v2431, %v2468
      %v2478 = vmul.f32 %v2433, %v2469
      %v2479 = vpack.c.bf16 %v2471, %v2470
      %v2480 = vpack.c.bf16 %v2473, %v2472
      %v2481 = vpack.c.bf16 %v2475, %v2474
      %v2482 = vpack.c.bf16 %v2477, %v2476
      %v2483 = vpack.c.bf16 %v2478, %v2478
      %2484 = vrot.lane.b32.xlu0 %v1813, 48
      %v2485 = vpop.permute.xlu0 %2484
      %2486 = vrot.lane.b32.xlu0 %v1814, 48
      %v2487 = vpop.permute.xlu0 %2486
      %2488 = vrot.lane.b32.xlu0 %v1815, 48
      %v2489 = vpop.permute.xlu0 %2488
      %2490 = vrot.lane.b32.xlu0 %v1816, 48
      %v2491 = vpop.permute.xlu0 %2490
      %2492 = vrot.lane.b32.xlu0 %v1817, 48
      %v2493 = vpop.permute.xlu0 %2492
      %v2499 = vsel %vm1689, %v2479, 0
      %v2502 = vsel %vm1689, %v2480, 0
      %v2505 = vsel %vm1689, %v2481, 0
      %v2508 = vsel %vm1689, %v2482, 0
      %v2511 = vsel %vm1689, %v2483, 0
      %v2514 = vsel %vm1847, %v2493, 0
      %2516 = vmatprep.subr.bf16.mxu0 0
      %2517 = vmatpush1.bf16.msra.mxu0 0
      %2518 = vmatprep.subr.bf16.mxu0 0
      %2519 = vmatpush1.bf16.msra.mxu0 0
      %2520 = vmatprep.subr.bf16.mxu0 0
      %2521 = vmatpush1.bf16.msra.mxu0 0
      %2522 = vmatprep.subr.bf16.mxu0 0
      %2523 = vmatpush1.bf16.msra.mxu0 %v2514
      %2524 = vmatprep.subr.bf16.mxu0 0
      %2525 = vmatpush1.bf16.msra.mxu0 %v2491
      %2526 = vmatprep.subr.bf16.mxu0 0
      %2527 = vmatpush1.bf16.msra.mxu0 %v2489
      %2528 = vmatprep.subr.bf16.mxu0 0
      %2529 = vmatpush1.bf16.msra.mxu0 %v2487
      %2530 = vmatprep.subr.bf16.mxu0 0
      %2531 = vmatpush1.bf16.msra.mxu0 %v2485
      %2532 = vmatprep.subr.bf16.mxu0 0
      %2533 = vmatpush2.bf16.msra.mxu0 0
      %2534 = vmatprep.subr.bf16.mxu0 0
      %2535 = vmatpush2.bf16.msra.mxu0 0
      %2536 = vmatprep.subr.bf16.mxu0 0
      %2537 = vmatpush2.bf16.msra.mxu0 0
      %2538 = vmatprep.subr.bf16.mxu0 0
      %2539 = vmatpush2.bf16.msra.mxu0 0
      %2540 = vmatprep.subr.bf16.mxu0 0
      %2541 = vmatpush2.bf16.msra.mxu0 0
      %2542 = vmatprep.subr.bf16.mxu0 0
      %2543 = vmatpush2.bf16.msra.mxu0 0
      %2544 = vmatprep.subr.bf16.mxu0 0
      %2545 = vmatpush2.bf16.msra.mxu0 0
      %2546 = vmatprep.subr.bf16.mxu0 0
      %2547 = vmatpush2.bf16.msra.mxu0 0
      %2548 = vmatprep.mubr.bf16.mxu0 0
      %2549 = vmatmul.mubr.bf16.gmra.mxu0 %v2499
      %v2550 = vpop.f32.mrf.mxu0
      %v2551 = vadd.f32 0.0, %v2550
      %v2552 = vpop.f32.mrf.mxu0
      %v2553 = vpop.f32.mrf.mxu0
      %v2554 = vadd.f32 0.0, %v2553
      %v2555 = vpop.f32.mrf.mxu0
      %2556 = vmatprep.mubr.bf16.mxu0 0
      %2557 = vmatmul.mubr.bf16.gmra.mxu0 %v2502
      %v2558 = vpop.f32.mrf.mxu0
      %v2559 = vadd.f32 0.0, %v2558
      %v2560 = vpop.f32.mrf.mxu0
      %v2561 = vpop.f32.mrf.mxu0
      %v2562 = vadd.f32 0.0, %v2561
      %v2563 = vpop.f32.mrf.mxu0
      %2564 = vmatprep.mubr.bf16.mxu0 0
      %2565 = vmatmul.mubr.bf16.gmra.mxu0 %v2505
      %v2566 = vpop.f32.mrf.mxu0
      %v2567 = vadd.f32 0.0, %v2566
      %v2568 = vpop.f32.mrf.mxu0
      %v2569 = vpop.f32.mrf.mxu0
      %v2570 = vadd.f32 0.0, %v2569
      %v2571 = vpop.f32.mrf.mxu0
      %2572 = vmatprep.mubr.bf16.mxu0 0
      %2573 = vmatmul.mubr.bf16.gmra.mxu0 %v2508
      %v2574 = vpop.f32.mrf.mxu0
      %v2575 = vadd.f32 0.0, %v2574
      %v2576 = vpop.f32.mrf.mxu0
      %v2577 = vpop.f32.mrf.mxu0
      %v2578 = vadd.f32 0.0, %v2577
      %v2579 = vpop.f32.mrf.mxu0
      %2580 = vmatprep.mubr.bf16.mxu0 0
      %2581 = vmatmul.mubr.bf16.gmra.mxu0 %v2511
      %v2582 = vpop.f32.mrf.mxu0
      %v2583 = vadd.f32 0.0, %v2582
      %v2584 = vpop.f32.mrf.mxu0
      %v2585 = vpop.f32.mrf.mxu0
      %v2586 = vpop.f32.mrf.mxu0
      %2587 = vdwg.mxu0
      %2588 = vrot.lane.b32.xlu0 %v844, 104
      %v2589 = vpop.permute.xlu0 %2588
      %2590 = vrot.lane.b32.xlu0 %v845, 104
      %v2591 = vpop.permute.xlu0 %2590
      %2592 = vrot.lane.b32.xlu0 %v846, 104
      %v2593 = vpop.permute.xlu0 %2592
      %2594 = vrot.lane.b32.xlu0 %v847, 104
      %v2595 = vpop.permute.xlu0 %2594
      %2596 = vrot.lane.b32.xlu0 %v848, 104
      %v2597 = vpop.permute.xlu0 %2596
      %2598 = vrot.lane.b32.xlu0 %v1566, 72
      %v2599 = vpop.permute.xlu0 %2598
      %2600 = vrot.lane.b32.xlu0 %v1567, 72
      %v2601 = vpop.permute.xlu0 %2600
      %2602 = vrot.lane.b32.xlu0 %v1568, 72
      %v2603 = vpop.permute.xlu0 %2602
      %2604 = vrot.lane.b32.xlu0 %v1569, 72
      %v2605 = vpop.permute.xlu0 %2604
      %2606 = vrot.lane.b32.xlu0 %v1570, 72
      %v2607 = vpop.permute.xlu0 %2606
      %v2609 = vsel %vm1586, %v2589, 0
      %v2612 = vsel %vm1586, %v2591, 0
      %v2615 = vsel %vm1586, %v2593, 0
      %v2618 = vsel %vm1586, %v2595, 0
      %v2621 = vsel %vm1586, %v2597, 0
      %v2624 = vsel %vm1586, %v2599, 0
      %v2627 = vsel %vm1586, %v2601, 0
      %v2630 = vsel %vm1586, %v2603, 0
      %v2633 = vsel %vm1586, %v2605, 0
      %v2636 = vsel %vm1586, %v2607, 0
      %2638 = vmatprep.subr.bf16.mxu0 0
      %2639 = vmatpush1.bf16.xpose.msra.mxu0 0
      %2640 = vmatprep.subr.bf16.mxu0 0
      %2641 = vmatpush1.bf16.xpose.msra.mxu0 0
      %2642 = vmatprep.subr.bf16.mxu0 0
      %2643 = vmatpush1.bf16.xpose.msra.mxu0 0
      %2644 = vmatprep.subr.bf16.mxu0 0
      %2645 = vmatpush1.bf16.xpose.msra.mxu0 %v2636
      %2646 = vmatprep.subr.bf16.mxu0 0
      %2647 = vmatpush1.bf16.xpose.msra.mxu0 %v2633
      %2648 = vmatprep.subr.bf16.mxu0 0
      %2649 = vmatpush1.bf16.xpose.msra.mxu0 %v2630
      %2650 = vmatprep.subr.bf16.mxu0 0
      %2651 = vmatpush1.bf16.xpose.msra.mxu0 %v2627
      %2652 = vmatprep.subr.bf16.mxu0 0
      %2653 = vmatpush1.bf16.xpose.msra.mxu0 %v2624
      %2654 = vmatprep.subr.bf16.mxu0 0
      %2655 = vmatpush2.bf16.xpose.msra.mxu0 0
      %2656 = vmatprep.subr.bf16.mxu0 0
      %2657 = vmatpush2.bf16.xpose.msra.mxu0 0
      %2658 = vmatprep.subr.bf16.mxu0 0
      %2659 = vmatpush2.bf16.xpose.msra.mxu0 0
      %2660 = vmatprep.subr.bf16.mxu0 0
      %2661 = vmatpush2.bf16.xpose.msra.mxu0 0
      %2662 = vmatprep.subr.bf16.mxu0 0
      %2663 = vmatpush2.bf16.xpose.msra.mxu0 0
      %2664 = vmatprep.subr.bf16.mxu0 0
      %2665 = vmatpush2.bf16.xpose.msra.mxu0 0
      %2666 = vmatprep.subr.bf16.mxu0 0
      %2667 = vmatpush2.bf16.xpose.msra.mxu0 0
      %2668 = vmatprep.subr.bf16.mxu0 0
      %2669 = vmatpush2.bf16.xpose.msra.mxu0 0
      %2670 = vmatprep.mubr.bf16.mxu0 0
      %2671 = vmatmul.mubr.bf16.gmra.mxu0 %v2609
      %v2672 = vpop.f32.mrf.mxu0
      %v2673 = vadd.f32 0.0, %v2672
      %v2674 = vpop.f32.mrf.mxu0
      %v2675 = vpop.f32.mrf.mxu0
      %v2676 = vadd.f32 0.0, %v2675
      %v2677 = vpop.f32.mrf.mxu0
      %2678 = vmatprep.mubr.bf16.mxu0 0
      %2679 = vmatmul.mubr.bf16.gmra.mxu0 %v2612
      %v2680 = vpop.f32.mrf.mxu0
      %v2681 = vadd.f32 0.0, %v2680
      %v2682 = vpop.f32.mrf.mxu0
      %v2683 = vpop.f32.mrf.mxu0
      %v2684 = vadd.f32 0.0, %v2683
      %v2685 = vpop.f32.mrf.mxu0
      %2686 = vmatprep.mubr.bf16.mxu0 0
      %2687 = vmatmul.mubr.bf16.gmra.mxu0 %v2615
      %v2688 = vpop.f32.mrf.mxu0
      %v2689 = vadd.f32 0.0, %v2688
      %v2690 = vpop.f32.mrf.mxu0
      %v2691 = vpop.f32.mrf.mxu0
      %v2692 = vadd.f32 0.0, %v2691
      %v2693 = vpop.f32.mrf.mxu0
      %2694 = vmatprep.mubr.bf16.mxu0 0
      %2695 = vmatmul.mubr.bf16.gmra.mxu0 %v2618
      %v2696 = vpop.f32.mrf.mxu0
      %v2697 = vadd.f32 0.0, %v2696
      %v2698 = vpop.f32.mrf.mxu0
      %v2699 = vpop.f32.mrf.mxu0
      %v2700 = vadd.f32 0.0, %v2699
      %v2701 = vpop.f32.mrf.mxu0
      %2702 = vmatprep.mubr.bf16.mxu0 0
      %2703 = vmatmul.mubr.bf16.gmra.mxu0 %v2621
      %v2704 = vpop.f32.mrf.mxu0
      %v2705 = vadd.f32 0.0, %v2704
      %v2706 = vpop.f32.mrf.mxu0
      %v2707 = vpop.f32.mrf.mxu0
      %v2708 = vpop.f32.mrf.mxu0
      %2709 = vdwg.mxu0
      %v2710 = vsel %vm1689, %v2673, -inf
      %2711 = vmax.xlane.f32.xlu0 %v2710
      %v2712 = vpop.xlane.xlu0 %2711
      %v2713 = vsel %vm1689, %v2676, -inf
      %2714 = vmax.xlane.f32.xlu0 %v2713
      %v2715 = vpop.xlane.xlu0 %2714
      %v2716 = vsel %vm1689, %v2681, -inf
      %2717 = vmax.xlane.f32.xlu0 %v2716
      %v2718 = vpop.xlane.xlu0 %2717
      %v2719 = vsel %vm1689, %v2684, -inf
      %2720 = vmax.xlane.f32.xlu0 %v2719
      %v2721 = vpop.xlane.xlu0 %2720
      %v2722 = vsel %vm1689, %v2689, -inf
      %2723 = vmax.xlane.f32.xlu0 %v2722
      %v2724 = vpop.xlane.xlu0 %2723
      %v2725 = vsel %vm1689, %v2692, -inf
      %2726 = vmax.xlane.f32.xlu0 %v2725
      %v2727 = vpop.xlane.xlu0 %2726
      %v2728 = vsel %vm1689, %v2697, -inf
      %2729 = vmax.xlane.f32.xlu0 %v2728
      %v2730 = vpop.xlane.xlu0 %2729
      %v2731 = vsel %vm1689, %v2700, -inf
      %2732 = vmax.xlane.f32.xlu0 %v2731
      %v2733 = vpop.xlane.xlu0 %2732
      %v2734 = vsel %vm1714, %v2705, -inf
      %2735 = vmax.xlane.f32.xlu0 %v2734
      %v2736 = vpop.xlane.xlu0 %2735
      %v2737 = vsub.f32 %v2673, %v2712
      %v2738 = vsub.f32 %v2676, %v2715
      %v2739 = vsub.f32 %v2681, %v2718
      %v2740 = vsub.f32 %v2684, %v2721
      %v2741 = vsub.f32 %v2689, %v2724
      %v2742 = vsub.f32 %v2692, %v2727
      %v2743 = vsub.f32 %v2697, %v2730
      %v2744 = vsub.f32 %v2700, %v2733
      %v2745 = vsub.f32 %v2705, %v2736
      %v2746 = vmul.f32 %v2737, 1.442695
      %v2747 = vpow.pop %v2746
      %v2748 = vmul.f32 %v2738, 1.442695
      %v2749 = vpow.pop %v2748
      %v2750 = vmul.f32 %v2739, 1.442695
      %v2751 = vpow.pop %v2750
      %v2752 = vmul.f32 %v2740, 1.442695
      %v2753 = vpow.pop %v2752
      %v2754 = vmul.f32 %v2741, 1.442695
      %v2755 = vpow.pop %v2754
      %v2756 = vmul.f32 %v2742, 1.442695
      %v2757 = vpow.pop %v2756
      %v2758 = vmul.f32 %v2743, 1.442695
      %v2759 = vpow.pop %v2758
      %v2760 = vmul.f32 %v2744, 1.442695
      %v2761 = vpow.pop %v2760
      %v2762 = vmul.f32 %v2745, 1.442695
      %v2763 = vpow.pop %v2762
      %v2764 = vsel %vm1689, %v2747, 0.0
      %2765 = vadd.xlane.f32.xlu0 %v2764
      %v2766 = vpop.xlane.xlu0 %2765
      %v2767 = vsel %vm1689, %v2749, 0.0
      %2768 = vadd.xlane.f32.xlu0 %v2767
      %v2769 = vpop.xlane.xlu0 %2768
      %v2770 = vsel %vm1689, %v2751, 0.0
      %2771 = vadd.xlane.f32.xlu0 %v2770
      %v2772 = vpop.xlane.xlu0 %2771
      %v2773 = vsel %vm1689, %v2753, 0.0
      %2774 = vadd.xlane.f32.xlu0 %v2773
      %v2775 = vpop.xlane.xlu0 %2774
      %v2776 = vsel %vm1689, %v2755, 0.0
      %2777 = vadd.xlane.f32.xlu0 %v2776
      %v2778 = vpop.xlane.xlu0 %2777
      %v2779 = vsel %vm1689, %v2757, 0.0
      %2780 = vadd.xlane.f32.xlu0 %v2779
      %v2781 = vpop.xlane.xlu0 %2780
      %v2782 = vsel %vm1689, %v2759, 0.0
      %2783 = vadd.xlane.f32.xlu0 %v2782
      %v2784 = vpop.xlane.xlu0 %2783
      %v2785 = vsel %vm1689, %v2761, 0.0
      %2786 = vadd.xlane.f32.xlu0 %v2785
      %v2787 = vpop.xlane.xlu0 %2786
      %v2788 = vsel %vm1714, %v2763, 0.0
      %2789 = vadd.xlane.f32.xlu0 %v2788
      %v2790 = vpop.xlane.xlu0 %2789
      %v2791 = vrcp.pop %v2766
      %v2792 = vrcp.pop %v2769
      %v2793 = vrcp.pop %v2772
      %v2794 = vrcp.pop %v2775
      %v2795 = vrcp.pop %v2778
      %v2796 = vrcp.pop %v2781
      %v2797 = vrcp.pop %v2784
      %v2798 = vrcp.pop %v2787
      %v2799 = vrcp.pop %v2790
      %v2800 = vmul.f32 %v2747, %v2791
      %v2801 = vmul.f32 %v2749, %v2792
      %v2802 = vmul.f32 %v2751, %v2793
      %v2803 = vmul.f32 %v2753, %v2794
      %v2804 = vmul.f32 %v2755, %v2795
      %v2805 = vmul.f32 %v2757, %v2796
      %v2806 = vmul.f32 %v2759, %v2797
      %v2807 = vmul.f32 %v2761, %v2798
      %v2808 = vmul.f32 %v2763, %v2799
      %v2809 = vpack.c.bf16 %v2801, %v2800
      %v2810 = vpack.c.bf16 %v2803, %v2802
      %v2811 = vpack.c.bf16 %v2805, %v2804
      %v2812 = vpack.c.bf16 %v2807, %v2806
      %v2813 = vpack.c.bf16 %v2808, %v2808
      %2814 = vrot.lane.b32.xlu0 %v1813, 40
      %v2815 = vpop.permute.xlu0 %2814
      %2816 = vrot.lane.b32.xlu0 %v1814, 40
      %v2817 = vpop.permute.xlu0 %2816
      %2818 = vrot.lane.b32.xlu0 %v1815, 40
      %v2819 = vpop.permute.xlu0 %2818
      %2820 = vrot.lane.b32.xlu0 %v1816, 40
      %v2821 = vpop.permute.xlu0 %2820
      %2822 = vrot.lane.b32.xlu0 %v1817, 40
      %v2823 = vpop.permute.xlu0 %2822
      %v2829 = vsel %vm1689, %v2809, 0
      %v2832 = vsel %vm1689, %v2810, 0
      %v2835 = vsel %vm1689, %v2811, 0
      %v2838 = vsel %vm1689, %v2812, 0
      %v2841 = vsel %vm1689, %v2813, 0
      %v2844 = vsel %vm1847, %v2823, 0
      %2846 = vmatprep.subr.bf16.mxu0 0
      %2847 = vmatpush1.bf16.msra.mxu0 0
      %2848 = vmatprep.subr.bf16.mxu0 0
      %2849 = vmatpush1.bf16.msra.mxu0 0
      %2850 = vmatprep.subr.bf16.mxu0 0
      %2851 = vmatpush1.bf16.msra.mxu0 0
      %2852 = vmatprep.subr.bf16.mxu0 0
      %2853 = vmatpush1.bf16.msra.mxu0 %v2844
      %2854 = vmatprep.subr.bf16.mxu0 0
      %2855 = vmatpush1.bf16.msra.mxu0 %v2821
      %2856 = vmatprep.subr.bf16.mxu0 0
      %2857 = vmatpush1.bf16.msra.mxu0 %v2819
      %2858 = vmatprep.subr.bf16.mxu0 0
      %2859 = vmatpush1.bf16.msra.mxu0 %v2817
      %2860 = vmatprep.subr.bf16.mxu0 0
      %2861 = vmatpush1.bf16.msra.mxu0 %v2815
      %2862 = vmatprep.subr.bf16.mxu0 0
      %2863 = vmatpush2.bf16.msra.mxu0 0
      %2864 = vmatprep.subr.bf16.mxu0 0
      %2865 = vmatpush2.bf16.msra.mxu0 0
      %2866 = vmatprep.subr.bf16.mxu0 0
      %2867 = vmatpush2.bf16.msra.mxu0 0
      %2868 = vmatprep.subr.bf16.mxu0 0
      %2869 = vmatpush2.bf16.msra.mxu0 0
      %2870 = vmatprep.subr.bf16.mxu0 0
      %2871 = vmatpush2.bf16.msra.mxu0 0
      %2872 = vmatprep.subr.bf16.mxu0 0
      %2873 = vmatpush2.bf16.msra.mxu0 0
      %2874 = vmatprep.subr.bf16.mxu0 0
      %2875 = vmatpush2.bf16.msra.mxu0 0
      %2876 = vmatprep.subr.bf16.mxu0 0
      %2877 = vmatpush2.bf16.msra.mxu0 0
      %2878 = vmatprep.mubr.bf16.mxu0 0
      %2879 = vmatmul.mubr.bf16.gmra.mxu0 %v2829
      %v2880 = vpop.f32.mrf.mxu0
      %v2881 = vadd.f32 0.0, %v2880
      %v2882 = vpop.f32.mrf.mxu0
      %v2883 = vpop.f32.mrf.mxu0
      %v2884 = vadd.f32 0.0, %v2883
      %v2885 = vpop.f32.mrf.mxu0
      %2886 = vmatprep.mubr.bf16.mxu0 0
      %2887 = vmatmul.mubr.bf16.gmra.mxu0 %v2832
      %v2888 = vpop.f32.mrf.mxu0
      %v2889 = vadd.f32 0.0, %v2888
      %v2890 = vpop.f32.mrf.mxu0
      %v2891 = vpop.f32.mrf.mxu0
      %v2892 = vadd.f32 0.0, %v2891
      %v2893 = vpop.f32.mrf.mxu0
      %2894 = vmatprep.mubr.bf16.mxu0 0
      %2895 = vmatmul.mubr.bf16.gmra.mxu0 %v2835
      %v2896 = vpop.f32.mrf.mxu0
      %v2897 = vadd.f32 0.0, %v2896
      %v2898 = vpop.f32.mrf.mxu0
      %v2899 = vpop.f32.mrf.mxu0
      %v2900 = vadd.f32 0.0, %v2899
      %v2901 = vpop.f32.mrf.mxu0
      %2902 = vmatprep.mubr.bf16.mxu0 0
      %2903 = vmatmul.mubr.bf16.gmra.mxu0 %v2838
      %v2904 = vpop.f32.mrf.mxu0
      %v2905 = vadd.f32 0.0, %v2904
      %v2906 = vpop.f32.mrf.mxu0
      %v2907 = vpop.f32.mrf.mxu0
      %v2908 = vadd.f32 0.0, %v2907
      %v2909 = vpop.f32.mrf.mxu0
      %2910 = vmatprep.mubr.bf16.mxu0 0
      %2911 = vmatmul.mubr.bf16.gmra.mxu0 %v2841
      %v2912 = vpop.f32.mrf.mxu0
      %v2913 = vadd.f32 0.0, %v2912
      %v2914 = vpop.f32.mrf.mxu0
      %v2915 = vpop.f32.mrf.mxu0
      %v2916 = vpop.f32.mrf.mxu0
      %2917 = vdwg.mxu0
      %2927 = vrot.lane.b32.xlu0 %v2221, 8
      %v2928 = vpop.permute.xlu0 %2927
      %2929 = vrot.lane.b32.xlu0 %v2224, 8
      %v2930 = vpop.permute.xlu0 %2929
      %2931 = vrot.lane.b32.xlu0 %v2229, 8
      %v2932 = vpop.permute.xlu0 %2931
      %2933 = vrot.lane.b32.xlu0 %v2232, 8
      %v2934 = vpop.permute.xlu0 %2933
      %2935 = vrot.lane.b32.xlu0 %v2237, 8
      %v2936 = vpop.permute.xlu0 %2935
      %2937 = vrot.lane.b32.xlu0 %v2240, 8
      %v2938 = vpop.permute.xlu0 %2937
      %2939 = vrot.lane.b32.xlu0 %v2245, 8
      %v2940 = vpop.permute.xlu0 %2939
      %2941 = vrot.lane.b32.xlu0 %v2248, 8
      %v2942 = vpop.permute.xlu0 %2941
      %2943 = vrot.lane.b32.xlu0 %v2253, 8
      %v2944 = vpop.permute.xlu0 %2943
      %2963 = vrot.lane.b32.xlu0 %v2551, 16
      %v2964 = vpop.permute.xlu0 %2963
      %2965 = vrot.lane.b32.xlu0 %v2554, 16
      %v2966 = vpop.permute.xlu0 %2965
      %2967 = vrot.lane.b32.xlu0 %v2559, 16
      %v2968 = vpop.permute.xlu0 %2967
      %2969 = vrot.lane.b32.xlu0 %v2562, 16
      %v2970 = vpop.permute.xlu0 %2969
      %2971 = vrot.lane.b32.xlu0 %v2567, 16
      %v2972 = vpop.permute.xlu0 %2971
      %2973 = vrot.lane.b32.xlu0 %v2570, 16
      %v2974 = vpop.permute.xlu0 %2973
      %2975 = vrot.lane.b32.xlu0 %v2575, 16
      %v2976 = vpop.permute.xlu0 %2975
      %2977 = vrot.lane.b32.xlu0 %v2578, 16
      %v2978 = vpop.permute.xlu0 %2977
      %2979 = vrot.lane.b32.xlu0 %v2583, 16
      %v2980 = vpop.permute.xlu0 %2979
      %2999 = vrot.lane.b32.xlu0 %v2881, 24
      %v3000 = vpop.permute.xlu0 %2999
      %3001 = vrot.lane.b32.xlu0 %v2884, 24
      %v3002 = vpop.permute.xlu0 %3001
      %3003 = vrot.lane.b32.xlu0 %v2889, 24
      %v3004 = vpop.permute.xlu0 %3003
      %3005 = vrot.lane.b32.xlu0 %v2892, 24
      %v3006 = vpop.permute.xlu0 %3005
      %3007 = vrot.lane.b32.xlu0 %v2897, 24
      %v3008 = vpop.permute.xlu0 %3007
      %3009 = vrot.lane.b32.xlu0 %v2900, 24
      %v3010 = vpop.permute.xlu0 %3009
      %3011 = vrot.lane.b32.xlu0 %v2905, 24
      %v3012 = vpop.permute.xlu0 %3011
      %3013 = vrot.lane.b32.xlu0 %v2908, 24
      %v3014 = vpop.permute.xlu0 %3013
      %3015 = vrot.lane.b32.xlu0 %v2913, 24
      %v3016 = vpop.permute.xlu0 %3015
      %v3026 = vsel %vm1586, %v1886, %v2928
      %v3027 = vsel %vm1586, %v1889, %v2930
      %v3028 = vsel %vm1586, %v1894, %v2932
      %v3029 = vsel %vm1586, %v1897, %v2934
      %v3030 = vsel %vm1586, %v1902, %v2936
      %v3031 = vsel %vm1586, %v1905, %v2938
      %v3032 = vsel %vm1586, %v1910, %v2940
      %v3033 = vsel %vm1586, %v1913, %v2942
      %v3034 = vsel %vm1586, %v1918, %v2944
      %vm3035 = vcmask 130048
      %v3036 = vsel %vm3035, %v3026, %v2964
      %v3037 = vsel %vm3035, %v3027, %v2966
      %v3038 = vsel %vm3035, %v3028, %v2968
      %v3039 = vsel %vm3035, %v3029, %v2970
      %v3040 = vsel %vm3035, %v3030, %v2972
      %v3041 = vsel %vm3035, %v3031, %v2974
      %v3042 = vsel %vm3035, %v3032, %v2976
      %v3043 = vsel %vm3035, %v3033, %v2978
      %v3044 = vsel %vm3035, %v3034, %v2980
      %vm3045 = vcmask 195584
      %v3046 = vsel %vm3045, %v3036, %v3000
      %v3047 = vsel %vm3045, %v3037, %v3002
      %v3048 = vsel %vm3045, %v3038, %v3004
      %v3049 = vsel %vm3045, %v3039, %v3006
      %v3050 = vsel %vm3045, %v3040, %v3008
      %v3051 = vsel %vm3045, %v3041, %v3010
      %v3052 = vsel %vm3045, %v3042, %v3012
      %v3053 = vsel %vm3045, %v3043, %v3014
      %v3054 = vsel %vm3045, %v3044, %v3016
      %v3055 = vpack.c.bf16 %v3047, %v3046
      %v3056 = vpack.c.bf16 %v3049, %v3048
      %v3057 = vpack.c.bf16 %v3051, %v3050
      %v3058 = vpack.c.bf16 %v3053, %v3052
      %v3059 = vpack.c.bf16 %v3054, %v3054
      %v3065 = vunpack.c.l.b16 %v3055
      %v3066 = vunpack.c.h.b16 %v3055
      %v3067 = vunpack.c.l.b16 %v3056
      %v3068 = vunpack.c.h.b16 %v3056
      %v3069 = vunpack.c.l.b16 %v3057
      %v3070 = vunpack.c.h.b16 %v3057
      %v3071 = vunpack.c.l.b16 %v3058
      %v3072 = vunpack.c.h.b16 %v3058
      %v3073 = vunpack.c.l.b16 %v3059
      %v3074 = vpack.c.b16 %v3065, %v3065
      %v3075 = vpack.c.b16 %v3066, %v3066
      %v3076 = vpack.c.b16 %v3067, %v3067
      %v3077 = vpack.c.b16 %v3068, %v3068
      %v3078 = vpack.c.b16 %v3069, %v3069
      %v3079 = vpack.c.b16 %v3070, %v3070
      %v3080 = vpack.c.b16 %v3071, %v3071
      %v3081 = vpack.c.b16 %v3072, %v3072
      %v3082 = vpack.c.b16 %v3073, %v3073
      %vm3092 = vcmask 257024
      %3093 = vst.msk [vmem:[%s197] sm:$0xf] %vm3092, %v3074
      %3094 = vst.msk [vmem:[%s197 + $0x4] sm:$0xf] %vm3092, %v3075
      %3095 = vst.msk [vmem:[%s197 + $0x8] sm:$0xf] %vm3092, %v3076
      %3096 = vst.msk [vmem:[%s197 + $0xc] sm:$0xf] %vm3092, %v3077
      %3097 = vst.msk [vmem:[%s197 + $0x10] sm:$0xf] %vm3092, %v3078
      %3098 = vst.msk [vmem:[%s197 + $0x14] sm:$0xf] %vm3092, %v3079
      %3099 = vst.msk [vmem:[%s197 + $0x18] sm:$0xf] %vm3092, %v3080
      %3100 = vst.msk [vmem:[%s197 + $0x1c] sm:$0xf] %vm3092, %v3081
      %vm3101 = vcmask 253952
      %3102 = vst.msk [vmem:[%s197 + $0x20] sm:$0x1] %vm3101, %v3082
      %p3103 = scmp.lt.s32.totalorder %s15, 1
      %s3104 = scalar_select %p3103, %s15, 1
      %s3105 = smul.addr %s3104, 9
      %s3106 = smul.addr %s3105, 4
      %s3107 = scalar_lea.vmem %s4, %s3106
      // Predicated region
      $region37: #{q_attention_forward.4} parent=35 // pred_check
        %p3108 = pneg %p122
      $region38: #{q_attention_forward.4} parent=35 // pred_check_branch
        %3110 = sbr.rel (%p3108) target = $region40
      $region39: #{q_attention_forward.4} parent=35 // pred_region
        _
      $region40: #{q_attention_forward.4} parent=35 // pred_fallthru
        _
    $region36: #{q_attention_forward.4} parent=5 // pred_fallthru
      _
    %p3111 = scmp.le.s32.totalorder 2, %s10
    // Predicated region
    $region41: #{q_attention_forward.4} parent=5 // pred_check
      %p3112 = pneg %p3111
    $region42: #{q_attention_forward.4} parent=5 // pred_check_branch
      %3114 = sbr.rel (%p3112) target = $region44
    $region43: #{q_attention_forward.4} parent=5 // pred_region
      %s3115 = ssub.s32 %s10, 2
      // Predicated region
      $region45: #{q_attention_forward.4} parent=43 // pred_check
        %p3116 = pneg %p128
      $region46: #{q_attention_forward.4} parent=43 // pred_check_branch
        %3118 = sbr.rel (%p3116) target = $region48
      $region47: #{q_attention_forward.4} parent=43 // pred_region
        %p3119 = scmp.lt.s32.totalorder %s16, 1
        %s3120 = scalar_select %p3119, %s16, 1
        %s3121 = smul.addr %s3120, 9
        %s3122 = smul.addr %s3121, 4
        %s3123 = scalar_lea.vmem %s4, %s3122
      $region48: #{q_attention_forward.4} parent=43 // pred_fallthru
        _
    $region44: #{q_attention_forward.4} parent=5 // pred_fallthru
      _
  $region6: #{q_attention_forward.4} parent=0 // loop_footer
    %s14 = sadd.s32 1, %s10
  $region7: #{q_attention_forward.4} parent=0 // loop_footer_branch
    %9 = sbr.rel target = $region3
  $region8: #{q_attention_forward.4} parent=0 // loop_exit
    _

</llo_original>
